<compile_context>
chip_gen: v7x
topology: tpu7x:2x2x1
jax: 0.10.0
libtpu: 0.0.40
codegen_flags: <defaults>
</compile_context>

<pallas_src>
import math
import functools

import jax
import jax.numpy as jnp
from jax.experimental import pallas as pl
from jax.experimental.pallas import tpu as pltpu


# ---------------------------------------------------------------------------
# Glue: T5 relative position bias (matches the PyTorch reference exactly,
# including the `max_exact -= 1; n_buckets -= 1` variant).
# ---------------------------------------------------------------------------
def _relative_position_bucket(relative_position, bidirectional, n_buckets, max_distance):
    relative_buckets = jnp.zeros_like(relative_position)
    if bidirectional:
        n_buckets //= 2
        relative_buckets = relative_buckets + (relative_position > 0).astype(jnp.int32) * n_buckets
        relative_position = jnp.abs(relative_position)
    else:
        relative_position = -jnp.minimum(relative_position, jnp.zeros_like(relative_position))
    max_exact = n_buckets // 2
    is_small = relative_position < max_exact
    max_exact -= 1
    n_buckets -= 1
    # Guard log(0) for entries that always take the `is_small` branch anyway.
    rp_f = jnp.maximum(relative_position.astype(jnp.float32), 1.0)
    rel_if_large = max_exact + (
        jnp.log(rp_f / max_exact) / math.log(max_distance / max_exact) * (n_buckets - max_exact)
    ).astype(jnp.int32)
    rel_if_large = jnp.minimum(rel_if_large, jnp.full_like(rel_if_large, n_buckets))
    relative_buckets = relative_buckets + jnp.where(is_small, relative_position, rel_if_large)
    return relative_buckets


def compute_relative_bias(emb_weight, q_len, k_len, bidirectional, n_buckets, max_distance):
    """emb_weight: (n_buckets, n_head). Returns (n_head, q_len, k_len) f32."""
    ctx = jnp.arange(q_len, dtype=jnp.int32)[:, None]
    mem = jnp.arange(k_len, dtype=jnp.int32)[None, :]
    rel = mem - ctx
    bucket = _relative_position_bucket(rel, bidirectional, n_buckets, max_distance)
    values = emb_weight[bucket]                    # (Q, K, nh)
    return jnp.transpose(values, (2, 0, 1))        # (nh, Q, K)


# ---------------------------------------------------------------------------
# Pallas kernel
# ---------------------------------------------------------------------------
def _rms_norm(x, w):
    # x: (T, D) f32, w: (1, D) f32 — statistics kept in f32.
    var = jnp.mean(x * x, axis=-1, keepdims=True)
    return w * (x * jax.lax.rsqrt(var + 1e-6))


def _mha_core(q, k, v, wo, bias, n_head):
    """q: (T, D) f32 (already scaled via wq), k/v: (S, D) f32, wo bf16,
    bias: (nh, T, S) f32 (additive; contains causal mask for self-attn)."""
    T, D = q.shape
    hs = D // n_head

    # Head-batched (nh, L, hs) layout built from static lane slices stacked
    # along a new major axis (hs == 128 in the demo -> lane-aligned slices).
    def split(a):
        a = a.astype(jnp.bfloat16)
        return jnp.stack([a[:, h * hs:(h + 1) * hs] for h in range(n_head)], axis=0)

    qh = split(q)                                   # (nh, T, hs) bf16
    kh = split(k)                                   # (nh, S, hs) bf16
    vh = split(v)                                   # (nh, S, hs) bf16

    # All heads at once: batched score matmul, f32 softmax, batched p@v.
    s = jnp.einsum('ntd,nsd->nts', qh, kh,
                   preferred_element_type=jnp.float32) + bias   # (nh, T, S) f32
    m = jnp.max(s, axis=-1, keepdims=True)
    p = jnp.exp(s - m)
    p = p * pl.reciprocal(jnp.sum(p, axis=-1, keepdims=True), approx=True)
    ctx = jnp.einsum('nts,nsd->ntd', p.astype(jnp.bfloat16), vh,
                     preferred_element_type=jnp.float32)        # (nh, T, hs) f32

    # Merge heads back to (T, D) with lane concat of major-dim slices, then a
    # single lane-dense output projection.
    o = jnp.concatenate([ctx[h] for h in range(n_head)], axis=-1)  # (T, D) f32
    return jnp.dot(o.astype(jnp.bfloat16), wo, preferred_element_type=jnp.float32)


def decoder_block_kernel(
    x_ref, h_ref,
    ln1_ref, ln2_ref, ln3_ref,
    wqkv1_ref, wo1_ref,
    wq2_ref, wkv2_ref, wo2_ref,
    wm1_ref, wm2_ref,
    self_bias_ref, cross_bias_ref,
    out_ref,
    *, n_head,
):
    x = x_ref[0]                                   # (T, D) f32 residual stream
    h = h_ref[0]                                   # (S, D) f32
    D = x.shape[-1]

    # --- masked self-attention (dropout = identity) ---
    x1 = _rms_norm(x, ln1_ref[...]).astype(jnp.bfloat16)
    qkv = jnp.dot(x1, wqkv1_ref[...], preferred_element_type=jnp.float32)   # (T, 3D) f32
    x = x + _mha_core(qkv[:, :D], qkv[:, D:2 * D], qkv[:, 2 * D:],
                      wo1_ref[...], self_bias_ref[...], n_head)

    # --- bidirectional cross-attention ---
    x2 = _rms_norm(x, ln2_ref[...]).astype(jnp.bfloat16)
    hb = h.astype(jnp.bfloat16)
    q2 = jnp.dot(x2, wq2_ref[...], preferred_element_type=jnp.float32)      # (T, D)
    kv = jnp.dot(hb, wkv2_ref[...], preferred_element_type=jnp.float32)     # (S, 2D)
    x = x + _mha_core(q2, kv[:, :D], kv[:, D:],
                      wo2_ref[...], cross_bias_ref[...], n_head)

    # --- MLP: Linear -> ReLU -> Linear (dropout = identity) ---
    x3 = _rms_norm(x, ln3_ref[...]).astype(jnp.bfloat16)
    hid = jnp.maximum(jnp.dot(x3, wm1_ref[...], preferred_element_type=jnp.float32), 0.0)
    x = x + jnp.dot(hid.astype(jnp.bfloat16), wm2_ref[...], preferred_element_type=jnp.float32)

    out_ref[0] = x


def _vmem_bytes_estimate(T, S, D, nh):
    w = 16 * D * D * 2 + 3 * D * 4                         # bf16 matmul weights + f32 ln
    bias = (nh * T * T + nh * T * S) * 4                   # f32 bias (+mask)
    io = 2 * (T * D + S * D + T * D) * 4                   # double-buffered x, h, out
    act = (6 * T * D + 3 * S * D + 4 * nh * T * max(T, S) + 5 * T * D) * 4
    return w + bias + io + act


def decoder_block(x, hidden_states, params, *, n_head, n_buckets=32, max_distance=128):
    B, T, D = x.shape
    S = hidden_states.shape[1]
    nh = n_head
    hs = D // nh
    scale = 1.0 / math.sqrt(hs)

    # Precompute additive bias tensors (relative position bias [+ causal mask]).
    # TODO(synk): for large T, gather from the (n_buckets, nh) table in-kernel
    # instead of materializing (nh, T, T)/(nh, T, S).
    self_bias = compute_relative_bias(params["self_rel_emb"], T, T,
                                      bidirectional=False,
                                      n_buckets=n_buckets, max_distance=max_distance)
    causal = jnp.tril(jnp.ones((T, T), jnp.float32))
    self_bias = self_bias + jnp.where(causal == 0, -1e30, 0.0)[None, :, :]  # (nh, T, T)

    cross_bias = compute_relative_bias(params["cross_rel_emb"], T, S,
                                       bidirectional=True,
                                       n_buckets=n_buckets, max_distance=max_distance)  # (nh, T, S)

    bf16 = lambda a: a.astype(jnp.bfloat16)

    # Fused projection weights (scale folded into the Q projections; one-time
    # weight-side ops, not per-token pre-scaling of activations).
    wqkv1 = bf16(jnp.concatenate(
        [params["wq1"] * scale, params["wk1"], params["wv1"]], axis=1))      # (D, 3D)
    wkv2 = bf16(jnp.concatenate([params["wk2"], params["wv2"]], axis=1))     # (D, 2D)
    wq2 = bf16(params["wq2"] * scale)

    full2d = lambda shape: pl.BlockSpec(shape, lambda b: (0, 0))
    full3d = lambda shape: pl.BlockSpec(shape, lambda b: (0, 0, 0))

    kernel = functools.partial(decoder_block_kernel, n_head=nh)

    # Advisory cost estimate (FLOPs/bytes) so XLA schedules the bias glue
    # around the long custom call.
    flops = 2 * B * (4 * T * D * D + 2 * T * T * D          # self-attn
                     + T * D * D + 2 * S * D * D + T * D * D + 2 * T * S * D  # cross-attn
                     + 8 * T * D * D)                        # mlp
    transcendentals = B * nh * T * (T + S)
    bytes_accessed = (16 * D * D * 2 + 3 * D * 4
                      + B * T * D * 4 * 2 + B * S * D * 4
                      + (nh * T * T + nh * T * S) * 4)
    cost = pl.CostEstimate(flops=flops, transcendentals=transcendentals,
                           bytes_accessed=bytes_accessed)

    vmem_limit = min(96 * 1024 * 1024,
                     max(32 * 1024 * 1024, int(1.5 * _vmem_bytes_estimate(T, S, D, nh))))

    return pl.pallas_call(
        kernel,
        out_shape=jax.ShapeDtypeStruct((B, T, D), jnp.float32),
        grid=(B,),
        in_specs=[
            pl.BlockSpec((1, T, D), lambda b: (b, 0, 0)),    # x
            pl.BlockSpec((1, S, D), lambda b: (b, 0, 0)),    # hidden_states
            full2d((1, D)), full2d((1, D)), full2d((1, D)),  # ln weights (f32)
            full2d((D, 3 * D)), full2d((D, D)),              # self-attn: wqkv, wo (bf16)
            full2d((D, D)), full2d((D, 2 * D)), full2d((D, D)),  # cross-attn: wq, wkv, wo (bf16)
            full2d((D, 4 * D)), full2d((4 * D, D)),          # mlp (bf16)
            full3d((nh, T, T)),                              # self_bias (+mask), f32
            full3d((nh, T, S)),                              # cross_bias, f32
        ],
        out_specs=pl.BlockSpec((1, T, D), lambda b: (b, 0, 0)),
        compiler_params=pltpu.CompilerParams(
            dimension_semantics=("parallel",),               # batch is independent
            vmem_limit_bytes=vmem_limit,
        ),
        cost_estimate=cost,
    )(
        x, hidden_states,
        params["ln1"], params["ln2"], params["ln3"],
        wqkv1, bf16(params["wo1"]),
        wq2, wkv2, bf16(params["wo2"]),
        bf16(params["wm1"]), bf16(params["wm2"]),
        self_bias, cross_bias,
    )


# ---------------------------------------------------------------------------
# Pure-JAX f32 reference (for verification of the Pallas lowering)
# ---------------------------------------------------------------------------
def _ref_attn(xq, xkv, wq, wk, wv, wo, bias, n_head):
    B, T, D = xq.shape
    S = xkv.shape[1]
    hs = D // n_head
    q = (xq @ wq).reshape(B, T, n_head, hs).transpose(0, 2, 1, 3)
    k = (xkv @ wk).reshape(B, S, n_head, hs).transpose(0, 2, 1, 3)
    v = (xkv @ wv).reshape(B, S, n_head, hs).transpose(0, 2, 1, 3)
    att = q @ jnp.swapaxes(k, -1, -2) * (1.0 / math.sqrt(hs)) + bias[None]
    att = jax.nn.softmax(att, axis=-1)
    o = (att @ v).transpose(0, 2, 1, 3).reshape(B, T, D)
    return o @ wo


def decoder_block_ref(x, h, params, *, n_head, n_buckets=32, max_distance=128):
    B, T, D = x.shape
    S = h.shape[1]
    self_bias = compute_relative_bias(params["self_rel_emb"], T, T, False, n_buckets, max_distance)
    causal = jnp.tril(jnp.ones((T, T), jnp.float32))
    self_bias = self_bias + jnp.where(causal == 0, -1e30, 0.0)[None, :, :]
    cross_bias = compute_relative_bias(params["cross_rel_emb"], T, S, True, n_buckets, max_distance)

    def rms(x, w):
        var = jnp.mean(x * x, axis=-1, keepdims=True)
        return w * (x * jax.lax.rsqrt(var + 1e-6))

    x = x + _ref_attn(rms(x, params["ln1"]), rms(x, params["ln1"]),
                      params["wq1"], params["wk1"], params["wv1"], params["wo1"],
                      self_bias, n_head)
    x = x + _ref_attn(rms(x, params["ln2"]), h,
                      params["wq2"], params["wk2"], params["wv2"], params["wo2"],
                      cross_bias, n_head)
    x3 = rms(x, params["ln3"])
    x = x + jnp.maximum(x3 @ params["wm1"], 0.0) @ params["wm2"]
    return x


# ---------------------------------------------------------------------------
if __name__ == "__main__":
    # Lane-dense small shapes: D multiple of 128, head size == 128, T/S multiples of 8.
    B, T, S, D, NH = 2, 16, 16, 256, 2
    N_BUCKETS, MAX_DIST = 32, 128

    key = jax.random.PRNGKey(0)
    keys = jax.random.split(key, 16)

    def w(k, shape, scale=0.02):
        return (scale * jax.random.normal(k, shape)).astype(jnp.float32)

    params = {
        "ln1": jnp.ones((1, D), jnp.float32),
        "ln2": jnp.ones((1, D), jnp.float32),
        "ln3": jnp.ones((1, D), jnp.float32),
        # linear weights stored (in, out); nn.Linear(..., bias=False)
        "wq1": w(keys[0], (D, D)), "wk1": w(keys[1], (D, D)),
        "wv1": w(keys[2], (D, D)), "wo1": w(keys[3], (D, D)),
        "wq2": w(keys[4], (D, D)), "wk2": w(keys[5], (D, D)),
        "wv2": w(keys[6], (D, D)), "wo2": w(keys[7], (D, D)),
        "wm1": w(keys[8], (D, 4 * D)), "wm2": w(keys[9], (4 * D, D)),
        # relative attention bias embedding tables: (n_buckets, n_head)
        "self_rel_emb": w(keys[10], (N_BUCKETS, NH), scale=0.1),
        "cross_rel_emb": w(keys[11], (N_BUCKETS, NH), scale=0.1),
    }

    x = jax.random.normal(keys[12], (B, T, D), jnp.float32)
    hidden_states = jax.random.normal(keys[13], (B, S, D), jnp.float32)

    out = decoder_block(x, hidden_states, params, n_head=NH,
                        n_buckets=N_BUCKETS, max_distance=MAX_DIST)
    out = jax.block_until_ready(out)

    ref = decoder_block_ref(x, hidden_states, params, n_head=NH,
                            n_buckets=N_BUCKETS, max_distance=MAX_DIST)
    err = float(jnp.max(jnp.abs(out - ref)))
    assert out.shape == (B, T, D)
    # bf16 MXU operands vs. pure-f32 reference -> small tolerance.
    assert err < 2e-2, f"max abs err {err}"

    # TODO(synk): dropout layers (attn/resid/mlp) are identity here (eval-mode semantics).
    print("KERNEL_OK")
</pallas_src>

<mosaic_0001>
module attributes {stable_mosaic.version = 11 : i64} {
  func.func @decoder_block_kernel(%arg0: i32, %arg1: memref<1x16x256xf32, #tpu.memory_space<vmem>>, %arg2: memref<1x16x256xf32, #tpu.memory_space<vmem>>, %arg3: memref<1x256xf32, #tpu.memory_space<vmem>>, %arg4: memref<1x256xf32, #tpu.memory_space<vmem>>, %arg5: memref<1x256xf32, #tpu.memory_space<vmem>>, %arg6: memref<256x768xbf16, #tpu.memory_space<vmem>>, %arg7: memref<256x256xbf16, #tpu.memory_space<vmem>>, %arg8: memref<256x256xbf16, #tpu.memory_space<vmem>>, %arg9: memref<256x512xbf16, #tpu.memory_space<vmem>>, %arg10: memref<256x256xbf16, #tpu.memory_space<vmem>>, %arg11: memref<256x1024xbf16, #tpu.memory_space<vmem>>, %arg12: memref<1024x256xbf16, #tpu.memory_space<vmem>>, %arg13: memref<2x16x16xf32, #tpu.memory_space<vmem>>, %arg14: memref<2x16x16xf32, #tpu.memory_space<vmem>>, %arg15: memref<1x16x256xf32, #tpu.memory_space<vmem>>) attributes {dimension_semantics = [#tpu.dimension_semantics<parallel>], iteration_bounds = array<i64: 2>, scalar_prefetch = 0 : i64, scratch_operands = 0 : i64, tpu.core_type = #tpu.core_type<tc>, window_params = [{transform_indices = @transform_0, window_bounds = array<i64: 1, 16, 256>}, {transform_indices = @transform_1, window_bounds = array<i64: 1, 16, 256>}, {pipeline_mode = #tpu.pipeline_mode<synchronous>, transform_indices = @transform_2, window_bounds = array<i64: 1, 256>}, {pipeline_mode = #tpu.pipeline_mode<synchronous>, transform_indices = @transform_3, window_bounds = array<i64: 1, 256>}, {pipeline_mode = #tpu.pipeline_mode<synchronous>, transform_indices = @transform_4, window_bounds = array<i64: 1, 256>}, {pipeline_mode = #tpu.pipeline_mode<synchronous>, transform_indices = @transform_5, window_bounds = array<i64: 256, 768>}, {pipeline_mode = #tpu.pipeline_mode<synchronous>, transform_indices = @transform_6, window_bounds = array<i64: 256, 256>}, {pipeline_mode = #tpu.pipeline_mode<synchronous>, transform_indices = @transform_7, window_bounds = array<i64: 256, 256>}, {pipeline_mode = #tpu.pipeline_mode<synchronous>, transform_indices = @transform_8, window_bounds = array<i64: 256, 512>}, {pipeline_mode = #tpu.pipeline_mode<synchronous>, transform_indices = @transform_9, window_bounds = array<i64: 256, 256>}, {pipeline_mode = #tpu.pipeline_mode<synchronous>, transform_indices = @transform_10, window_bounds = array<i64: 256, 1024>}, {pipeline_mode = #tpu.pipeline_mode<synchronous>, transform_indices = @transform_11, window_bounds = array<i64: 1024, 256>}, {pipeline_mode = #tpu.pipeline_mode<synchronous>, transform_indices = @transform_12, window_bounds = array<i64: 2, 16, 16>}, {pipeline_mode = #tpu.pipeline_mode<synchronous>, transform_indices = @transform_13, window_bounds = array<i64: 2, 16, 16>}, {transform_indices = @transform_14, window_bounds = array<i64: 1, 16, 256>}]} {
    %c0 = arith.constant 0 : index
    %c0_0 = arith.constant 0 : index
    %c0_1 = arith.constant 0 : index
    %0 = vector.load %arg1[%c0, %c0_0, %c0_1] : memref<1x16x256xf32, #tpu.memory_space<vmem>>, vector<1x16x256xf32>
    %1 = vector.shape_cast %0 : vector<1x16x256xf32> to vector<16x256xf32>
    %c0_2 = arith.constant 0 : index
    %c0_3 = arith.constant 0 : index
    %c0_4 = arith.constant 0 : index
    %2 = vector.load %arg2[%c0_2, %c0_3, %c0_4] : memref<1x16x256xf32, #tpu.memory_space<vmem>>, vector<1x16x256xf32>
    %3 = vector.shape_cast %2 : vector<1x16x256xf32> to vector<16x256xf32>
    %c0_5 = arith.constant 0 : index
    %c0_6 = arith.constant 0 : index
    %4 = vector.load %arg3[%c0_5, %c0_6] : memref<1x256xf32, #tpu.memory_space<vmem>>, vector<1x256xf32>
    %5 = arith.mulf %1, %1 : vector<16x256xf32>
    %cst = arith.constant dense<0.000000e+00> : vector<16xf32>
    %6 = vector.multi_reduction <add>, %5, %cst [1] : vector<16x256xf32> to vector<16xf32>
    %7 = vector.shape_cast %6 : vector<16xf32> to vector<16x1xf32>
    %cst_7 = arith.constant 2.560000e+02 : f32
    %8 = vector.broadcast %cst_7 : f32 to vector<16x1xf32>
    %9 = arith.divf %7, %8 : vector<16x1xf32>
    %cst_8 = arith.constant 9.99999997E-7 : f32
    %10 = vector.broadcast %cst_8 : f32 to vector<16x1xf32>
    %11 = arith.addf %9, %10 : vector<16x1xf32>
    %12 = math.rsqrt %11 : vector<16x1xf32>
    %13 = vector.broadcast %12 : vector<16x1xf32> to vector<16x256xf32>
    %14 = arith.mulf %1, %13 : vector<16x256xf32>
    %15 = vector.broadcast %4 : vector<1x256xf32> to vector<16x256xf32>
    %16 = arith.mulf %15, %14 : vector<16x256xf32>
    %17 = arith.truncf %16 : vector<16x256xf32> to vector<16x256xbf16>
    %c0_9 = arith.constant 0 : index
    %c0_10 = arith.constant 0 : index
    %18 = vector.load %arg6[%c0_9, %c0_10] : memref<256x768xbf16, #tpu.memory_space<vmem>>, vector<256x768xbf16>
    %cst_11 = arith.constant dense<0.000000e+00> : vector<16x768xf32>
    %19 = tpu.matmul %17, %18, %cst_11 {dimension_numbers = #tpu.dot_dimension_numbers<[1], [0], [0], [1], [0, 0, 1, 1], [], []>} : vector<16x256xbf16>, vector<256x768xbf16>, vector<16x768xf32> -> vector<16x768xf32>
    %20 = vector.extract_strided_slice %19 {offsets = [0, 0], sizes = [16, 256], strides = [1, 1]} : vector<16x768xf32> to vector<16x256xf32>
    %21 = vector.extract_strided_slice %19 {offsets = [0, 256], sizes = [16, 256], strides = [1, 1]} : vector<16x768xf32> to vector<16x256xf32>
    %22 = vector.extract_strided_slice %19 {offsets = [0, 512], sizes = [16, 256], strides = [1, 1]} : vector<16x768xf32> to vector<16x256xf32>
    %c0_12 = arith.constant 0 : index
    %c0_13 = arith.constant 0 : index
    %23 = vector.load %arg7[%c0_12, %c0_13] : memref<256x256xbf16, #tpu.memory_space<vmem>>, vector<256x256xbf16>
    %c0_14 = arith.constant 0 : index
    %c0_15 = arith.constant 0 : index
    %c0_16 = arith.constant 0 : index
    %24 = vector.load %arg13[%c0_14, %c0_15, %c0_16] : memref<2x16x16xf32, #tpu.memory_space<vmem>>, vector<2x16x16xf32>
    %25 = arith.truncf %20 : vector<16x256xf32> to vector<16x256xbf16>
    %26 = vector.extract_strided_slice %25 {offsets = [0, 0], sizes = [16, 128], strides = [1, 1]} : vector<16x256xbf16> to vector<16x128xbf16>
    %27 = vector.extract_strided_slice %25 {offsets = [0, 128], sizes = [16, 128], strides = [1, 1]} : vector<16x256xbf16> to vector<16x128xbf16>
    %28 = vector.shape_cast %26 : vector<16x128xbf16> to vector<1x16x128xbf16>
    %29 = vector.shape_cast %27 : vector<16x128xbf16> to vector<1x16x128xbf16>
    %30 = tpu.concatenate %28, %29 in 0 : vector<1x16x128xbf16>, vector<1x16x128xbf16> -> vector<2x16x128xbf16>
    %31 = arith.truncf %21 : vector<16x256xf32> to vector<16x256xbf16>
    %32 = vector.extract_strided_slice %31 {offsets = [0, 0], sizes = [16, 128], strides = [1, 1]} : vector<16x256xbf16> to vector<16x128xbf16>
    %33 = vector.extract_strided_slice %31 {offsets = [0, 128], sizes = [16, 128], strides = [1, 1]} : vector<16x256xbf16> to vector<16x128xbf16>
    %34 = vector.shape_cast %32 : vector<16x128xbf16> to vector<1x16x128xbf16>
    %35 = vector.shape_cast %33 : vector<16x128xbf16> to vector<1x16x128xbf16>
    %36 = tpu.concatenate %34, %35 in 0 : vector<1x16x128xbf16>, vector<1x16x128xbf16> -> vector<2x16x128xbf16>
    %37 = arith.truncf %22 : vector<16x256xf32> to vector<16x256xbf16>
    %38 = vector.extract_strided_slice %37 {offsets = [0, 0], sizes = [16, 128], strides = [1, 1]} : vector<16x256xbf16> to vector<16x128xbf16>
    %39 = vector.extract_strided_slice %37 {offsets = [0, 128], sizes = [16, 128], strides = [1, 1]} : vector<16x256xbf16> to vector<16x128xbf16>
    %40 = vector.shape_cast %38 : vector<16x128xbf16> to vector<1x16x128xbf16>
    %41 = vector.shape_cast %39 : vector<16x128xbf16> to vector<1x16x128xbf16>
    %42 = tpu.concatenate %40, %41 in 0 : vector<1x16x128xbf16>, vector<1x16x128xbf16> -> vector<2x16x128xbf16>
    "tpu.trace_start"() <{level = 10 : i32, message = "ntd,nsd->nts"}> : () -> ()
    %cst_17 = arith.constant dense<0.000000e+00> : vector<2x16x16xf32>
    %43 = tpu.matmul %30, %36, %cst_17 {dimension_numbers = #tpu.dot_dimension_numbers<[2], [2], [1], [1], [0, 0, 0, 1, 1, 1], [0], [0]>} : vector<2x16x128xbf16>, vector<2x16x128xbf16>, vector<2x16x16xf32> -> vector<2x16x16xf32>
    "tpu.trace_stop"() : () -> ()
    %44 = arith.addf %43, %24 : vector<2x16x16xf32>
    %cst_18 = arith.constant dense<0xFF800000> : vector<2x16xf32>
    %45 = vector.multi_reduction <maximumf>, %44, %cst_18 [2] : vector<2x16x16xf32> to vector<2x16xf32>
    %46 = vector.shape_cast %45 : vector<2x16xf32> to vector<2x16x1xf32>
    %47 = vector.broadcast %46 : vector<2x16x1xf32> to vector<2x16x16xf32>
    %48 = arith.subf %44, %47 : vector<2x16x16xf32>
    %49 = math.exp %48 : vector<2x16x16xf32>
    %cst_19 = arith.constant dense<0.000000e+00> : vector<2x16xf32>
    %50 = vector.multi_reduction <add>, %49, %cst_19 [2] : vector<2x16x16xf32> to vector<2x16xf32>
    %51 = vector.shape_cast %50 : vector<2x16xf32> to vector<2x16x1xf32>
    %52 = tpu.reciprocal %51 {approx = true} : vector<2x16x1xf32> -> vector<2x16x1xf32>
    %53 = vector.broadcast %52 : vector<2x16x1xf32> to vector<2x16x16xf32>
    %54 = arith.mulf %49, %53 : vector<2x16x16xf32>
    %55 = arith.truncf %54 : vector<2x16x16xf32> to vector<2x16x16xbf16>
    "tpu.trace_start"() <{level = 10 : i32, message = "nts,nsd->ntd"}> : () -> ()
    %cst_20 = arith.constant dense<0.000000e+00> : vector<2x16x128xf32>
    %56 = tpu.matmul %55, %42, %cst_20 {dimension_numbers = #tpu.dot_dimension_numbers<[2], [1], [1], [2], [0, 0, 0, 1, 1, 2], [0], [0]>} : vector<2x16x16xbf16>, vector<2x16x128xbf16>, vector<2x16x128xf32> -> vector<2x16x128xf32>
    "tpu.trace_stop"() : () -> ()
    %57 = vector.extract_strided_slice %56 {offsets = [0, 0, 0], sizes = [1, 16, 128], strides = [1, 1, 1]} : vector<2x16x128xf32> to vector<1x16x128xf32>
    %58 = vector.shape_cast %57 : vector<1x16x128xf32> to vector<16x128xf32>
    %59 = vector.extract_strided_slice %56 {offsets = [1, 0, 0], sizes = [1, 16, 128], strides = [1, 1, 1]} : vector<2x16x128xf32> to vector<1x16x128xf32>
    %60 = vector.shape_cast %59 : vector<1x16x128xf32> to vector<16x128xf32>
    %61 = tpu.concatenate %58, %60 in 1 : vector<16x128xf32>, vector<16x128xf32> -> vector<16x256xf32>
    %62 = arith.truncf %61 : vector<16x256xf32> to vector<16x256xbf16>
    %cst_21 = arith.constant dense<0.000000e+00> : vector<16x256xf32>
    %63 = tpu.matmul %62, %23, %cst_21 {dimension_numbers = #tpu.dot_dimension_numbers<[1], [0], [0], [1], [0, 0, 1, 1], [], []>} : vector<16x256xbf16>, vector<256x256xbf16>, vector<16x256xf32> -> vector<16x256xf32>
    %64 = arith.addf %1, %63 : vector<16x256xf32>
    %c0_22 = arith.constant 0 : index
    %c0_23 = arith.constant 0 : index
    %65 = vector.load %arg4[%c0_22, %c0_23] : memref<1x256xf32, #tpu.memory_space<vmem>>, vector<1x256xf32>
    %66 = arith.mulf %64, %64 : vector<16x256xf32>
    %cst_24 = arith.constant dense<0.000000e+00> : vector<16xf32>
    %67 = vector.multi_reduction <add>, %66, %cst_24 [1] : vector<16x256xf32> to vector<16xf32>
    %68 = vector.shape_cast %67 : vector<16xf32> to vector<16x1xf32>
    %cst_25 = arith.constant 2.560000e+02 : f32
    %69 = vector.broadcast %cst_25 : f32 to vector<16x1xf32>
    %70 = arith.divf %68, %69 : vector<16x1xf32>
    %cst_26 = arith.constant 9.99999997E-7 : f32
    %71 = vector.broadcast %cst_26 : f32 to vector<16x1xf32>
    %72 = arith.addf %70, %71 : vector<16x1xf32>
    %73 = math.rsqrt %72 : vector<16x1xf32>
    %74 = vector.broadcast %73 : vector<16x1xf32> to vector<16x256xf32>
    %75 = arith.mulf %64, %74 : vector<16x256xf32>
    %76 = vector.broadcast %65 : vector<1x256xf32> to vector<16x256xf32>
    %77 = arith.mulf %76, %75 : vector<16x256xf32>
    %78 = arith.truncf %77 : vector<16x256xf32> to vector<16x256xbf16>
    %79 = arith.truncf %3 : vector<16x256xf32> to vector<16x256xbf16>
    %c0_27 = arith.constant 0 : index
    %c0_28 = arith.constant 0 : index
    %80 = vector.load %arg8[%c0_27, %c0_28] : memref<256x256xbf16, #tpu.memory_space<vmem>>, vector<256x256xbf16>
    %cst_29 = arith.constant dense<0.000000e+00> : vector<16x256xf32>
    %81 = tpu.matmul %78, %80, %cst_29 {dimension_numbers = #tpu.dot_dimension_numbers<[1], [0], [0], [1], [0, 0, 1, 1], [], []>} : vector<16x256xbf16>, vector<256x256xbf16>, vector<16x256xf32> -> vector<16x256xf32>
    %c0_30 = arith.constant 0 : index
    %c0_31 = arith.constant 0 : index
    %82 = vector.load %arg9[%c0_30, %c0_31] : memref<256x512xbf16, #tpu.memory_space<vmem>>, vector<256x512xbf16>
    %cst_32 = arith.constant dense<0.000000e+00> : vector<16x512xf32>
    %83 = tpu.matmul %79, %82, %cst_32 {dimension_numbers = #tpu.dot_dimension_numbers<[1], [0], [0], [1], [0, 0, 1, 1], [], []>} : vector<16x256xbf16>, vector<256x512xbf16>, vector<16x512xf32> -> vector<16x512xf32>
    %84 = vector.extract_strided_slice %83 {offsets = [0, 0], sizes = [16, 256], strides = [1, 1]} : vector<16x512xf32> to vector<16x256xf32>
    %85 = vector.extract_strided_slice %83 {offsets = [0, 256], sizes = [16, 256], strides = [1, 1]} : vector<16x512xf32> to vector<16x256xf32>
    %c0_33 = arith.constant 0 : index
    %c0_34 = arith.constant 0 : index
    %86 = vector.load %arg10[%c0_33, %c0_34] : memref<256x256xbf16, #tpu.memory_space<vmem>>, vector<256x256xbf16>
    %c0_35 = arith.constant 0 : index
    %c0_36 = arith.constant 0 : index
    %c0_37 = arith.constant 0 : index
    %87 = vector.load %arg14[%c0_35, %c0_36, %c0_37] : memref<2x16x16xf32, #tpu.memory_space<vmem>>, vector<2x16x16xf32>
    %88 = arith.truncf %81 : vector<16x256xf32> to vector<16x256xbf16>
    %89 = vector.extract_strided_slice %88 {offsets = [0, 0], sizes = [16, 128], strides = [1, 1]} : vector<16x256xbf16> to vector<16x128xbf16>
    %90 = vector.extract_strided_slice %88 {offsets = [0, 128], sizes = [16, 128], strides = [1, 1]} : vector<16x256xbf16> to vector<16x128xbf16>
    %91 = vector.shape_cast %89 : vector<16x128xbf16> to vector<1x16x128xbf16>
    %92 = vector.shape_cast %90 : vector<16x128xbf16> to vector<1x16x128xbf16>
    %93 = tpu.concatenate %91, %92 in 0 : vector<1x16x128xbf16>, vector<1x16x128xbf16> -> vector<2x16x128xbf16>
    %94 = arith.truncf %84 : vector<16x256xf32> to vector<16x256xbf16>
    %95 = vector.extract_strided_slice %94 {offsets = [0, 0], sizes = [16, 128], strides = [1, 1]} : vector<16x256xbf16> to vector<16x128xbf16>
    %96 = vector.extract_strided_slice %94 {offsets = [0, 128], sizes = [16, 128], strides = [1, 1]} : vector<16x256xbf16> to vector<16x128xbf16>
    %97 = vector.shape_cast %95 : vector<16x128xbf16> to vector<1x16x128xbf16>
    %98 = vector.shape_cast %96 : vector<16x128xbf16> to vector<1x16x128xbf16>
    %99 = tpu.concatenate %97, %98 in 0 : vector<1x16x128xbf16>, vector<1x16x128xbf16> -> vector<2x16x128xbf16>
    %100 = arith.truncf %85 : vector<16x256xf32> to vector<16x256xbf16>
    %101 = vector.extract_strided_slice %100 {offsets = [0, 0], sizes = [16, 128], strides = [1, 1]} : vector<16x256xbf16> to vector<16x128xbf16>
    %102 = vector.extract_strided_slice %100 {offsets = [0, 128], sizes = [16, 128], strides = [1, 1]} : vector<16x256xbf16> to vector<16x128xbf16>
    %103 = vector.shape_cast %101 : vector<16x128xbf16> to vector<1x16x128xbf16>
    %104 = vector.shape_cast %102 : vector<16x128xbf16> to vector<1x16x128xbf16>
    %105 = tpu.concatenate %103, %104 in 0 : vector<1x16x128xbf16>, vector<1x16x128xbf16> -> vector<2x16x128xbf16>
    "tpu.trace_start"() <{level = 10 : i32, message = "ntd,nsd->nts"}> : () -> ()
    %cst_38 = arith.constant dense<0.000000e+00> : vector<2x16x16xf32>
    %106 = tpu.matmul %93, %99, %cst_38 {dimension_numbers = #tpu.dot_dimension_numbers<[2], [2], [1], [1], [0, 0, 0, 1, 1, 1], [0], [0]>} : vector<2x16x128xbf16>, vector<2x16x128xbf16>, vector<2x16x16xf32> -> vector<2x16x16xf32>
    "tpu.trace_stop"() : () -> ()
    %107 = arith.addf %106, %87 : vector<2x16x16xf32>
    %cst_39 = arith.constant dense<0xFF800000> : vector<2x16xf32>
    %108 = vector.multi_reduction <maximumf>, %107, %cst_39 [2] : vector<2x16x16xf32> to vector<2x16xf32>
    %109 = vector.shape_cast %108 : vector<2x16xf32> to vector<2x16x1xf32>
    %110 = vector.broadcast %109 : vector<2x16x1xf32> to vector<2x16x16xf32>
    %111 = arith.subf %107, %110 : vector<2x16x16xf32>
    %112 = math.exp %111 : vector<2x16x16xf32>
    %cst_40 = arith.constant dense<0.000000e+00> : vector<2x16xf32>
    %113 = vector.multi_reduction <add>, %112, %cst_40 [2] : vector<2x16x16xf32> to vector<2x16xf32>
    %114 = vector.shape_cast %113 : vector<2x16xf32> to vector<2x16x1xf32>
    %115 = tpu.reciprocal %114 {approx = true} : vector<2x16x1xf32> -> vector<2x16x1xf32>
    %116 = vector.broadcast %115 : vector<2x16x1xf32> to vector<2x16x16xf32>
    %117 = arith.mulf %112, %116 : vector<2x16x16xf32>
    %118 = arith.truncf %117 : vector<2x16x16xf32> to vector<2x16x16xbf16>
    "tpu.trace_start"() <{level = 10 : i32, message = "nts,nsd->ntd"}> : () -> ()
    %cst_41 = arith.constant dense<0.000000e+00> : vector<2x16x128xf32>
    %119 = tpu.matmul %118, %105, %cst_41 {dimension_numbers = #tpu.dot_dimension_numbers<[2], [1], [1], [2], [0, 0, 0, 1, 1, 2], [0], [0]>} : vector<2x16x16xbf16>, vector<2x16x128xbf16>, vector<2x16x128xf32> -> vector<2x16x128xf32>
    "tpu.trace_stop"() : () -> ()
    %120 = vector.extract_strided_slice %119 {offsets = [0, 0, 0], sizes = [1, 16, 128], strides = [1, 1, 1]} : vector<2x16x128xf32> to vector<1x16x128xf32>
    %121 = vector.shape_cast %120 : vector<1x16x128xf32> to vector<16x128xf32>
    %122 = vector.extract_strided_slice %119 {offsets = [1, 0, 0], sizes = [1, 16, 128], strides = [1, 1, 1]} : vector<2x16x128xf32> to vector<1x16x128xf32>
    %123 = vector.shape_cast %122 : vector<1x16x128xf32> to vector<16x128xf32>
    %124 = tpu.concatenate %121, %123 in 1 : vector<16x128xf32>, vector<16x128xf32> -> vector<16x256xf32>
    %125 = arith.truncf %124 : vector<16x256xf32> to vector<16x256xbf16>
    %cst_42 = arith.constant dense<0.000000e+00> : vector<16x256xf32>
    %126 = tpu.matmul %125, %86, %cst_42 {dimension_numbers = #tpu.dot_dimension_numbers<[1], [0], [0], [1], [0, 0, 1, 1], [], []>} : vector<16x256xbf16>, vector<256x256xbf16>, vector<16x256xf32> -> vector<16x256xf32>
    %127 = arith.addf %64, %126 : vector<16x256xf32>
    %c0_43 = arith.constant 0 : index
    %c0_44 = arith.constant 0 : index
    %128 = vector.load %arg5[%c0_43, %c0_44] : memref<1x256xf32, #tpu.memory_space<vmem>>, vector<1x256xf32>
    %129 = arith.mulf %127, %127 : vector<16x256xf32>
    %cst_45 = arith.constant dense<0.000000e+00> : vector<16xf32>
    %130 = vector.multi_reduction <add>, %129, %cst_45 [1] : vector<16x256xf32> to vector<16xf32>
    %131 = vector.shape_cast %130 : vector<16xf32> to vector<16x1xf32>
    %cst_46 = arith.constant 2.560000e+02 : f32
    %132 = vector.broadcast %cst_46 : f32 to vector<16x1xf32>
    %133 = arith.divf %131, %132 : vector<16x1xf32>
    %cst_47 = arith.constant 9.99999997E-7 : f32
    %134 = vector.broadcast %cst_47 : f32 to vector<16x1xf32>
    %135 = arith.addf %133, %134 : vector<16x1xf32>
    %136 = math.rsqrt %135 : vector<16x1xf32>
    %137 = vector.broadcast %136 : vector<16x1xf32> to vector<16x256xf32>
    %138 = arith.mulf %127, %137 : vector<16x256xf32>
    %139 = vector.broadcast %128 : vector<1x256xf32> to vector<16x256xf32>
    %140 = arith.mulf %139, %138 : vector<16x256xf32>
    %141 = arith.truncf %140 : vector<16x256xf32> to vector<16x256xbf16>
    %c0_48 = arith.constant 0 : index
    %c0_49 = arith.constant 0 : index
    %142 = vector.load %arg11[%c0_48, %c0_49] : memref<256x1024xbf16, #tpu.memory_space<vmem>>, vector<256x1024xbf16>
    %cst_50 = arith.constant dense<0.000000e+00> : vector<16x1024xf32>
    %143 = tpu.matmul %141, %142, %cst_50 {dimension_numbers = #tpu.dot_dimension_numbers<[1], [0], [0], [1], [0, 0, 1, 1], [], []>} : vector<16x256xbf16>, vector<256x1024xbf16>, vector<16x1024xf32> -> vector<16x1024xf32>
    %cst_51 = arith.constant 0.000000e+00 : f32
    %144 = vector.broadcast %cst_51 : f32 to vector<16x1024xf32>
    %145 = arith.maximumf %143, %144 : vector<16x1024xf32>
    %146 = arith.truncf %145 : vector<16x1024xf32> to vector<16x1024xbf16>
    %c0_52 = arith.constant 0 : index
    %c0_53 = arith.constant 0 : index
    %147 = vector.load %arg12[%c0_52, %c0_53] : memref<1024x256xbf16, #tpu.memory_space<vmem>>, vector<1024x256xbf16>
    %cst_54 = arith.constant dense<0.000000e+00> : vector<16x256xf32>
    %148 = tpu.matmul %146, %147, %cst_54 {dimension_numbers = #tpu.dot_dimension_numbers<[1], [0], [0], [1], [0, 0, 1, 1], [], []>} : vector<16x1024xbf16>, vector<1024x256xbf16>, vector<16x256xf32> -> vector<16x256xf32>
    %149 = arith.addf %127, %148 : vector<16x256xf32>
    %c0_55 = arith.constant 0 : index
    %c0_56 = arith.constant 0 : index
    %c0_57 = arith.constant 0 : index
    %150 = vector.load %arg15[%c0_55, %c0_56, %c0_57] : memref<1x16x256xf32, #tpu.memory_space<vmem>>, vector<1x16x256xf32>
    %151 = vector.shape_cast %150 : vector<1x16x256xf32> to vector<16x256xf32>
    %152 = vector.shape_cast %149 : vector<16x256xf32> to vector<1x16x256xf32>
    tpu.vector_store %arg15[%c0_55, %c0_56, %c0_57], %152 {strides = array<i32>} : memref<1x16x256xf32, #tpu.memory_space<vmem>>, vector<1x16x256xf32>,
    return
  }
  func.func @transform_0(%arg0: i32) -> (i32, i32, i32) {
    %c0_i32 = arith.constant 0 : i32
    %c0_i32_0 = arith.constant 0 : i32
    %c0_i32_1 = arith.constant 0 : i32
    return %arg0, %c0_i32, %c0_i32_0 : i32, i32, i32
  }
  func.func @transform_1(%arg0: i32) -> (i32, i32, i32) {
    %c0_i32 = arith.constant 0 : i32
    %c0_i32_0 = arith.constant 0 : i32
    %c0_i32_1 = arith.constant 0 : i32
    return %arg0, %c0_i32, %c0_i32_0 : i32, i32, i32
  }
  func.func @transform_2(%arg0: i32) -> (i32, i32) {
    %c0_i32 = arith.constant 0 : i32
    %c0_i32_0 = arith.constant 0 : i32
    %c0_i32_1 = arith.constant 0 : i32
    return %c0_i32, %c0_i32_0 : i32, i32
  }
  func.func @transform_3(%arg0: i32) -> (i32, i32) {
    %c0_i32 = arith.constant 0 : i32
    %c0_i32_0 = arith.constant 0 : i32
    %c0_i32_1 = arith.constant 0 : i32
    return %c0_i32, %c0_i32_0 : i32, i32
  }
  func.func @transform_4(%arg0: i32) -> (i32, i32) {
    %c0_i32 = arith.constant 0 : i32
    %c0_i32_0 = arith.constant 0 : i32
    %c0_i32_1 = arith.constant 0 : i32
    return %c0_i32, %c0_i32_0 : i32, i32
  }
  func.func @transform_5(%arg0: i32) -> (i32, i32) {
    %c0_i32 = arith.constant 0 : i32
    %c0_i32_0 = arith.constant 0 : i32
    %c0_i32_1 = arith.constant 0 : i32
    return %c0_i32, %c0_i32_0 : i32, i32
  }
  func.func @transform_6(%arg0: i32) -> (i32, i32) {
    %c0_i32 = arith.constant 0 : i32
    %c0_i32_0 = arith.constant 0 : i32
    %c0_i32_1 = arith.constant 0 : i32
    return %c0_i32, %c0_i32_0 : i32, i32
  }
  func.func @transform_7(%arg0: i32) -> (i32, i32) {
    %c0_i32 = arith.constant 0 : i32
    %c0_i32_0 = arith.constant 0 : i32
    %c0_i32_1 = arith.constant 0 : i32
    return %c0_i32, %c0_i32_0 : i32, i32
  }
  func.func @transform_8(%arg0: i32) -> (i32, i32) {
    %c0_i32 = arith.constant 0 : i32
    %c0_i32_0 = arith.constant 0 : i32
    %c0_i32_1 = arith.constant 0 : i32
    return %c0_i32, %c0_i32_0 : i32, i32
  }
  func.func @transform_9(%arg0: i32) -> (i32, i32) {
    %c0_i32 = arith.constant 0 : i32
    %c0_i32_0 = arith.constant 0 : i32
    %c0_i32_1 = arith.constant 0 : i32
    return %c0_i32, %c0_i32_0 : i32, i32
  }
  func.func @transform_10(%arg0: i32) -> (i32, i32) {
    %c0_i32 = arith.constant 0 : i32
    %c0_i32_0 = arith.constant 0 : i32
    %c0_i32_1 = arith.constant 0 : i32
    return %c0_i32, %c0_i32_0 : i32, i32
  }
  func.func @transform_11(%arg0: i32) -> (i32, i32) {
    %c0_i32 = arith.constant 0 : i32
    %c0_i32_0 = arith.constant 0 : i32
    %c0_i32_1 = arith.constant 0 : i32
    return %c0_i32, %c0_i32_0 : i32, i32
  }
  func.func @transform_12(%arg0: i32) -> (i32, i32, i32) {
    %c0_i32 = arith.constant 0 : i32
    %c0_i32_0 = arith.constant 0 : i32
    %c0_i32_1 = arith.constant 0 : i32
    %c0_i32_2 = arith.constant 0 : i32
    return %c0_i32, %c0_i32_0, %c0_i32_1 : i32, i32, i32
  }
  func.func @transform_13(%arg0: i32) -> (i32, i32, i32) {
    %c0_i32 = arith.constant 0 : i32
    %c0_i32_0 = arith.constant 0 : i32
    %c0_i32_1 = arith.constant 0 : i32
    %c0_i32_2 = arith.constant 0 : i32
    return %c0_i32, %c0_i32_0, %c0_i32_1 : i32, i32, i32
  }
  func.func @transform_14(%arg0: i32) -> (i32, i32, i32) {
    %c0_i32 = arith.constant 0 : i32
    %c0_i32_0 = arith.constant 0 : i32
    %c0_i32_1 = arith.constant 0 : i32
    return %arg0, %c0_i32, %c0_i32_0 : i32, i32, i32
  }
}

</mosaic_0001>

<llo_original>
// kernel: tpu_custom_call.1
$region0: #{tpu_custom_call.1}
  #allocation0 [shape = 'u32[]', space=smem, size = 0x4, offset = 0x4, fixed_abs, tag = 'smem constant byte address 0x4 - core index']
  #allocation1 [shape = 'u32[144,128]{1,0:T(1,128)}', space=vmem, size = 0x12000, scoped, tag = 'internal scratch']
  %s0 = inlined_call_operand.hbm [shape: f32[2,16,256], index: 0, kind: input, shape index: {}]
  %s1 = inlined_call_operand.hbm [shape: f32[2,16,256], index: 1, kind: input, shape index: {}]
  %s2 = inlined_call_operand.vmem [shape: f32[1,256], index: 2, kind: input, shape index: {}]
  %s3 = inlined_call_operand.vmem [shape: f32[1,256], index: 3, kind: input, shape index: {}]
  %s4 = inlined_call_operand.vmem [shape: f32[1,256], index: 4, kind: input, shape index: {}]
  %s5 = inlined_call_operand.hbm [shape: bf16[256,768], index: 5, kind: input, shape index: {}]
  %s6 = inlined_call_operand.hbm [shape: bf16[256,256], index: 6, kind: input, shape index: {}]
  %s7 = inlined_call_operand.hbm [shape: bf16[256,256], index: 7, kind: input, shape index: {}]
  %s8 = inlined_call_operand.hbm [shape: bf16[256,512], index: 8, kind: input, shape index: {}]
  %s9 = inlined_call_operand.hbm [shape: bf16[256,256], index: 9, kind: input, shape index: {}]
  %s10 = inlined_call_operand.hbm [shape: bf16[256,1024], index: 10, kind: input, shape index: {}]
  %s11 = inlined_call_operand.hbm [shape: bf16[1024,256], index: 11, kind: input, shape index: {}]
  %s12 = inlined_call_operand.vmem [shape: f32[2,16,16], index: 12, kind: input, shape index: {}]
  %s13 = inlined_call_operand.hbm [shape: f32[2,16,16], index: 13, kind: input, shape index: {}]
  %s14 = inlined_call_operand.hbm [shape: f32[2,16,256], index: 14, kind: output, shape index: {}]
  %s15 = sld [smem:[#allocation0]]
  $region129: #{tpu_custom_call.1} parent=0
    _
  %s17 = ssub.s32 1, %s15
  %s18 = scalar_select 0, %s17, %s15
  $region1: #{tpu_custom_call.1} parent=0
    #allocation2 [shape = 'u8[32768]{0}', space=vmem, size = 0x8000, scoped, tag = 'input window, operand 0']
    #allocation3 [shape = 's32[2]{0}', space=sflag, size = 0x8, scoped, tag = 'scoped memory for tpu_custom_call.1']
    #allocation4 [shape = 's32[2]{0}', space=sflag, size = 0x8, scoped, tag = 'scoped memory for tpu_custom_call.1']
    #allocation5 [shape = 'u8[32768]{0}', space=vmem, size = 0x8000, scoped, tag = 'input window, operand 1']
    #allocation6 [shape = 's32[2]{0}', space=sflag, size = 0x8, scoped, tag = 'scoped memory for tpu_custom_call.1']
    #allocation7 [shape = 'u8[393216]{0}', space=vmem, size = 0x60000, scoped, tag = 'input window, operand 5, single buffered']
    #allocation8 [shape = 'u8[131072]{0}', space=vmem, size = 0x20000, scoped, tag = 'input window, operand 6, single buffered']
    #allocation9 [shape = 's32[1]{0}', space=sflag, size = 0x4, scoped, tag = 'scoped memory for tpu_custom_call.1']
    #allocation10 [shape = 'u8[131072]{0}', space=vmem, size = 0x20000, scoped, tag = 'input window, operand 7, single buffered']
    #allocation11 [shape = 'u8[262144]{0}', space=vmem, size = 0x40000, scoped, tag = 'input window, operand 8, single buffered']
    #allocation12 [shape = 's32[1]{0}', space=sflag, size = 0x4, scoped, tag = 'scoped memory for tpu_custom_call.1']
    #allocation13 [shape = 'u8[131072]{0}', space=vmem, size = 0x20000, scoped, tag = 'input window, operand 9, single buffered']
    #allocation14 [shape = 'u8[524288]{0}', space=vmem, size = 0x80000, scoped, tag = 'input window, operand 10, single buffered']
    #allocation15 [shape = 's32[1]{0}', space=sflag, size = 0x4, scoped, tag = 'scoped memory for tpu_custom_call.1']
    #allocation16 [shape = 'u8[524288]{0}', space=vmem, size = 0x80000, scoped, tag = 'input window, operand 11, single buffered']
    #allocation17 [shape = 'u8[16384]{0}', space=vmem, size = 0x4000, scoped, tag = 'input window, operand 13, single buffered']
    #allocation18 [shape = 's32[1]{0}', space=sflag, size = 0x4, scoped, tag = 'scoped memory for tpu_custom_call.1']
    #allocation19 [shape = 'u8[32768]{0}', space=vmem, size = 0x8000, scoped, tag = 'output window, operand 0']
    %19 = vsyncpa [#allocation3], 0
    %s20 = scalar_lea.sflag [#allocation3], 1
    %21 = vsyncpa %s20, 0
    %22 = vsyncpa [#allocation6], 0
    %s23 = scalar_lea.sflag [#allocation6], 1
    %24 = vsyncpa %s23, 0
    %25 = vsyncpa [#allocation9], 0
    %26 = vsyncpa [#allocation12], 0
    %27 = vsyncpa [#allocation15], 0
    %28 = vsyncpa [#allocation18], 0
    %29 = vsyncpa [#allocation4], 0
    %s30 = scalar_lea.sflag [#allocation4], 1
    %31 = vsyncpa %s30, 0
    loop: start=0, step=1, limit=4
    $region2: #{tpu_custom_call.1} parent=1 // loop_pre_header
      _
    $region3: #{tpu_custom_call.1} parent=1 // loop_header
      %s33 = sphi 0, %s37
      %p34 = scmp.ge.s32.totalorder %s33, 4
      %s43 = sphi 0, %s45
      %s46 = sphi 0, %s43
      %s47 = sphi 0, %s46
      %s63 = sphi 0, %s47
      %s69 = sphi 0, %s71
      %s72 = sphi 0, %s69
      %s73 = sphi 0, %s72
      %s89 = sphi 0, %s73
      %s93 = sphi 0, %s93
      %s95 = sphi 0, %s93
      %s96 = sphi 0, %s95
      %s110 = sphi 0, %s96
      %s114 = sphi 0, %s114
      %s116 = sphi 0, %s114
      %s117 = sphi 0, %s116
      %s131 = sphi 0, %s117
      %s135 = sphi 0, %s135
      %s137 = sphi 0, %s135
      %s138 = sphi 0, %s137
      %s152 = sphi 0, %s138
      %s156 = sphi 0, %s156
      %s158 = sphi 0, %s156
      %s159 = sphi 0, %s158
      %s173 = sphi 0, %s159
      %s177 = sphi 0, %s177
      %s179 = sphi 0, %s177
      %s180 = sphi 0, %s179
      %s194 = sphi 0, %s180
      %s198 = sphi 0, %s198
      %s200 = sphi 0, %s198
      %s201 = sphi 0, %s200
      %s215 = sphi 0, %s201
      %s219 = sphi 0, %s219
      %s221 = sphi 0, %s219
      %s222 = sphi 0, %s221
      %s236 = sphi 0, %s222
      %s240 = sphi 0, %s240
      %s242 = sphi 0, %s240
      %s243 = sphi 0, %s242
      %s257 = sphi 0, %s243
      %s261 = sphi 0, %s261
      %s263 = sphi 0, %s261
      %s264 = sphi 0, %s263
      %s278 = sphi 0, %s264
      %s282 = sphi 0, %s282
      %s284 = sphi 0, %s282
      %s285 = sphi 0, %s284
      %s299 = sphi 0, %s285
      %s303 = sphi 0, %s303
      %s305 = sphi 0, %s303
      %s306 = sphi 0, %s305
      %s320 = sphi 0, %s306
      %s324 = sphi 0, %s324
      %s326 = sphi 0, %s324
      %s327 = sphi 0, %s326
      %s341 = sphi 0, %s327
      %s347 = sphi 0, %s349
      %s350 = sphi 0, %s347
      %s351 = sphi 0, %s350
      %s367 = sphi 0, %s351
    $region4: #{tpu_custom_call.1} parent=1 // loop_header_branch
      %36 = sbr.rel (%p34) target = $region8
    $region5: #{tpu_custom_call.1} parent=1 // loop_body
      %s38 = ssub.s32 %s33, 1
      %s39 = ssub.s32 %s33, 2
      %s40 = sadd.s32 %s33, 1
      %s41 = ssub.s32 %s33, %s40
      %p42 = scmp.eq.s32.totalorder %s41, 0
      %s44 = sadd.s32 %s43, 1
      %s45 = scalar_select %p42, %s43, %s44
      %p48 = pneg %p42
      %p49 = scmp.eq.s32.totalorder %s33, 1
      %p50 = por %p48, %p49
      %p51 = scmp.ne.s32.totalorder %s43, %s46
      %p52 = scmp.eq.s32.totalorder %s33, 0
      %p53 = por %p51, %p52
      %p54 = scmp.ne.s32.totalorder %s43, %s46
      %p55 = scmp.eq.s32.totalorder %s38, 1
      %p56 = por %p54, %p55
      %p57 = scmp.ne.s32.totalorder %s46, %s47
      %p58 = scmp.eq.s32.totalorder %s38, 0
      %p59 = por %p57, %p58
      %p60 = scmp.ne.s32.totalorder %s46, %s47
      %p61 = scmp.eq.s32.totalorder %s39, 1
      %p62 = por %p60, %p61
      %p64 = scmp.ne.s32.totalorder %s47, %s63
      %p65 = scmp.eq.s32.totalorder %s39, 0
      %p66 = por %p64, %p65
      %s67 = ssub.s32 %s33, %s40
      %p68 = scmp.eq.s32.totalorder %s67, 0
      %s70 = sadd.s32 %s69, 1
      %s71 = scalar_select %p68, %s69, %s70
      %p74 = pneg %p68
      %p75 = scmp.eq.s32.totalorder %s33, 1
      %p76 = por %p74, %p75
      %p77 = scmp.ne.s32.totalorder %s69, %s72
      %p78 = scmp.eq.s32.totalorder %s33, 0
      %p79 = por %p77, %p78
      %p80 = scmp.ne.s32.totalorder %s69, %s72
      %p81 = scmp.eq.s32.totalorder %s38, 1
      %p82 = por %p80, %p81
      %p83 = scmp.ne.s32.totalorder %s72, %s73
      %p84 = scmp.eq.s32.totalorder %s38, 0
      %p85 = por %p83, %p84
      %p86 = scmp.ne.s32.totalorder %s72, %s73
      %p87 = scmp.eq.s32.totalorder %s39, 1
      %p88 = por %p86, %p87
      %p90 = scmp.ne.s32.totalorder %s73, %s89
      %p91 = scmp.eq.s32.totalorder %s39, 0
      %p92 = por %p90, %p91
      %s94 = sadd.s32 %s93, 1
      %p97 = scmp.eq.s32.totalorder %s33, 1
      %p98 = scmp.ne.s32.totalorder %s93, %s95
      %p99 = scmp.eq.s32.totalorder %s33, 0
      %p100 = por %p98, %p99
      %p101 = scmp.ne.s32.totalorder %s93, %s95
      %p102 = scmp.eq.s32.totalorder %s38, 1
      %p103 = por %p101, %p102
      %p104 = scmp.ne.s32.totalorder %s95, %s96
      %p105 = scmp.eq.s32.totalorder %s38, 0
      %p106 = por %p104, %p105
      %p107 = scmp.ne.s32.totalorder %s95, %s96
      %p108 = scmp.eq.s32.totalorder %s39, 1
      %p109 = por %p107, %p108
      %p111 = scmp.ne.s32.totalorder %s96, %s110
      %p112 = scmp.eq.s32.totalorder %s39, 0
      %p113 = por %p111, %p112
      %s115 = sadd.s32 %s114, 1
      %p118 = scmp.eq.s32.totalorder %s33, 1
      %p119 = scmp.ne.s32.totalorder %s114, %s116
      %p120 = scmp.eq.s32.totalorder %s33, 0
      %p121 = por %p119, %p120
      %p122 = scmp.ne.s32.totalorder %s114, %s116
      %p123 = scmp.eq.s32.totalorder %s38, 1
      %p124 = por %p122, %p123
      %p125 = scmp.ne.s32.totalorder %s116, %s117
      %p126 = scmp.eq.s32.totalorder %s38, 0
      %p127 = por %p125, %p126
      %p128 = scmp.ne.s32.totalorder %s116, %s117
      %p129 = scmp.eq.s32.totalorder %s39, 1
      %p130 = por %p128, %p129
      %p132 = scmp.ne.s32.totalorder %s117, %s131
      %p133 = scmp.eq.s32.totalorder %s39, 0
      %p134 = por %p132, %p133
      %s136 = sadd.s32 %s135, 1
      %p139 = scmp.eq.s32.totalorder %s33, 1
      %p140 = scmp.ne.s32.totalorder %s135, %s137
      %p141 = scmp.eq.s32.totalorder %s33, 0
      %p142 = por %p140, %p141
      %p143 = scmp.ne.s32.totalorder %s135, %s137
      %p144 = scmp.eq.s32.totalorder %s38, 1
      %p145 = por %p143, %p144
      %p146 = scmp.ne.s32.totalorder %s137, %s138
      %p147 = scmp.eq.s32.totalorder %s38, 0
      %p148 = por %p146, %p147
      %p149 = scmp.ne.s32.totalorder %s137, %s138
      %p150 = scmp.eq.s32.totalorder %s39, 1
      %p151 = por %p149, %p150
      %p153 = scmp.ne.s32.totalorder %s138, %s152
      %p154 = scmp.eq.s32.totalorder %s39, 0
      %p155 = por %p153, %p154
      %s157 = sadd.s32 %s156, 1
      %p160 = scmp.eq.s32.totalorder %s33, 1
      %p161 = scmp.ne.s32.totalorder %s156, %s158
      %p162 = scmp.eq.s32.totalorder %s33, 0
      %p163 = por %p161, %p162
      %p164 = scmp.ne.s32.totalorder %s156, %s158
      %p165 = scmp.eq.s32.totalorder %s38, 1
      %p166 = por %p164, %p165
      %p167 = scmp.ne.s32.totalorder %s158, %s159
      %p168 = scmp.eq.s32.totalorder %s38, 0
      %p169 = por %p167, %p168
      %p170 = scmp.ne.s32.totalorder %s158, %s159
      %p171 = scmp.eq.s32.totalorder %s39, 1
      %p172 = por %p170, %p171
      %p174 = scmp.ne.s32.totalorder %s159, %s173
      %p175 = scmp.eq.s32.totalorder %s39, 0
      %p176 = por %p174, %p175
      %s178 = sadd.s32 %s177, 1
      %p181 = scmp.eq.s32.totalorder %s33, 1
      %p182 = scmp.ne.s32.totalorder %s177, %s179
      %p183 = scmp.eq.s32.totalorder %s33, 0
      %p184 = por %p182, %p183
      %p185 = scmp.ne.s32.totalorder %s177, %s179
      %p186 = scmp.eq.s32.totalorder %s38, 1
      %p187 = por %p185, %p186
      %p188 = scmp.ne.s32.totalorder %s179, %s180
      %p189 = scmp.eq.s32.totalorder %s38, 0
      %p190 = por %p188, %p189
      %p191 = scmp.ne.s32.totalorder %s179, %s180
      %p192 = scmp.eq.s32.totalorder %s39, 1
      %p193 = por %p191, %p192
      %p195 = scmp.ne.s32.totalorder %s180, %s194
      %p196 = scmp.eq.s32.totalorder %s39, 0
      %p197 = por %p195, %p196
      %s199 = sadd.s32 %s198, 1
      %p202 = scmp.eq.s32.totalorder %s33, 1
      %p203 = scmp.ne.s32.totalorder %s198, %s200
      %p204 = scmp.eq.s32.totalorder %s33, 0
      %p205 = por %p203, %p204
      %p206 = scmp.ne.s32.totalorder %s198, %s200
      %p207 = scmp.eq.s32.totalorder %s38, 1
      %p208 = por %p206, %p207
      %p209 = scmp.ne.s32.totalorder %s200, %s201
      %p210 = scmp.eq.s32.totalorder %s38, 0
      %p211 = por %p209, %p210
      %p212 = scmp.ne.s32.totalorder %s200, %s201
      %p213 = scmp.eq.s32.totalorder %s39, 1
      %p214 = por %p212, %p213
      %p216 = scmp.ne.s32.totalorder %s201, %s215
      %p217 = scmp.eq.s32.totalorder %s39, 0
      %p218 = por %p216, %p217
      %s220 = sadd.s32 %s219, 1
      %p223 = scmp.eq.s32.totalorder %s33, 1
      %p224 = scmp.ne.s32.totalorder %s219, %s221
      %p225 = scmp.eq.s32.totalorder %s33, 0
      %p226 = por %p224, %p225
      %p227 = scmp.ne.s32.totalorder %s219, %s221
      %p228 = scmp.eq.s32.totalorder %s38, 1
      %p229 = por %p227, %p228
      %p230 = scmp.ne.s32.totalorder %s221, %s222
      %p231 = scmp.eq.s32.totalorder %s38, 0
      %p232 = por %p230, %p231
      %p233 = scmp.ne.s32.totalorder %s221, %s222
      %p234 = scmp.eq.s32.totalorder %s39, 1
      %p235 = por %p233, %p234
      %p237 = scmp.ne.s32.totalorder %s222, %s236
      %p238 = scmp.eq.s32.totalorder %s39, 0
      %p239 = por %p237, %p238
      %s241 = sadd.s32 %s240, 1
      %p244 = scmp.eq.s32.totalorder %s33, 1
      %p245 = scmp.ne.s32.totalorder %s240, %s242
      %p246 = scmp.eq.s32.totalorder %s33, 0
      %p247 = por %p245, %p246
      %p248 = scmp.ne.s32.totalorder %s240, %s242
      %p249 = scmp.eq.s32.totalorder %s38, 1
      %p250 = por %p248, %p249
      %p251 = scmp.ne.s32.totalorder %s242, %s243
      %p252 = scmp.eq.s32.totalorder %s38, 0
      %p253 = por %p251, %p252
      %p254 = scmp.ne.s32.totalorder %s242, %s243
      %p255 = scmp.eq.s32.totalorder %s39, 1
      %p256 = por %p254, %p255
      %p258 = scmp.ne.s32.totalorder %s243, %s257
      %p259 = scmp.eq.s32.totalorder %s39, 0
      %p260 = por %p258, %p259
      %s262 = sadd.s32 %s261, 1
      %p265 = scmp.eq.s32.totalorder %s33, 1
      %p266 = scmp.ne.s32.totalorder %s261, %s263
      %p267 = scmp.eq.s32.totalorder %s33, 0
      %p268 = por %p266, %p267
      %p269 = scmp.ne.s32.totalorder %s261, %s263
      %p270 = scmp.eq.s32.totalorder %s38, 1
      %p271 = por %p269, %p270
      %p272 = scmp.ne.s32.totalorder %s263, %s264
      %p273 = scmp.eq.s32.totalorder %s38, 0
      %p274 = por %p272, %p273
      %p275 = scmp.ne.s32.totalorder %s263, %s264
      %p276 = scmp.eq.s32.totalorder %s39, 1
      %p277 = por %p275, %p276
      %p279 = scmp.ne.s32.totalorder %s264, %s278
      %p280 = scmp.eq.s32.totalorder %s39, 0
      %p281 = por %p279, %p280
      %s283 = sadd.s32 %s282, 1
      %p286 = scmp.eq.s32.totalorder %s33, 1
      %p287 = scmp.ne.s32.totalorder %s282, %s284
      %p288 = scmp.eq.s32.totalorder %s33, 0
      %p289 = por %p287, %p288
      %p290 = scmp.ne.s32.totalorder %s282, %s284
      %p291 = scmp.eq.s32.totalorder %s38, 1
      %p292 = por %p290, %p291
      %p293 = scmp.ne.s32.totalorder %s284, %s285
      %p294 = scmp.eq.s32.totalorder %s38, 0
      %p295 = por %p293, %p294
      %p296 = scmp.ne.s32.totalorder %s284, %s285
      %p297 = scmp.eq.s32.totalorder %s39, 1
      %p298 = por %p296, %p297
      %p300 = scmp.ne.s32.totalorder %s285, %s299
      %p301 = scmp.eq.s32.totalorder %s39, 0
      %p302 = por %p300, %p301
      %s304 = sadd.s32 %s303, 1
      %p307 = scmp.eq.s32.totalorder %s33, 1
      %p308 = scmp.ne.s32.totalorder %s303, %s305
      %p309 = scmp.eq.s32.totalorder %s33, 0
      %p310 = por %p308, %p309
      %p311 = scmp.ne.s32.totalorder %s303, %s305
      %p312 = scmp.eq.s32.totalorder %s38, 1
      %p313 = por %p311, %p312
      %p314 = scmp.ne.s32.totalorder %s305, %s306
      %p315 = scmp.eq.s32.totalorder %s38, 0
      %p316 = por %p314, %p315
      %p317 = scmp.ne.s32.totalorder %s305, %s306
      %p318 = scmp.eq.s32.totalorder %s39, 1
      %p319 = por %p317, %p318
      %p321 = scmp.ne.s32.totalorder %s306, %s320
      %p322 = scmp.eq.s32.totalorder %s39, 0
      %p323 = por %p321, %p322
      %s325 = sadd.s32 %s324, 1
      %p328 = scmp.eq.s32.totalorder %s33, 1
      %p329 = scmp.ne.s32.totalorder %s324, %s326
      %p330 = scmp.eq.s32.totalorder %s33, 0
      %p331 = por %p329, %p330
      %p332 = scmp.ne.s32.totalorder %s324, %s326
      %p333 = scmp.eq.s32.totalorder %s38, 1
      %p334 = por %p332, %p333
      %p335 = scmp.ne.s32.totalorder %s326, %s327
      %p336 = scmp.eq.s32.totalorder %s38, 0
      %p337 = por %p335, %p336
      %p338 = scmp.ne.s32.totalorder %s326, %s327
      %p339 = scmp.eq.s32.totalorder %s39, 1
      %p340 = por %p338, %p339
      %p342 = scmp.ne.s32.totalorder %s327, %s341
      %p343 = scmp.eq.s32.totalorder %s39, 0
      %p344 = por %p342, %p343
      %s345 = ssub.s32 %s33, %s40
      %p346 = scmp.eq.s32.totalorder %s345, 0
      %s348 = sadd.s32 %s347, 1
      %s349 = scalar_select %p346, %s347, %s348
      %p352 = pneg %p346
      %p353 = scmp.eq.s32.totalorder %s33, 1
      %p354 = por %p352, %p353
      %p355 = scmp.ne.s32.totalorder %s347, %s350
      %p356 = scmp.eq.s32.totalorder %s33, 0
      %p357 = por %p355, %p356
      %p358 = scmp.ne.s32.totalorder %s347, %s350
      %p359 = scmp.eq.s32.totalorder %s38, 1
      %p360 = por %p358, %p359
      %p361 = scmp.ne.s32.totalorder %s350, %s351
      %p362 = scmp.eq.s32.totalorder %s38, 0
      %p363 = por %p361, %p362
      %p364 = scmp.ne.s32.totalorder %s350, %s351
      %p365 = scmp.eq.s32.totalorder %s39, 1
      %p366 = por %p364, %p365
      %p368 = scmp.ne.s32.totalorder %s351, %s367
      %p369 = scmp.eq.s32.totalorder %s39, 0
      %p370 = por %p368, %p369
      %p371 = scmp.le.s32.totalorder 1, %s33
      %p372 = scmp.lt.s32.totalorder %s33, 3
      %p373 = pnand %p371, %p372
      %p374 = pneg %p373
      // Predicated region
      $region9: #{tpu_custom_call.1} parent=5 // pred_check
        _
      $region10: #{tpu_custom_call.1} parent=5 // pred_check_branch
        %376 = sbr.rel (%p373) target = $region12
      $region11: #{tpu_custom_call.1} parent=5 // pred_region
        %s377 = ssub.s32 %s33, 1
        // Predicated region
        $region13: #{tpu_custom_call.1} parent=11 // pred_check
          %p378 = pneg %p106
        $region14: #{tpu_custom_call.1} parent=11 // pred_check_branch
          %380 = sbr.rel (%p378) target = $region16
        $region15: #{tpu_custom_call.1} parent=11 // pred_region
          _
        $region16: #{tpu_custom_call.1} parent=11 // pred_fallthru
          _
        // Predicated region
        $region17: #{tpu_custom_call.1} parent=11 // pred_check
          %p381 = pneg %p127
        $region18: #{tpu_custom_call.1} parent=11 // pred_check_branch
          %383 = sbr.rel (%p381) target = $region20
        $region19: #{tpu_custom_call.1} parent=11 // pred_region
          _
        $region20: #{tpu_custom_call.1} parent=11 // pred_fallthru
          _
        // Predicated region
        $region21: #{tpu_custom_call.1} parent=11 // pred_check
          %p384 = pneg %p148
        $region22: #{tpu_custom_call.1} parent=11 // pred_check_branch
          %386 = sbr.rel (%p384) target = $region24
        $region23: #{tpu_custom_call.1} parent=11 // pred_region
          _
        $region24: #{tpu_custom_call.1} parent=11 // pred_fallthru
          _
        // Predicated region
        $region25: #{tpu_custom_call.1} parent=11 // pred_check
          %p387 = pneg %p169
        $region26: #{tpu_custom_call.1} parent=11 // pred_check_branch
          %389 = sbr.rel (%p387) target = $region28
        $region27: #{tpu_custom_call.1} parent=11 // pred_region
          %s391 = ssub.s32 12288, 12288
          %392 = vsyncadd [#allocation6], %s391
          %s393 = sshll.u32 [#allocation7], 4
          %s394 = int_to_ptr.vmem [resolvable:$true] %s393
          %399 = dma.hbm_to_vmem [thread:$0]  %s5, 12288, %s394, [#allocation6], 384, 384, 24
        $region28: #{tpu_custom_call.1} parent=11 // pred_fallthru
          _
        // Predicated region
        $region29: #{tpu_custom_call.1} parent=11 // pred_check
          %p400 = pneg %p190
        $region30: #{tpu_custom_call.1} parent=11 // pred_check_branch
          %402 = sbr.rel (%p400) target = $region32
        $region31: #{tpu_custom_call.1} parent=11 // pred_region
          %s404 = ssub.s32 4096, 4096
          %405 = vsyncadd [#allocation9], %s404
          %s406 = sshll.u32 [#allocation8], 4
          %s407 = int_to_ptr.vmem [resolvable:$true] %s406
          %412 = dma.hbm_to_vmem [thread:$0]  %s6, 4096, %s407, [#allocation9], 128, 128, 8
        $region32: #{tpu_custom_call.1} parent=11 // pred_fallthru
          _
        // Predicated region
        $region33: #{tpu_custom_call.1} parent=11 // pred_check
          %p413 = pneg %p211
        $region34: #{tpu_custom_call.1} parent=11 // pred_check_branch
          %415 = sbr.rel (%p413) target = $region36
        $region35: #{tpu_custom_call.1} parent=11 // pred_region
          %s417 = ssub.s32 4096, 4096
          %418 = vsyncadd [#allocation9], %s417
          %s419 = sshll.u32 [#allocation10], 4
          %s420 = int_to_ptr.vmem [resolvable:$true] %s419
          %425 = dma.hbm_to_vmem [thread:$0]  %s7, 4096, %s420, [#allocation9], 128, 128, 8
        $region36: #{tpu_custom_call.1} parent=11 // pred_fallthru
          _
        // Predicated region
        $region37: #{tpu_custom_call.1} parent=11 // pred_check
          %p426 = pneg %p232
        $region38: #{tpu_custom_call.1} parent=11 // pred_check_branch
          %428 = sbr.rel (%p426) target = $region40
        $region39: #{tpu_custom_call.1} parent=11 // pred_region
          %s430 = ssub.s32 8192, 8192
          %431 = vsyncadd [#allocation12], %s430
          %s432 = sshll.u32 [#allocation11], 4
          %s433 = int_to_ptr.vmem [resolvable:$true] %s432
          %438 = dma.hbm_to_vmem [thread:$0]  %s8, 8192, %s433, [#allocation12], 256, 256, 16
        $region40: #{tpu_custom_call.1} parent=11 // pred_fallthru
          _
        // Predicated region
        $region41: #{tpu_custom_call.1} parent=11 // pred_check
          %p439 = pneg %p253
        $region42: #{tpu_custom_call.1} parent=11 // pred_check_branch
          %441 = sbr.rel (%p439) target = $region44
        $region43: #{tpu_custom_call.1} parent=11 // pred_region
          %s443 = ssub.s32 4096, 4096
          %444 = vsyncadd [#allocation12], %s443
          %s445 = sshll.u32 [#allocation13], 4
          %s446 = int_to_ptr.vmem [resolvable:$true] %s445
          %451 = dma.hbm_to_vmem [thread:$0]  %s9, 4096, %s446, [#allocation12], 128, 128, 8
        $region44: #{tpu_custom_call.1} parent=11 // pred_fallthru
          _
        // Predicated region
        $region45: #{tpu_custom_call.1} parent=11 // pred_check
          %p452 = pneg %p274
        $region46: #{tpu_custom_call.1} parent=11 // pred_check_branch
          %454 = sbr.rel (%p452) target = $region48
        $region47: #{tpu_custom_call.1} parent=11 // pred_region
          %s456 = ssub.s32 16384, 16384
          %457 = vsyncadd [#allocation15], %s456
          %s458 = sshll.u32 [#allocation14], 4
          %s459 = int_to_ptr.vmem [resolvable:$true] %s458
          %464 = dma.hbm_to_vmem [thread:$0]  %s10, 16384, %s459, [#allocation15], 512, 512, 32
        $region48: #{tpu_custom_call.1} parent=11 // pred_fallthru
          _
        // Predicated region
        $region49: #{tpu_custom_call.1} parent=11 // pred_check
          %p465 = pneg %p295
        $region50: #{tpu_custom_call.1} parent=11 // pred_check_branch
          %467 = sbr.rel (%p465) target = $region52
        $region51: #{tpu_custom_call.1} parent=11 // pred_region
          %s469 = ssub.s32 16384, 16384
          %470 = vsyncadd [#allocation15], %s469
          %s471 = sshll.u32 [#allocation16], 4
          %s472 = int_to_ptr.vmem [resolvable:$true] %s471
          %477 = dma.hbm_to_vmem [thread:$0]  %s11, 16384, %s472, [#allocation15], 128, 128, 8
        $region52: #{tpu_custom_call.1} parent=11 // pred_fallthru
          _
        // Predicated region
        $region53: #{tpu_custom_call.1} parent=11 // pred_check
          %p478 = pneg %p316
        $region54: #{tpu_custom_call.1} parent=11 // pred_check_branch
          %480 = sbr.rel (%p478) target = $region56
        $region55: #{tpu_custom_call.1} parent=11 // pred_region
          _
        $region56: #{tpu_custom_call.1} parent=11 // pred_fallthru
          _
        // Predicated region
        $region57: #{tpu_custom_call.1} parent=11 // pred_check
          %p481 = pneg %p337
        $region58: #{tpu_custom_call.1} parent=11 // pred_check_branch
          %483 = sbr.rel (%p481) target = $region60
        $region59: #{tpu_custom_call.1} parent=11 // pred_region
          %s485 = ssub.s32 512, 512
          %486 = vsyncadd [#allocation18], %s485
          %s487 = sshll.u32 [#allocation17], 4
          %s488 = int_to_ptr.vmem [resolvable:$true] %s487
          %493 = dma.hbm_to_vmem [thread:$0]  %s13, 512, %s488, [#allocation18], 128, 128, 8
        $region60: #{tpu_custom_call.1} parent=11 // pred_fallthru
          _
      $region12: #{tpu_custom_call.1} parent=5 // pred_fallthru
        _
      %p494 = scmp.lt.s32.totalorder %s33, 2
      // Predicated region
      $region61: #{tpu_custom_call.1} parent=5 // pred_check
        %p495 = pneg %p494
      $region62: #{tpu_custom_call.1} parent=5 // pred_check_branch
        %497 = sbr.rel (%p495) target = $region64
      $region63: #{tpu_custom_call.1} parent=5 // pred_region
        // Predicated region
        $region65: #{tpu_custom_call.1} parent=63 // pred_check
          %p498 = pneg %p53
        $region66: #{tpu_custom_call.1} parent=63 // pred_check_branch
          %500 = sbr.rel (%p498) target = $region68
        $region67: #{tpu_custom_call.1} parent=63 // pred_region
          %s501 = sand.u32 %s43, 1
          %s502 = scalar_lea.sflag [#allocation3], %s501
          %s503 = sand.u32 %s43, 1
          %s504 = smul.addr %s503, 32
          %s505 = scalar_lea.vmem [#allocation2], %s504
          %s507 = ssub.s32 512, 512
          %508 = vsyncadd %s502, %s507
          %s509 = smul.addr %s33, 4
          %s510 = smul.addr %s509, 128
          %s511 = scalar_lea.hbm %s0, %s510
          %s512 = sshll.u32 %s505, 4
          %s513 = int_to_ptr.vmem [resolvable:$true] %s512
          %518 = dma.hbm_to_vmem [thread:$0]  %s511, 512, %s513, %s502, 256, 256, 16
        $region68: #{tpu_custom_call.1} parent=63 // pred_fallthru
          _
        // Predicated region
        $region69: #{tpu_custom_call.1} parent=63 // pred_check
          %p519 = pneg %p79
        $region70: #{tpu_custom_call.1} parent=63 // pred_check_branch
          %521 = sbr.rel (%p519) target = $region72
        $region71: #{tpu_custom_call.1} parent=63 // pred_region
          %s522 = sand.u32 %s33, 1
          %s523 = scalar_lea.sflag [#allocation6], %s522
          %s524 = sand.u32 %s69, 1
          %s525 = smul.addr %s524, 32
          %s526 = scalar_lea.vmem [#allocation5], %s525
          %s528 = ssub.s32 512, 512
          %529 = vsyncadd %s523, %s528
          %s530 = smul.addr %s33, 4
          %s531 = smul.addr %s530, 128
          %s532 = scalar_lea.hbm %s1, %s531
          %s533 = sshll.u32 %s526, 4
          %s534 = int_to_ptr.vmem [resolvable:$true] %s533
          %539 = dma.hbm_to_vmem [thread:$0]  %s532, 512, %s534, %s523, 256, 256, 16
        $region72: #{tpu_custom_call.1} parent=63 // pred_fallthru
          _
      $region64: #{tpu_custom_call.1} parent=5 // pred_fallthru
        _
      %p540 = scmp.le.s32.totalorder 1, %s33
      %p541 = scmp.lt.s32.totalorder %s33, 3
      %p542 = pnand %p540, %p541
      %p543 = pneg %p542
      // Predicated region
      $region73: #{tpu_custom_call.1} parent=5 // pred_check
        _
      $region74: #{tpu_custom_call.1} parent=5 // pred_check_branch
        %545 = sbr.rel (%p542) target = $region76
      $region75: #{tpu_custom_call.1} parent=5 // pred_region
        %s546 = ssub.s32 %s33, 1
        %s547 = sand.u32 %s46, 1
        %s548 = scalar_lea.sflag [#allocation3], %s547
        %s549 = sand.u32 %s46, 1
        %s550 = smul.addr %s549, 32
        %s551 = scalar_lea.vmem [#allocation2], %s550
        // Predicated region
        $region77: #{tpu_custom_call.1} parent=75 // pred_check
          %p552 = pneg %p59
        $region78: #{tpu_custom_call.1} parent=75 // pred_check_branch
          %554 = sbr.rel (%p552) target = $region80
        $region79: #{tpu_custom_call.1} parent=75 // pred_region
          %555 = dma.done %s548, 512
        $region80: #{tpu_custom_call.1} parent=75 // pred_fallthru
          _
        %s556 = sand.u32 %s38, 1
        %s557 = scalar_lea.sflag [#allocation6], %s556
        %s558 = sand.u32 %s72, 1
        %s559 = smul.addr %s558, 32
        %s560 = scalar_lea.vmem [#allocation5], %s559
        // Predicated region
        $region81: #{tpu_custom_call.1} parent=75 // pred_check
          %p561 = pneg %p85
        $region82: #{tpu_custom_call.1} parent=75 // pred_check_branch
          %563 = sbr.rel (%p561) target = $region84
        $region83: #{tpu_custom_call.1} parent=75 // pred_region
          %564 = dma.done %s557, 512
        $region84: #{tpu_custom_call.1} parent=75 // pred_fallthru
          _
        // Predicated region
        $region85: #{tpu_custom_call.1} parent=75 // pred_check
          %p565 = pneg %p169
        $region86: #{tpu_custom_call.1} parent=75 // pred_check_branch
          %567 = sbr.rel (%p565) target = $region88
        $region87: #{tpu_custom_call.1} parent=75 // pred_region
          %568 = dma.done [#allocation6], 12288
        $region88: #{tpu_custom_call.1} parent=75 // pred_fallthru
          _
        // Predicated region
        $region89: #{tpu_custom_call.1} parent=75 // pred_check
          %p569 = pneg %p190
        $region90: #{tpu_custom_call.1} parent=75 // pred_check_branch
          %571 = sbr.rel (%p569) target = $region92
        $region91: #{tpu_custom_call.1} parent=75 // pred_region
          %572 = dma.done [#allocation9], 4096
        $region92: #{tpu_custom_call.1} parent=75 // pred_fallthru
          _
        // Predicated region
        $region93: #{tpu_custom_call.1} parent=75 // pred_check
          %p573 = pneg %p211
        $region94: #{tpu_custom_call.1} parent=75 // pred_check_branch
          %575 = sbr.rel (%p573) target = $region96
        $region95: #{tpu_custom_call.1} parent=75 // pred_region
          %576 = dma.done [#allocation9], 4096
        $region96: #{tpu_custom_call.1} parent=75 // pred_fallthru
          _
        // Predicated region
        $region97: #{tpu_custom_call.1} parent=75 // pred_check
          %p577 = pneg %p232
        $region98: #{tpu_custom_call.1} parent=75 // pred_check_branch
          %579 = sbr.rel (%p577) target = $region100
        $region99: #{tpu_custom_call.1} parent=75 // pred_region
          %580 = dma.done [#allocation12], 8192
        $region100: #{tpu_custom_call.1} parent=75 // pred_fallthru
          _
        // Predicated region
        $region101: #{tpu_custom_call.1} parent=75 // pred_check
          %p581 = pneg %p253
        $region102: #{tpu_custom_call.1} parent=75 // pred_check_branch
          %583 = sbr.rel (%p581) target = $region104
        $region103: #{tpu_custom_call.1} parent=75 // pred_region
          %584 = dma.done [#allocation12], 4096
        $region104: #{tpu_custom_call.1} parent=75 // pred_fallthru
          _
        // Predicated region
        $region105: #{tpu_custom_call.1} parent=75 // pred_check
          %p585 = pneg %p274
        $region106: #{tpu_custom_call.1} parent=75 // pred_check_branch
          %587 = sbr.rel (%p585) target = $region108
        $region107: #{tpu_custom_call.1} parent=75 // pred_region
          %588 = dma.done [#allocation15], 16384
        $region108: #{tpu_custom_call.1} parent=75 // pred_fallthru
          _
        // Predicated region
        $region109: #{tpu_custom_call.1} parent=75 // pred_check
          %p589 = pneg %p295
        $region110: #{tpu_custom_call.1} parent=75 // pred_check_branch
          %591 = sbr.rel (%p589) target = $region112
        $region111: #{tpu_custom_call.1} parent=75 // pred_region
          %592 = dma.done [#allocation15], 16384
        $region112: #{tpu_custom_call.1} parent=75 // pred_fallthru
          _
        // Predicated region
        $region113: #{tpu_custom_call.1} parent=75 // pred_check
          %p593 = pneg %p337
        $region114: #{tpu_custom_call.1} parent=75 // pred_check_branch
          %595 = sbr.rel (%p593) target = $region116
        $region115: #{tpu_custom_call.1} parent=75 // pred_region
          %596 = dma.done [#allocation18], 512
        $region116: #{tpu_custom_call.1} parent=75 // pred_fallthru
          _
        %s597 = sand.u32 %s46, 1
        %s598 = scalar_lea.sflag [#allocation3], %s597
        %s599 = sand.u32 %s46, 1
        %s600 = smul.addr %s599, 32
        %s601 = scalar_lea.vmem [#allocation2], %s600
        %p602 = pneg %p59
        %p603 = pneg %p56
        %s604 = sand.u32 %s38, 1
        %s605 = scalar_lea.sflag [#allocation6], %s604
        %s606 = sand.u32 %s72, 1
        %s607 = smul.addr %s606, 32
        %s608 = scalar_lea.vmem [#allocation5], %s607
        %p609 = pneg %p85
        %p610 = pneg %p82
        %p611 = pneg %p106
        %p612 = pneg %p103
        %p613 = pneg %p127
        %p614 = pneg %p124
        %p615 = pneg %p148
        %p616 = pneg %p145
        %p617 = pneg %p169
        %p618 = pneg %p166
        %p619 = pneg %p190
        %p620 = pneg %p187
        %p621 = pneg %p211
        %p622 = pneg %p208
        %p623 = pneg %p232
        %p624 = pneg %p229
        %p625 = pneg %p253
        %p626 = pneg %p250
        %p627 = pneg %p274
        %p628 = pneg %p271
        %p629 = pneg %p295
        %p630 = pneg %p292
        %p631 = pneg %p316
        %p632 = pneg %p313
        %p633 = pneg %p337
        %p634 = pneg %p334
        %p635 = pneg %p363
        %p636 = pneg %p360
        %s637 = sand.u32 %s350, 1
        %s638 = scalar_lea.sflag [#allocation4], %s637
        %s639 = sand.u32 %s350, 1
        %s640 = smul.addr %s639, 32
        %s641 = scalar_lea.vmem [#allocation19], %s640
        %v643 = vld [vmem:[%s551] sm:$0xff]
        %v644 = vld [vmem:[%s551 + $0x8] sm:$0xff]
        %v645 = vld [vmem:[%s551 + $0x10] sm:$0xff]
        %v646 = vld [vmem:[%s551 + $0x18] sm:$0xff]
        %v647 = vld [vmem:[%s560] sm:$0xff]
        %v648 = vld [vmem:[%s560 + $0x8] sm:$0xff]
        %v649 = vld [vmem:[%s560 + $0x10] sm:$0xff]
        %v650 = vld [vmem:[%s560 + $0x18] sm:$0xff]
        %v651 = vld [vmem:[%s2] sm:$0x3]
        %v652 = vmul.f32 %v643, %v643
        %v653 = vmul.f32 %v644, %v644
        %v654 = vmul.f32 %v645, %v645
        %v655 = vmul.f32 %v646, %v646
        %v656 = vadd.f32 %v652, %v653
        %657 = vadd.xlane.f32.xlu0 %v656
        %v658 = vpop.xlane.xlu0 %657
        %v659 = vadd.f32 %v654, %v655
        %660 = vadd.xlane.f32.xlu0 %v659
        %v661 = vpop.xlane.xlu0 %660
        %v662 = vrcp.pop 256.0
        %v663 = vmul.f32 %v658, %v662
        %v664 = vmul.f32 %v661, %v662
        %v665 = vadd.f32 %v663, 1e-06
        %v666 = vadd.f32 %v664, 1e-06
        %v667 = vrsqrt.pop %v665
        %v668 = vrsqrt.pop %v666
        %v669 = vmul.f32 %v643, %v667
        %v670 = vmul.f32 %v644, %v667
        %v671 = vmul.f32 %v645, %v668
        %v672 = vmul.f32 %v646, %v668
        %v674 = vlaneseq
        %v675 = vshrl.u32 %v674, 7
        %v676 = vsub.s32 0, %v675
        %v677 = vrot.slane %v651, %v676
        %v678 = vlaneseq
        %v679 = vshrl.u32 %v678, 7
        %v680 = vsub.s32 1, %v679
        %v681 = vrot.slane %v651, %v680
        %v684 = vmul.f32 %v677, %v669
        %v685 = vmul.f32 %v681, %v670
        %v686 = vmul.f32 %v677, %v671
        %v687 = vmul.f32 %v681, %v672
        %v688 = vpack.c.bf16 %v686, %v684
        %v689 = vpack.c.bf16 %v687, %v685
        %v690 = vld [vmem:[#allocation7] sm:$0xff]
        %v691 = vld [vmem:[#allocation7 + $0x8] sm:$0xff]
        %v692 = vld [vmem:[#allocation7 + $0x10] sm:$0xff]
        %v693 = vld [vmem:[#allocation7 + $0x18] sm:$0xff]
        %v694 = vld [vmem:[#allocation7 + $0x20] sm:$0xff]
        %v695 = vld [vmem:[#allocation7 + $0x28] sm:$0xff]
        %v696 = vld [vmem:[#allocation7 + $0x30] sm:$0xff]
        %v697 = vld [vmem:[#allocation7 + $0x38] sm:$0xff]
        %v698 = vld [vmem:[#allocation7 + $0x40] sm:$0xff]
        %v699 = vld [vmem:[#allocation7 + $0x48] sm:$0xff]
        %v700 = vld [vmem:[#allocation7 + $0x50] sm:$0xff]
        %v701 = vld [vmem:[#allocation7 + $0x58] sm:$0xff]
        %v702 = vld [vmem:[#allocation7 + $0x60] sm:$0xff]
        %v703 = vld [vmem:[#allocation7 + $0x68] sm:$0xff]
        %v704 = vld [vmem:[#allocation7 + $0x70] sm:$0xff]
        %v705 = vld [vmem:[#allocation7 + $0x78] sm:$0xff]
        %v706 = vld [vmem:[#allocation7 + $0x80] sm:$0xff]
        %v707 = vld [vmem:[#allocation7 + $0x88] sm:$0xff]
        %v708 = vld [vmem:[#allocation7 + $0x90] sm:$0xff]
        %v709 = vld [vmem:[#allocation7 + $0x98] sm:$0xff]
        %v710 = vld [vmem:[#allocation7 + $0xa0] sm:$0xff]
        %v711 = vld [vmem:[#allocation7 + $0xa8] sm:$0xff]
        %v712 = vld [vmem:[#allocation7 + $0xb0] sm:$0xff]
        %v713 = vld [vmem:[#allocation7 + $0xb8] sm:$0xff]
        %v714 = vld [vmem:[#allocation7 + $0xc0] sm:$0xff]
        %v715 = vld [vmem:[#allocation7 + $0xc8] sm:$0xff]
        %v716 = vld [vmem:[#allocation7 + $0xd0] sm:$0xff]
        %v717 = vld [vmem:[#allocation7 + $0xd8] sm:$0xff]
        %v718 = vld [vmem:[#allocation7 + $0xe0] sm:$0xff]
        %v719 = vld [vmem:[#allocation7 + $0xe8] sm:$0xff]
        %v720 = vld [vmem:[#allocation7 + $0xf0] sm:$0xff]
        %v721 = vld [vmem:[#allocation7 + $0xf8] sm:$0xff]
        %v722 = vld [vmem:[#allocation7 + $0x100] sm:$0xff]
        %v723 = vld [vmem:[#allocation7 + $0x108] sm:$0xff]
        %v724 = vld [vmem:[#allocation7 + $0x110] sm:$0xff]
        %v725 = vld [vmem:[#allocation7 + $0x118] sm:$0xff]
        %v726 = vld [vmem:[#allocation7 + $0x120] sm:$0xff]
        %v727 = vld [vmem:[#allocation7 + $0x128] sm:$0xff]
        %v728 = vld [vmem:[#allocation7 + $0x130] sm:$0xff]
        %v729 = vld [vmem:[#allocation7 + $0x138] sm:$0xff]
        %v730 = vld [vmem:[#allocation7 + $0x140] sm:$0xff]
        %v731 = vld [vmem:[#allocation7 + $0x148] sm:$0xff]
        %v732 = vld [vmem:[#allocation7 + $0x150] sm:$0xff]
        %v733 = vld [vmem:[#allocation7 + $0x158] sm:$0xff]
        %v734 = vld [vmem:[#allocation7 + $0x160] sm:$0xff]
        %v735 = vld [vmem:[#allocation7 + $0x168] sm:$0xff]
        %v736 = vld [vmem:[#allocation7 + $0x170] sm:$0xff]
        %v737 = vld [vmem:[#allocation7 + $0x178] sm:$0xff]
        %v738 = vld [vmem:[#allocation7 + $0x180] sm:$0xff]
        %v739 = vld [vmem:[#allocation7 + $0x188] sm:$0xff]
        %v740 = vld [vmem:[#allocation7 + $0x190] sm:$0xff]
        %v741 = vld [vmem:[#allocation7 + $0x198] sm:$0xff]
        %v742 = vld [vmem:[#allocation7 + $0x1a0] sm:$0xff]
        %v743 = vld [vmem:[#allocation7 + $0x1a8] sm:$0xff]
        %v744 = vld [vmem:[#allocation7 + $0x1b0] sm:$0xff]
        %v745 = vld [vmem:[#allocation7 + $0x1b8] sm:$0xff]
        %v746 = vld [vmem:[#allocation7 + $0x1c0] sm:$0xff]
        %v747 = vld [vmem:[#allocation7 + $0x1c8] sm:$0xff]
        %v748 = vld [vmem:[#allocation7 + $0x1d0] sm:$0xff]
        %v749 = vld [vmem:[#allocation7 + $0x1d8] sm:$0xff]
        %v750 = vld [vmem:[#allocation7 + $0x1e0] sm:$0xff]
        %v751 = vld [vmem:[#allocation7 + $0x1e8] sm:$0xff]
        %v752 = vld [vmem:[#allocation7 + $0x1f0] sm:$0xff]
        %v753 = vld [vmem:[#allocation7 + $0x1f8] sm:$0xff]
        %v754 = vld [vmem:[#allocation7 + $0x200] sm:$0xff]
        %v755 = vld [vmem:[#allocation7 + $0x208] sm:$0xff]
        %v756 = vld [vmem:[#allocation7 + $0x210] sm:$0xff]
        %v757 = vld [vmem:[#allocation7 + $0x218] sm:$0xff]
        %v758 = vld [vmem:[#allocation7 + $0x220] sm:$0xff]
        %v759 = vld [vmem:[#allocation7 + $0x228] sm:$0xff]
        %v760 = vld [vmem:[#allocation7 + $0x230] sm:$0xff]
        %v761 = vld [vmem:[#allocation7 + $0x238] sm:$0xff]
        %v762 = vld [vmem:[#allocation7 + $0x240] sm:$0xff]
        %v763 = vld [vmem:[#allocation7 + $0x248] sm:$0xff]
        %v764 = vld [vmem:[#allocation7 + $0x250] sm:$0xff]
        %v765 = vld [vmem:[#allocation7 + $0x258] sm:$0xff]
        %v766 = vld [vmem:[#allocation7 + $0x260] sm:$0xff]
        %v767 = vld [vmem:[#allocation7 + $0x268] sm:$0xff]
        %v768 = vld [vmem:[#allocation7 + $0x270] sm:$0xff]
        %v769 = vld [vmem:[#allocation7 + $0x278] sm:$0xff]
        %v770 = vld [vmem:[#allocation7 + $0x280] sm:$0xff]
        %v771 = vld [vmem:[#allocation7 + $0x288] sm:$0xff]
        %v772 = vld [vmem:[#allocation7 + $0x290] sm:$0xff]
        %v773 = vld [vmem:[#allocation7 + $0x298] sm:$0xff]
        %v774 = vld [vmem:[#allocation7 + $0x2a0] sm:$0xff]
        %v775 = vld [vmem:[#allocation7 + $0x2a8] sm:$0xff]
        %v776 = vld [vmem:[#allocation7 + $0x2b0] sm:$0xff]
        %v777 = vld [vmem:[#allocation7 + $0x2b8] sm:$0xff]
        %v778 = vld [vmem:[#allocation7 + $0x2c0] sm:$0xff]
        %v779 = vld [vmem:[#allocation7 + $0x2c8] sm:$0xff]
        %v780 = vld [vmem:[#allocation7 + $0x2d0] sm:$0xff]
        %v781 = vld [vmem:[#allocation7 + $0x2d8] sm:$0xff]
        %v782 = vld [vmem:[#allocation7 + $0x2e0] sm:$0xff]
        %v783 = vld [vmem:[#allocation7 + $0x2e8] sm:$0xff]
        %v784 = vld [vmem:[#allocation7 + $0x2f0] sm:$0xff]
        %v785 = vld [vmem:[#allocation7 + $0x2f8] sm:$0xff]
        %v882 = vunpack.c.l.b16 %v690
        %v883 = vunpack.c.h.b16 %v690
        %v884 = vunpack.c.l.b16 %v691
        %v885 = vunpack.c.h.b16 %v691
        %v886 = vunpack.c.l.b16 %v692
        %v887 = vunpack.c.h.b16 %v692
        %v888 = vunpack.c.l.b16 %v693
        %v889 = vunpack.c.h.b16 %v693
        %v890 = vunpack.c.l.b16 %v694
        %v891 = vunpack.c.h.b16 %v694
        %v892 = vunpack.c.l.b16 %v695
        %v893 = vunpack.c.h.b16 %v695
        %v894 = vunpack.c.l.b16 %v696
        %v895 = vunpack.c.h.b16 %v696
        %v896 = vunpack.c.l.b16 %v697
        %v897 = vunpack.c.h.b16 %v697
        %v898 = vunpack.c.l.b16 %v698
        %v899 = vunpack.c.h.b16 %v698
        %v900 = vunpack.c.l.b16 %v699
        %v901 = vunpack.c.h.b16 %v699
        %v902 = vunpack.c.l.b16 %v700
        %v903 = vunpack.c.h.b16 %v700
        %v904 = vunpack.c.l.b16 %v701
        %v905 = vunpack.c.h.b16 %v701
        %v906 = vunpack.c.l.b16 %v702
        %v907 = vunpack.c.h.b16 %v702
        %v908 = vunpack.c.l.b16 %v703
        %v909 = vunpack.c.h.b16 %v703
        %v910 = vunpack.c.l.b16 %v704
        %v911 = vunpack.c.h.b16 %v704
        %v912 = vunpack.c.l.b16 %v705
        %v913 = vunpack.c.h.b16 %v705
        %v914 = vunpack.c.l.b16 %v706
        %v915 = vunpack.c.h.b16 %v706
        %v916 = vunpack.c.l.b16 %v707
        %v917 = vunpack.c.h.b16 %v707
        %v918 = vunpack.c.l.b16 %v708
        %v919 = vunpack.c.h.b16 %v708
        %v920 = vunpack.c.l.b16 %v709
        %v921 = vunpack.c.h.b16 %v709
        %v922 = vunpack.c.l.b16 %v710
        %v923 = vunpack.c.h.b16 %v710
        %v924 = vunpack.c.l.b16 %v711
        %v925 = vunpack.c.h.b16 %v711
        %v926 = vunpack.c.l.b16 %v712
        %v927 = vunpack.c.h.b16 %v712
        %v928 = vunpack.c.l.b16 %v713
        %v929 = vunpack.c.h.b16 %v713
        %v930 = vunpack.c.l.b16 %v714
        %v931 = vunpack.c.h.b16 %v714
        %v932 = vunpack.c.l.b16 %v715
        %v933 = vunpack.c.h.b16 %v715
        %v934 = vunpack.c.l.b16 %v716
        %v935 = vunpack.c.h.b16 %v716
        %v936 = vunpack.c.l.b16 %v717
        %v937 = vunpack.c.h.b16 %v717
        %v938 = vunpack.c.l.b16 %v718
        %v939 = vunpack.c.h.b16 %v718
        %v940 = vunpack.c.l.b16 %v719
        %v941 = vunpack.c.h.b16 %v719
        %v942 = vunpack.c.l.b16 %v720
        %v943 = vunpack.c.h.b16 %v720
        %v944 = vunpack.c.l.b16 %v721
        %v945 = vunpack.c.h.b16 %v721
        %v946 = vunpack.c.l.b16 %v722
        %v947 = vunpack.c.h.b16 %v722
        %v948 = vunpack.c.l.b16 %v723
        %v949 = vunpack.c.h.b16 %v723
        %v950 = vunpack.c.l.b16 %v724
        %v951 = vunpack.c.h.b16 %v724
        %v952 = vunpack.c.l.b16 %v725
        %v953 = vunpack.c.h.b16 %v725
        %v954 = vunpack.c.l.b16 %v726
        %v955 = vunpack.c.h.b16 %v726
        %v956 = vunpack.c.l.b16 %v727
        %v957 = vunpack.c.h.b16 %v727
        %v958 = vunpack.c.l.b16 %v728
        %v959 = vunpack.c.h.b16 %v728
        %v960 = vunpack.c.l.b16 %v729
        %v961 = vunpack.c.h.b16 %v729
        %v962 = vunpack.c.l.b16 %v730
        %v963 = vunpack.c.h.b16 %v730
        %v964 = vunpack.c.l.b16 %v731
        %v965 = vunpack.c.h.b16 %v731
        %v966 = vunpack.c.l.b16 %v732
        %v967 = vunpack.c.h.b16 %v732
        %v968 = vunpack.c.l.b16 %v733
        %v969 = vunpack.c.h.b16 %v733
        %v970 = vunpack.c.l.b16 %v734
        %v971 = vunpack.c.h.b16 %v734
        %v972 = vunpack.c.l.b16 %v735
        %v973 = vunpack.c.h.b16 %v735
        %v974 = vunpack.c.l.b16 %v736
        %v975 = vunpack.c.h.b16 %v736
        %v976 = vunpack.c.l.b16 %v737
        %v977 = vunpack.c.h.b16 %v737
        %v978 = vunpack.c.l.b16 %v738
        %v979 = vunpack.c.h.b16 %v738
        %v980 = vunpack.c.l.b16 %v739
        %v981 = vunpack.c.h.b16 %v739
        %v982 = vunpack.c.l.b16 %v740
        %v983 = vunpack.c.h.b16 %v740
        %v984 = vunpack.c.l.b16 %v741
        %v985 = vunpack.c.h.b16 %v741
        %v986 = vunpack.c.l.b16 %v742
        %v987 = vunpack.c.h.b16 %v742
        %v988 = vunpack.c.l.b16 %v743
        %v989 = vunpack.c.h.b16 %v743
        %v990 = vunpack.c.l.b16 %v744
        %v991 = vunpack.c.h.b16 %v744
        %v992 = vunpack.c.l.b16 %v745
        %v993 = vunpack.c.h.b16 %v745
        %v994 = vunpack.c.l.b16 %v746
        %v995 = vunpack.c.h.b16 %v746
        %v996 = vunpack.c.l.b16 %v747
        %v997 = vunpack.c.h.b16 %v747
        %v998 = vunpack.c.l.b16 %v748
        %v999 = vunpack.c.h.b16 %v748
        %v1000 = vunpack.c.l.b16 %v749
        %v1001 = vunpack.c.h.b16 %v749
        %v1002 = vunpack.c.l.b16 %v750
        %v1003 = vunpack.c.h.b16 %v750
        %v1004 = vunpack.c.l.b16 %v751
        %v1005 = vunpack.c.h.b16 %v751
        %v1006 = vunpack.c.l.b16 %v752
        %v1007 = vunpack.c.h.b16 %v752
        %v1008 = vunpack.c.l.b16 %v753
        %v1009 = vunpack.c.h.b16 %v753
        %v1010 = vunpack.c.l.b16 %v754
        %v1011 = vunpack.c.h.b16 %v754
        %v1012 = vunpack.c.l.b16 %v755
        %v1013 = vunpack.c.h.b16 %v755
        %v1014 = vunpack.c.l.b16 %v756
        %v1015 = vunpack.c.h.b16 %v756
        %v1016 = vunpack.c.l.b16 %v757
        %v1017 = vunpack.c.h.b16 %v757
        %v1018 = vunpack.c.l.b16 %v758
        %v1019 = vunpack.c.h.b16 %v758
        %v1020 = vunpack.c.l.b16 %v759
        %v1021 = vunpack.c.h.b16 %v759
        %v1022 = vunpack.c.l.b16 %v760
        %v1023 = vunpack.c.h.b16 %v760
        %v1024 = vunpack.c.l.b16 %v761
        %v1025 = vunpack.c.h.b16 %v761
        %v1026 = vunpack.c.l.b16 %v762
        %v1027 = vunpack.c.h.b16 %v762
        %v1028 = vunpack.c.l.b16 %v763
        %v1029 = vunpack.c.h.b16 %v763
        %v1030 = vunpack.c.l.b16 %v764
        %v1031 = vunpack.c.h.b16 %v764
        %v1032 = vunpack.c.l.b16 %v765
        %v1033 = vunpack.c.h.b16 %v765
        %v1034 = vunpack.c.l.b16 %v766
        %v1035 = vunpack.c.h.b16 %v766
        %v1036 = vunpack.c.l.b16 %v767
        %v1037 = vunpack.c.h.b16 %v767
        %v1038 = vunpack.c.l.b16 %v768
        %v1039 = vunpack.c.h.b16 %v768
        %v1040 = vunpack.c.l.b16 %v769
        %v1041 = vunpack.c.h.b16 %v769
        %v1042 = vunpack.c.l.b16 %v770
        %v1043 = vunpack.c.h.b16 %v770
        %v1044 = vunpack.c.l.b16 %v771
        %v1045 = vunpack.c.h.b16 %v771
        %v1046 = vunpack.c.l.b16 %v772
        %v1047 = vunpack.c.h.b16 %v772
        %v1048 = vunpack.c.l.b16 %v773
        %v1049 = vunpack.c.h.b16 %v773
        %v1050 = vunpack.c.l.b16 %v774
        %v1051 = vunpack.c.h.b16 %v774
        %v1052 = vunpack.c.l.b16 %v775
        %v1053 = vunpack.c.h.b16 %v775
        %v1054 = vunpack.c.l.b16 %v776
        %v1055 = vunpack.c.h.b16 %v776
        %v1056 = vunpack.c.l.b16 %v777
        %v1057 = vunpack.c.h.b16 %v777
        %v1058 = vunpack.c.l.b16 %v778
        %v1059 = vunpack.c.h.b16 %v778
        %v1060 = vunpack.c.l.b16 %v779
        %v1061 = vunpack.c.h.b16 %v779
        %v1062 = vunpack.c.l.b16 %v780
        %v1063 = vunpack.c.h.b16 %v780
        %v1064 = vunpack.c.l.b16 %v781
        %v1065 = vunpack.c.h.b16 %v781
        %v1066 = vunpack.c.l.b16 %v782
        %v1067 = vunpack.c.h.b16 %v782
        %v1068 = vunpack.c.l.b16 %v783
        %v1069 = vunpack.c.h.b16 %v783
        %v1070 = vunpack.c.l.b16 %v784
        %v1071 = vunpack.c.h.b16 %v784
        %v1072 = vunpack.c.l.b16 %v785
        %v1073 = vunpack.c.h.b16 %v785
        %v1074 = vpack.c.b16 %v888, %v882
        %v1075 = vpack.c.b16 %v889, %v883
        %v1076 = vpack.c.b16 %v890, %v884
        %v1077 = vpack.c.b16 %v891, %v885
        %v1078 = vpack.c.b16 %v892, %v886
        %v1079 = vpack.c.b16 %v893, %v887
        %v1080 = vpack.c.b16 %v900, %v894
        %v1081 = vpack.c.b16 %v901, %v895
        %v1082 = vpack.c.b16 %v902, %v896
        %v1083 = vpack.c.b16 %v903, %v897
        %v1084 = vpack.c.b16 %v904, %v898
        %v1085 = vpack.c.b16 %v905, %v899
        %v1086 = vpack.c.b16 %v912, %v906
        %v1087 = vpack.c.b16 %v913, %v907
        %v1088 = vpack.c.b16 %v914, %v908
        %v1089 = vpack.c.b16 %v915, %v909
        %v1090 = vpack.c.b16 %v916, %v910
        %v1091 = vpack.c.b16 %v917, %v911
        %v1092 = vpack.c.b16 %v924, %v918
        %v1093 = vpack.c.b16 %v925, %v919
        %v1094 = vpack.c.b16 %v926, %v920
        %v1095 = vpack.c.b16 %v927, %v921
        %v1096 = vpack.c.b16 %v928, %v922
        %v1097 = vpack.c.b16 %v929, %v923
        %v1098 = vpack.c.b16 %v936, %v930
        %v1099 = vpack.c.b16 %v937, %v931
        %v1100 = vpack.c.b16 %v938, %v932
        %v1101 = vpack.c.b16 %v939, %v933
        %v1102 = vpack.c.b16 %v940, %v934
        %v1103 = vpack.c.b16 %v941, %v935
        %v1104 = vpack.c.b16 %v948, %v942
        %v1105 = vpack.c.b16 %v949, %v943
        %v1106 = vpack.c.b16 %v950, %v944
        %v1107 = vpack.c.b16 %v951, %v945
        %v1108 = vpack.c.b16 %v952, %v946
        %v1109 = vpack.c.b16 %v953, %v947
        %v1110 = vpack.c.b16 %v960, %v954
        %v1111 = vpack.c.b16 %v961, %v955
        %v1112 = vpack.c.b16 %v962, %v956
        %v1113 = vpack.c.b16 %v963, %v957
        %v1114 = vpack.c.b16 %v964, %v958
        %v1115 = vpack.c.b16 %v965, %v959
        %v1116 = vpack.c.b16 %v972, %v966
        %v1117 = vpack.c.b16 %v973, %v967
        %v1118 = vpack.c.b16 %v974, %v968
        %v1119 = vpack.c.b16 %v975, %v969
        %v1120 = vpack.c.b16 %v976, %v970
        %v1121 = vpack.c.b16 %v977, %v971
        %v1122 = vpack.c.b16 %v984, %v978
        %v1123 = vpack.c.b16 %v985, %v979
        %v1124 = vpack.c.b16 %v986, %v980
        %v1125 = vpack.c.b16 %v987, %v981
        %v1126 = vpack.c.b16 %v988, %v982
        %v1127 = vpack.c.b16 %v989, %v983
        %v1128 = vpack.c.b16 %v996, %v990
        %v1129 = vpack.c.b16 %v997, %v991
        %v1130 = vpack.c.b16 %v998, %v992
        %v1131 = vpack.c.b16 %v999, %v993
        %v1132 = vpack.c.b16 %v1000, %v994
        %v1133 = vpack.c.b16 %v1001, %v995
        %v1134 = vpack.c.b16 %v1008, %v1002
        %v1135 = vpack.c.b16 %v1009, %v1003
        %v1136 = vpack.c.b16 %v1010, %v1004
        %v1137 = vpack.c.b16 %v1011, %v1005
        %v1138 = vpack.c.b16 %v1012, %v1006
        %v1139 = vpack.c.b16 %v1013, %v1007
        %v1140 = vpack.c.b16 %v1020, %v1014
        %v1141 = vpack.c.b16 %v1021, %v1015
        %v1142 = vpack.c.b16 %v1022, %v1016
        %v1143 = vpack.c.b16 %v1023, %v1017
        %v1144 = vpack.c.b16 %v1024, %v1018
        %v1145 = vpack.c.b16 %v1025, %v1019
        %v1146 = vpack.c.b16 %v1032, %v1026
        %v1147 = vpack.c.b16 %v1033, %v1027
        %v1148 = vpack.c.b16 %v1034, %v1028
        %v1149 = vpack.c.b16 %v1035, %v1029
        %v1150 = vpack.c.b16 %v1036, %v1030
        %v1151 = vpack.c.b16 %v1037, %v1031
        %v1152 = vpack.c.b16 %v1044, %v1038
        %v1153 = vpack.c.b16 %v1045, %v1039
        %v1154 = vpack.c.b16 %v1046, %v1040
        %v1155 = vpack.c.b16 %v1047, %v1041
        %v1156 = vpack.c.b16 %v1048, %v1042
        %v1157 = vpack.c.b16 %v1049, %v1043
        %v1158 = vpack.c.b16 %v1056, %v1050
        %v1159 = vpack.c.b16 %v1057, %v1051
        %v1160 = vpack.c.b16 %v1058, %v1052
        %v1161 = vpack.c.b16 %v1059, %v1053
        %v1162 = vpack.c.b16 %v1060, %v1054
        %v1163 = vpack.c.b16 %v1061, %v1055
        %v1164 = vpack.c.b16 %v1068, %v1062
        %v1165 = vpack.c.b16 %v1069, %v1063
        %v1166 = vpack.c.b16 %v1070, %v1064
        %v1167 = vpack.c.b16 %v1071, %v1065
        %v1168 = vpack.c.b16 %v1072, %v1066
        %v1169 = vpack.c.b16 %v1073, %v1067
        %1266 = vmatprep.subr.bf16.mxu0 %v1075
        %1267 = vmatpush1.bf16.msra.mxu0 %v1074
        %1268 = vmatprep.subr.bf16.mxu0 %v1081
        %1269 = vmatpush1.bf16.msra.mxu0 %v1080
        %1270 = vmatprep.subr.bf16.mxu0 %v1087
        %1271 = vmatpush1.bf16.msra.mxu0 %v1086
        %1272 = vmatprep.subr.bf16.mxu0 %v1093
        %1273 = vmatpush1.bf16.msra.mxu0 %v1092
        %1274 = vmatprep.subr.bf16.mxu0 %v1099
        %1275 = vmatpush1.bf16.msra.mxu0 %v1098
        %1276 = vmatprep.subr.bf16.mxu0 %v1105
        %1277 = vmatpush1.bf16.msra.mxu0 %v1104
        %1278 = vmatprep.subr.bf16.mxu0 %v1111
        %1279 = vmatpush1.bf16.msra.mxu0 %v1110
        %1280 = vmatprep.subr.bf16.mxu0 %v1117
        %1281 = vmatpush1.bf16.msra.mxu0 %v1116
        %1282 = vmatprep.subr.bf16.mxu0 %v1123
        %1283 = vmatpush1.bf16.msra.mxu0 %v1122
        %1284 = vmatprep.subr.bf16.mxu0 %v1129
        %1285 = vmatpush1.bf16.msra.mxu0 %v1128
        %1286 = vmatprep.subr.bf16.mxu0 %v1135
        %1287 = vmatpush1.bf16.msra.mxu0 %v1134
        %1288 = vmatprep.subr.bf16.mxu0 %v1141
        %1289 = vmatpush1.bf16.msra.mxu0 %v1140
        %1290 = vmatprep.subr.bf16.mxu0 %v1147
        %1291 = vmatpush1.bf16.msra.mxu0 %v1146
        %1292 = vmatprep.subr.bf16.mxu0 %v1153
        %1293 = vmatpush1.bf16.msra.mxu0 %v1152
        %1294 = vmatprep.subr.bf16.mxu0 %v1159
        %1295 = vmatpush1.bf16.msra.mxu0 %v1158
        %1296 = vmatprep.subr.bf16.mxu0 %v1165
        %1297 = vmatpush1.bf16.msra.mxu0 %v1164
        %1298 = vmatprep.mubr.bf16.mxu0 %v689
        %1299 = vmatmul.mubr.bf16.gmra.mrb[0].mxu0 %v688
        %v1300 = vpop.f32.mrb[0].mxu0
        %v1301 = vadd.f32 0.0, %v1300
        %v1302 = vpop.f32.mrb[0].mxu0
        %v1303 = vadd.f32 0.0, %v1302
        %v1304 = vpop.f32.mrb[0].mxu0
        %v1305 = vadd.f32 0.0, %v1304
        %v1306 = vpop.f32.mrb[0].mxu0
        %v1307 = vadd.f32 0.0, %v1306
        %1308 = vdwg.mxu0
        %1309 = vmatprep.subr.bf16.mxu0 %v1077
        %1310 = vmatpush1.bf16.msra.mxu0 %v1076
        %1311 = vmatprep.subr.bf16.mxu0 %v1083
        %1312 = vmatpush1.bf16.msra.mxu0 %v1082
        %1313 = vmatprep.subr.bf16.mxu0 %v1089
        %1314 = vmatpush1.bf16.msra.mxu0 %v1088
        %1315 = vmatprep.subr.bf16.mxu0 %v1095
        %1316 = vmatpush1.bf16.msra.mxu0 %v1094
        %1317 = vmatprep.subr.bf16.mxu0 %v1101
        %1318 = vmatpush1.bf16.msra.mxu0 %v1100
        %1319 = vmatprep.subr.bf16.mxu0 %v1107
        %1320 = vmatpush1.bf16.msra.mxu0 %v1106
        %1321 = vmatprep.subr.bf16.mxu0 %v1113
        %1322 = vmatpush1.bf16.msra.mxu0 %v1112
        %1323 = vmatprep.subr.bf16.mxu0 %v1119
        %1324 = vmatpush1.bf16.msra.mxu0 %v1118
        %1325 = vmatprep.subr.bf16.mxu0 %v1125
        %1326 = vmatpush1.bf16.msra.mxu0 %v1124
        %1327 = vmatprep.subr.bf16.mxu0 %v1131
        %1328 = vmatpush1.bf16.msra.mxu0 %v1130
        %1329 = vmatprep.subr.bf16.mxu0 %v1137
        %1330 = vmatpush1.bf16.msra.mxu0 %v1136
        %1331 = vmatprep.subr.bf16.mxu0 %v1143
        %1332 = vmatpush1.bf16.msra.mxu0 %v1142
        %1333 = vmatprep.subr.bf16.mxu0 %v1149
        %1334 = vmatpush1.bf16.msra.mxu0 %v1148
        %1335 = vmatprep.subr.bf16.mxu0 %v1155
        %1336 = vmatpush1.bf16.msra.mxu0 %v1154
        %1337 = vmatprep.subr.bf16.mxu0 %v1161
        %1338 = vmatpush1.bf16.msra.mxu0 %v1160
        %1339 = vmatprep.subr.bf16.mxu0 %v1167
        %1340 = vmatpush1.bf16.msra.mxu0 %v1166
        %1341 = vmatprep.mubr.bf16.mxu0 %v689
        %1342 = vmatmul.mubr.bf16.gmra.mrb[0].mxu0 %v688
        %v1343 = vpop.f32.mrb[0].mxu0
        %v1344 = vadd.f32 0.0, %v1343
        %v1345 = vpop.f32.mrb[0].mxu0
        %v1346 = vadd.f32 0.0, %v1345
        %v1347 = vpop.f32.mrb[0].mxu0
        %v1348 = vadd.f32 0.0, %v1347
        %v1349 = vpop.f32.mrb[0].mxu0
        %v1350 = vadd.f32 0.0, %v1349
        %1351 = vdwg.mxu0
        %1352 = vmatprep.subr.bf16.mxu0 %v1079
        %1353 = vmatpush1.bf16.msra.mxu0 %v1078
        %1354 = vmatprep.subr.bf16.mxu0 %v1085
        %1355 = vmatpush1.bf16.msra.mxu0 %v1084
        %1356 = vmatprep.subr.bf16.mxu0 %v1091
        %1357 = vmatpush1.bf16.msra.mxu0 %v1090
        %1358 = vmatprep.subr.bf16.mxu0 %v1097
        %1359 = vmatpush1.bf16.msra.mxu0 %v1096
        %1360 = vmatprep.subr.bf16.mxu0 %v1103
        %1361 = vmatpush1.bf16.msra.mxu0 %v1102
        %1362 = vmatprep.subr.bf16.mxu0 %v1109
        %1363 = vmatpush1.bf16.msra.mxu0 %v1108
        %1364 = vmatprep.subr.bf16.mxu0 %v1115
        %1365 = vmatpush1.bf16.msra.mxu0 %v1114
        %1366 = vmatprep.subr.bf16.mxu0 %v1121
        %1367 = vmatpush1.bf16.msra.mxu0 %v1120
        %1368 = vmatprep.subr.bf16.mxu0 %v1127
        %1369 = vmatpush1.bf16.msra.mxu0 %v1126
        %1370 = vmatprep.subr.bf16.mxu0 %v1133
        %1371 = vmatpush1.bf16.msra.mxu0 %v1132
        %1372 = vmatprep.subr.bf16.mxu0 %v1139
        %1373 = vmatpush1.bf16.msra.mxu0 %v1138
        %1374 = vmatprep.subr.bf16.mxu0 %v1145
        %1375 = vmatpush1.bf16.msra.mxu0 %v1144
        %1376 = vmatprep.subr.bf16.mxu0 %v1151
        %1377 = vmatpush1.bf16.msra.mxu0 %v1150
        %1378 = vmatprep.subr.bf16.mxu0 %v1157
        %1379 = vmatpush1.bf16.msra.mxu0 %v1156
        %1380 = vmatprep.subr.bf16.mxu0 %v1163
        %1381 = vmatpush1.bf16.msra.mxu0 %v1162
        %1382 = vmatprep.subr.bf16.mxu0 %v1169
        %1383 = vmatpush1.bf16.msra.mxu0 %v1168
        %1384 = vmatprep.mubr.bf16.mxu0 %v689
        %1385 = vmatmul.mubr.bf16.gmra.mrb[0].mxu0 %v688
        %v1386 = vpop.f32.mrb[0].mxu0
        %v1387 = vadd.f32 0.0, %v1386
        %v1388 = vpop.f32.mrb[0].mxu0
        %v1389 = vadd.f32 0.0, %v1388
        %v1390 = vpop.f32.mrb[0].mxu0
        %v1391 = vadd.f32 0.0, %v1390
        %v1392 = vpop.f32.mrb[0].mxu0
        %v1393 = vadd.f32 0.0, %v1392
        %1394 = vdwg.mxu0
        %v1395 = vld [vmem:[#allocation8] sm:$0xff]
        %v1396 = vld [vmem:[#allocation8 + $0x8] sm:$0xff]
        %v1397 = vld [vmem:[#allocation8 + $0x10] sm:$0xff]
        %v1398 = vld [vmem:[#allocation8 + $0x18] sm:$0xff]
        %v1399 = vld [vmem:[#allocation8 + $0x20] sm:$0xff]
        %v1400 = vld [vmem:[#allocation8 + $0x28] sm:$0xff]
        %v1401 = vld [vmem:[#allocation8 + $0x30] sm:$0xff]
        %v1402 = vld [vmem:[#allocation8 + $0x38] sm:$0xff]
        %v1403 = vld [vmem:[#allocation8 + $0x40] sm:$0xff]
        %v1404 = vld [vmem:[#allocation8 + $0x48] sm:$0xff]
        %v1405 = vld [vmem:[#allocation8 + $0x50] sm:$0xff]
        %v1406 = vld [vmem:[#allocation8 + $0x58] sm:$0xff]
        %v1407 = vld [vmem:[#allocation8 + $0x60] sm:$0xff]
        %v1408 = vld [vmem:[#allocation8 + $0x68] sm:$0xff]
        %v1409 = vld [vmem:[#allocation8 + $0x70] sm:$0xff]
        %v1410 = vld [vmem:[#allocation8 + $0x78] sm:$0xff]
        %v1411 = vld [vmem:[#allocation8 + $0x80] sm:$0xff]
        %v1412 = vld [vmem:[#allocation8 + $0x88] sm:$0xff]
        %v1413 = vld [vmem:[#allocation8 + $0x90] sm:$0xff]
        %v1414 = vld [vmem:[#allocation8 + $0x98] sm:$0xff]
        %v1415 = vld [vmem:[#allocation8 + $0xa0] sm:$0xff]
        %v1416 = vld [vmem:[#allocation8 + $0xa8] sm:$0xff]
        %v1417 = vld [vmem:[#allocation8 + $0xb0] sm:$0xff]
        %v1418 = vld [vmem:[#allocation8 + $0xb8] sm:$0xff]
        %v1419 = vld [vmem:[#allocation8 + $0xc0] sm:$0xff]
        %v1420 = vld [vmem:[#allocation8 + $0xc8] sm:$0xff]
        %v1421 = vld [vmem:[#allocation8 + $0xd0] sm:$0xff]
        %v1422 = vld [vmem:[#allocation8 + $0xd8] sm:$0xff]
        %v1423 = vld [vmem:[#allocation8 + $0xe0] sm:$0xff]
        %v1424 = vld [vmem:[#allocation8 + $0xe8] sm:$0xff]
        %v1425 = vld [vmem:[#allocation8 + $0xf0] sm:$0xff]
        %v1426 = vld [vmem:[#allocation8 + $0xf8] sm:$0xff]
        %v1427 = vld [vmem:[%s12] sm:$0xff]
        %v1428 = vld [vmem:[%s12 + $0x8] sm:$0xff]
        %v1429 = vld [vmem:[%s12 + $0x10] sm:$0xff]
        %v1430 = vld [vmem:[%s12 + $0x18] sm:$0xff]
        %v1431 = vpack.c.bf16 %v1305, %v1301
        %v1432 = vpack.c.bf16 %v1307, %v1303
        %v1433 = vpack.c.bf16 %v1348, %v1344
        %v1434 = vpack.c.bf16 %v1350, %v1346
        %v1435 = vpack.c.bf16 %v1391, %v1387
        %v1436 = vpack.c.bf16 %v1393, %v1389
        %1437 = vmatprep.subr.bf16.mxu0 0
        %1438 = vmatpush1.bf16.xpose.msra.mxu0 %v1433
        %1439 = vmatprep.subr.bf16.mxu0 0
        %1440 = vmatpush1.bf16.xpose.msra.mxu0 0
        %1441 = vmatprep.subr.bf16.mxu0 0
        %1442 = vmatpush1.bf16.xpose.msra.mxu0 0
        %1443 = vmatprep.subr.bf16.mxu0 0
        %1444 = vmatpush1.bf16.xpose.msra.mxu0 0
        %1445 = vmatprep.subr.bf16.mxu0 0
        %1446 = vmatpush1.bf16.xpose.msra.mxu0 0
        %1447 = vmatprep.subr.bf16.mxu0 0
        %1448 = vmatpush1.bf16.xpose.msra.mxu0 0
        %1449 = vmatprep.subr.bf16.mxu0 0
        %1450 = vmatpush1.bf16.xpose.msra.mxu0 0
        %1451 = vmatprep.subr.bf16.mxu0 0
        %1452 = vmatpush1.bf16.xpose.msra.mxu0 0
        %1453 = vmatprep.subr.bf16.mxu0 0
        %1454 = vmatpush1.bf16.xpose.msra.mxu0 0
        %1455 = vmatprep.subr.bf16.mxu0 0
        %1456 = vmatpush1.bf16.xpose.msra.mxu0 0
        %1457 = vmatprep.subr.bf16.mxu0 0
        %1458 = vmatpush1.bf16.xpose.msra.mxu0 0
        %1459 = vmatprep.subr.bf16.mxu0 0
        %1460 = vmatpush1.bf16.xpose.msra.mxu0 0
        %1461 = vmatprep.subr.bf16.mxu0 0
        %1462 = vmatpush1.bf16.xpose.msra.mxu0 0
        %1463 = vmatprep.subr.bf16.mxu0 0
        %1464 = vmatpush1.bf16.xpose.msra.mxu0 0
        %1465 = vmatprep.subr.bf16.mxu0 0
        %1466 = vmatpush1.bf16.xpose.msra.mxu0 0
        %1467 = vmatprep.subr.bf16.mxu0 0
        %1468 = vmatpush1.bf16.xpose.msra.mxu0 0
        %1469 = vmatprep.mubr.bf16.mxu0 0
        %1470 = vmatmul.mubr.bf16.gmra.mrb[0].mxu0 %v1431
        %v1471 = vpop.f32.mrb[0].mxu0
        %v1472 = vadd.f32 %v1427, %v1471
        %v1473 = vpop.f32.mrb[0].mxu0
        %v1474 = vpop.f32.mrb[0].mxu0
        %v1475 = vadd.f32 %v1428, %v1474
        %v1476 = vpop.f32.mrb[0].mxu0
        %1477 = vdwg.mxu0
        %1478 = vmatprep.subr.bf16.mxu0 0
        %1479 = vmatpush1.bf16.xpose.msra.mxu0 %v1434
        %1480 = vmatprep.subr.bf16.mxu0 0
        %1481 = vmatpush1.bf16.xpose.msra.mxu0 0
        %1482 = vmatprep.subr.bf16.mxu0 0
        %1483 = vmatpush1.bf16.xpose.msra.mxu0 0
        %1484 = vmatprep.subr.bf16.mxu0 0
        %1485 = vmatpush1.bf16.xpose.msra.mxu0 0
        %1486 = vmatprep.subr.bf16.mxu0 0
        %1487 = vmatpush1.bf16.xpose.msra.mxu0 0
        %1488 = vmatprep.subr.bf16.mxu0 0
        %1489 = vmatpush1.bf16.xpose.msra.mxu0 0
        %1490 = vmatprep.subr.bf16.mxu0 0
        %1491 = vmatpush1.bf16.xpose.msra.mxu0 0
        %1492 = vmatprep.subr.bf16.mxu0 0
        %1493 = vmatpush1.bf16.xpose.msra.mxu0 0
        %1494 = vmatprep.subr.bf16.mxu0 0
        %1495 = vmatpush1.bf16.xpose.msra.mxu0 0
        %1496 = vmatprep.subr.bf16.mxu0 0
        %1497 = vmatpush1.bf16.xpose.msra.mxu0 0
        %1498 = vmatprep.subr.bf16.mxu0 0
        %1499 = vmatpush1.bf16.xpose.msra.mxu0 0
        %1500 = vmatprep.subr.bf16.mxu0 0
        %1501 = vmatpush1.bf16.xpose.msra.mxu0 0
        %1502 = vmatprep.subr.bf16.mxu0 0
        %1503 = vmatpush1.bf16.xpose.msra.mxu0 0
        %1504 = vmatprep.subr.bf16.mxu0 0
        %1505 = vmatpush1.bf16.xpose.msra.mxu0 0
        %1506 = vmatprep.subr.bf16.mxu0 0
        %1507 = vmatpush1.bf16.xpose.msra.mxu0 0
        %1508 = vmatprep.subr.bf16.mxu0 0
        %1509 = vmatpush1.bf16.xpose.msra.mxu0 0
        %1510 = vmatprep.mubr.bf16.mxu0 0
        %1511 = vmatmul.mubr.bf16.gmra.mrb[0].mxu0 %v1432
        %v1512 = vpop.f32.mrb[0].mxu0
        %v1513 = vadd.f32 %v1429, %v1512
        %v1514 = vpop.f32.mrb[0].mxu0
        %v1515 = vpop.f32.mrb[0].mxu0
        %v1516 = vadd.f32 %v1430, %v1515
        %v1517 = vpop.f32.mrb[0].mxu0
        %1518 = vdwg.mxu0
        %vm1519 = vcmask 130048
        %v1520 = vsel %vm1519, %v1472, -inf
        %1521 = vmax.xlane.f32.xlu0 %v1520
        %v1522 = vpop.xlane.xlu0 %1521
        %v1523 = vsel %vm1519, %v1475, -inf
        %1524 = vmax.xlane.f32.xlu0 %v1523
        %v1525 = vpop.xlane.xlu0 %1524
        %v1526 = vsel %vm1519, %v1513, -inf
        %1527 = vmax.xlane.f32.xlu0 %v1526
        %v1528 = vpop.xlane.xlu0 %1527
        %v1529 = vsel %vm1519, %v1516, -inf
        %1530 = vmax.xlane.f32.xlu0 %v1529
        %v1531 = vpop.xlane.xlu0 %1530
        %v1532 = vsub.f32 %v1472, %v1522
        %v1533 = vsub.f32 %v1475, %v1525
        %v1534 = vsub.f32 %v1513, %v1528
        %v1535 = vsub.f32 %v1516, %v1531
        %v1536 = vmul.f32 %v1532, 1.442695
        %v1537 = vpow.pop %v1536
        %v1538 = vmul.f32 %v1533, 1.442695
        %v1539 = vpow.pop %v1538
        %v1540 = vmul.f32 %v1534, 1.442695
        %v1541 = vpow.pop %v1540
        %v1542 = vmul.f32 %v1535, 1.442695
        %v1543 = vpow.pop %v1542
        %v1544 = vsel %vm1519, %v1537, 0.0
        %1545 = vadd.xlane.f32.xlu0 %v1544
        %v1546 = vpop.xlane.xlu0 %1545
        %v1547 = vsel %vm1519, %v1539, 0.0
        %1548 = vadd.xlane.f32.xlu0 %v1547
        %v1549 = vpop.xlane.xlu0 %1548
        %v1550 = vsel %vm1519, %v1541, 0.0
        %1551 = vadd.xlane.f32.xlu0 %v1550
        %v1552 = vpop.xlane.xlu0 %1551
        %v1553 = vsel %vm1519, %v1543, 0.0
        %1554 = vadd.xlane.f32.xlu0 %v1553
        %v1555 = vpop.xlane.xlu0 %1554
        %v1556 = vrcp.pop %v1546
        %v1557 = vrcp.pop %v1549
        %v1558 = vrcp.pop %v1552
        %v1559 = vrcp.pop %v1555
        %v1560 = vmul.f32 %v1537, %v1556
        %v1561 = vmul.f32 %v1539, %v1557
        %v1562 = vmul.f32 %v1541, %v1558
        %v1563 = vmul.f32 %v1543, %v1559
        %v1564 = vpack.c.bf16 %v1561, %v1560
        %v1565 = vpack.c.bf16 %v1563, %v1562
        %v1567 = vsel %vm1519, %v1564, 0
        %1569 = vmatprep.subr.bf16.mxu0 0
        %1570 = vmatpush1.bf16.msra.mxu0 %v1435
        %1571 = vmatprep.subr.bf16.mxu0 0
        %1572 = vmatpush1.bf16.msra.mxu0 0
        %1573 = vmatprep.subr.bf16.mxu0 0
        %1574 = vmatpush1.bf16.msra.mxu0 0
        %1575 = vmatprep.subr.bf16.mxu0 0
        %1576 = vmatpush1.bf16.msra.mxu0 0
        %1577 = vmatprep.subr.bf16.mxu0 0
        %1578 = vmatpush1.bf16.msra.mxu0 0
        %1579 = vmatprep.subr.bf16.mxu0 0
        %1580 = vmatpush1.bf16.msra.mxu0 0
        %1581 = vmatprep.subr.bf16.mxu0 0
        %1582 = vmatpush1.bf16.msra.mxu0 0
        %1583 = vmatprep.subr.bf16.mxu0 0
        %1584 = vmatpush1.bf16.msra.mxu0 0
        %1585 = vmatprep.subr.bf16.mxu0 0
        %1586 = vmatpush1.bf16.msra.mxu0 0
        %1587 = vmatprep.subr.bf16.mxu0 0
        %1588 = vmatpush1.bf16.msra.mxu0 0
        %1589 = vmatprep.subr.bf16.mxu0 0
        %1590 = vmatpush1.bf16.msra.mxu0 0
        %1591 = vmatprep.subr.bf16.mxu0 0
        %1592 = vmatpush1.bf16.msra.mxu0 0
        %1593 = vmatprep.subr.bf16.mxu0 0
        %1594 = vmatpush1.bf16.msra.mxu0 0
        %1595 = vmatprep.subr.bf16.mxu0 0
        %1596 = vmatpush1.bf16.msra.mxu0 0
        %1597 = vmatprep.subr.bf16.mxu0 0
        %1598 = vmatpush1.bf16.msra.mxu0 0
        %1599 = vmatprep.subr.bf16.mxu0 0
        %1600 = vmatpush1.bf16.msra.mxu0 0
        %1601 = vmatprep.mubr.bf16.mxu0 0
        %1602 = vmatmul.mubr.bf16.gmra.mrb[0].mxu0 %v1567
        %v1603 = vpop.f32.mrb[0].mxu0
        %v1604 = vadd.f32 0.0, %v1603
        %v1605 = vpop.f32.mrb[0].mxu0
        %v1606 = vpop.f32.mrb[0].mxu0
        %v1607 = vadd.f32 0.0, %v1606
        %v1608 = vpop.f32.mrb[0].mxu0
        %1609 = vdwg.mxu0
        %v1611 = vsel %vm1519, %v1565, 0
        %1613 = vmatprep.subr.bf16.mxu0 0
        %1614 = vmatpush1.bf16.msra.mxu0 %v1436
        %1615 = vmatprep.subr.bf16.mxu0 0
        %1616 = vmatpush1.bf16.msra.mxu0 0
        %1617 = vmatprep.subr.bf16.mxu0 0
        %1618 = vmatpush1.bf16.msra.mxu0 0
        %1619 = vmatprep.subr.bf16.mxu0 0
        %1620 = vmatpush1.bf16.msra.mxu0 0
        %1621 = vmatprep.subr.bf16.mxu0 0
        %1622 = vmatpush1.bf16.msra.mxu0 0
        %1623 = vmatprep.subr.bf16.mxu0 0
        %1624 = vmatpush1.bf16.msra.mxu0 0
        %1625 = vmatprep.subr.bf16.mxu0 0
        %1626 = vmatpush1.bf16.msra.mxu0 0
        %1627 = vmatprep.subr.bf16.mxu0 0
        %1628 = vmatpush1.bf16.msra.mxu0 0
        %1629 = vmatprep.subr.bf16.mxu0 0
        %1630 = vmatpush1.bf16.msra.mxu0 0
        %1631 = vmatprep.subr.bf16.mxu0 0
        %1632 = vmatpush1.bf16.msra.mxu0 0
        %1633 = vmatprep.subr.bf16.mxu0 0
        %1634 = vmatpush1.bf16.msra.mxu0 0
        %1635 = vmatprep.subr.bf16.mxu0 0
        %1636 = vmatpush1.bf16.msra.mxu0 0
        %1637 = vmatprep.subr.bf16.mxu0 0
        %1638 = vmatpush1.bf16.msra.mxu0 0
        %1639 = vmatprep.subr.bf16.mxu0 0
        %1640 = vmatpush1.bf16.msra.mxu0 0
        %1641 = vmatprep.subr.bf16.mxu0 0
        %1642 = vmatpush1.bf16.msra.mxu0 0
        %1643 = vmatprep.subr.bf16.mxu0 0
        %1644 = vmatpush1.bf16.msra.mxu0 0
        %1645 = vmatprep.mubr.bf16.mxu0 0
        %1646 = vmatmul.mubr.bf16.gmra.mrb[0].mxu0 %v1611
        %v1647 = vpop.f32.mrb[0].mxu0
        %v1648 = vadd.f32 0.0, %v1647
        %v1649 = vpop.f32.mrb[0].mxu0
        %v1650 = vpop.f32.mrb[0].mxu0
        %v1651 = vadd.f32 0.0, %v1650
        %v1652 = vpop.f32.mrb[0].mxu0
        %1653 = vdwg.mxu0
        %v1654 = vpack.c.bf16 %v1607, %v1604
        %v1655 = vpack.c.bf16 %v1651, %v1648
        %v1688 = vunpack.c.l.b16 %v1395
        %v1689 = vunpack.c.h.b16 %v1395
        %v1690 = vunpack.c.l.b16 %v1396
        %v1691 = vunpack.c.h.b16 %v1396
        %v1692 = vunpack.c.l.b16 %v1397
        %v1693 = vunpack.c.h.b16 %v1397
        %v1694 = vunpack.c.l.b16 %v1398
        %v1695 = vunpack.c.h.b16 %v1398
        %v1696 = vunpack.c.l.b16 %v1399
        %v1697 = vunpack.c.h.b16 %v1399
        %v1698 = vunpack.c.l.b16 %v1400
        %v1699 = vunpack.c.h.b16 %v1400
        %v1700 = vunpack.c.l.b16 %v1401
        %v1701 = vunpack.c.h.b16 %v1401
        %v1702 = vunpack.c.l.b16 %v1402
        %v1703 = vunpack.c.h.b16 %v1402
        %v1704 = vunpack.c.l.b16 %v1403
        %v1705 = vunpack.c.h.b16 %v1403
        %v1706 = vunpack.c.l.b16 %v1404
        %v1707 = vunpack.c.h.b16 %v1404
        %v1708 = vunpack.c.l.b16 %v1405
        %v1709 = vunpack.c.h.b16 %v1405
        %v1710 = vunpack.c.l.b16 %v1406
        %v1711 = vunpack.c.h.b16 %v1406
        %v1712 = vunpack.c.l.b16 %v1407
        %v1713 = vunpack.c.h.b16 %v1407
        %v1714 = vunpack.c.l.b16 %v1408
        %v1715 = vunpack.c.h.b16 %v1408
        %v1716 = vunpack.c.l.b16 %v1409
        %v1717 = vunpack.c.h.b16 %v1409
        %v1718 = vunpack.c.l.b16 %v1410
        %v1719 = vunpack.c.h.b16 %v1410
        %v1720 = vunpack.c.l.b16 %v1411
        %v1721 = vunpack.c.h.b16 %v1411
        %v1722 = vunpack.c.l.b16 %v1412
        %v1723 = vunpack.c.h.b16 %v1412
        %v1724 = vunpack.c.l.b16 %v1413
        %v1725 = vunpack.c.h.b16 %v1413
        %v1726 = vunpack.c.l.b16 %v1414
        %v1727 = vunpack.c.h.b16 %v1414
        %v1728 = vunpack.c.l.b16 %v1415
        %v1729 = vunpack.c.h.b16 %v1415
        %v1730 = vunpack.c.l.b16 %v1416
        %v1731 = vunpack.c.h.b16 %v1416
        %v1732 = vunpack.c.l.b16 %v1417
        %v1733 = vunpack.c.h.b16 %v1417
        %v1734 = vunpack.c.l.b16 %v1418
        %v1735 = vunpack.c.h.b16 %v1418
        %v1736 = vunpack.c.l.b16 %v1419
        %v1737 = vunpack.c.h.b16 %v1419
        %v1738 = vunpack.c.l.b16 %v1420
        %v1739 = vunpack.c.h.b16 %v1420
        %v1740 = vunpack.c.l.b16 %v1421
        %v1741 = vunpack.c.h.b16 %v1421
        %v1742 = vunpack.c.l.b16 %v1422
        %v1743 = vunpack.c.h.b16 %v1422
        %v1744 = vunpack.c.l.b16 %v1423
        %v1745 = vunpack.c.h.b16 %v1423
        %v1746 = vunpack.c.l.b16 %v1424
        %v1747 = vunpack.c.h.b16 %v1424
        %v1748 = vunpack.c.l.b16 %v1425
        %v1749 = vunpack.c.h.b16 %v1425
        %v1750 = vunpack.c.l.b16 %v1426
        %v1751 = vunpack.c.h.b16 %v1426
        %v1752 = vpack.c.b16 %v1690, %v1688
        %v1753 = vpack.c.b16 %v1691, %v1689
        %v1754 = vpack.c.b16 %v1694, %v1692
        %v1755 = vpack.c.b16 %v1695, %v1693
        %v1756 = vpack.c.b16 %v1698, %v1696
        %v1757 = vpack.c.b16 %v1699, %v1697
        %v1758 = vpack.c.b16 %v1702, %v1700
        %v1759 = vpack.c.b16 %v1703, %v1701
        %v1760 = vpack.c.b16 %v1706, %v1704
        %v1761 = vpack.c.b16 %v1707, %v1705
        %v1762 = vpack.c.b16 %v1710, %v1708
        %v1763 = vpack.c.b16 %v1711, %v1709
        %v1764 = vpack.c.b16 %v1714, %v1712
        %v1765 = vpack.c.b16 %v1715, %v1713
        %v1766 = vpack.c.b16 %v1718, %v1716
        %v1767 = vpack.c.b16 %v1719, %v1717
        %v1768 = vpack.c.b16 %v1722, %v1720
        %v1769 = vpack.c.b16 %v1723, %v1721
        %v1770 = vpack.c.b16 %v1726, %v1724
        %v1771 = vpack.c.b16 %v1727, %v1725
        %v1772 = vpack.c.b16 %v1730, %v1728
        %v1773 = vpack.c.b16 %v1731, %v1729
        %v1774 = vpack.c.b16 %v1734, %v1732
        %v1775 = vpack.c.b16 %v1735, %v1733
        %v1776 = vpack.c.b16 %v1738, %v1736
        %v1777 = vpack.c.b16 %v1739, %v1737
        %v1778 = vpack.c.b16 %v1742, %v1740
        %v1779 = vpack.c.b16 %v1743, %v1741
        %v1780 = vpack.c.b16 %v1746, %v1744
        %v1781 = vpack.c.b16 %v1747, %v1745
        %v1782 = vpack.c.b16 %v1750, %v1748
        %v1783 = vpack.c.b16 %v1751, %v1749
        %1816 = vmatprep.subr.bf16.mxu0 %v1753
        %1817 = vmatpush1.bf16.msra.mxu0 %v1752
        %1818 = vmatprep.subr.bf16.mxu0 %v1755
        %1819 = vmatpush1.bf16.msra.mxu0 %v1754
        %1820 = vmatprep.subr.bf16.mxu0 %v1757
        %1821 = vmatpush1.bf16.msra.mxu0 %v1756
        %1822 = vmatprep.subr.bf16.mxu0 %v1759
        %1823 = vmatpush1.bf16.msra.mxu0 %v1758
        %1824 = vmatprep.subr.bf16.mxu0 %v1761
        %1825 = vmatpush1.bf16.msra.mxu0 %v1760
        %1826 = vmatprep.subr.bf16.mxu0 %v1763
        %1827 = vmatpush1.bf16.msra.mxu0 %v1762
        %1828 = vmatprep.subr.bf16.mxu0 %v1765
        %1829 = vmatpush1.bf16.msra.mxu0 %v1764
        %1830 = vmatprep.subr.bf16.mxu0 %v1767
        %1831 = vmatpush1.bf16.msra.mxu0 %v1766
        %1832 = vmatprep.subr.bf16.mxu0 %v1769
        %1833 = vmatpush1.bf16.msra.mxu0 %v1768
        %1834 = vmatprep.subr.bf16.mxu0 %v1771
        %1835 = vmatpush1.bf16.msra.mxu0 %v1770
        %1836 = vmatprep.subr.bf16.mxu0 %v1773
        %1837 = vmatpush1.bf16.msra.mxu0 %v1772
        %1838 = vmatprep.subr.bf16.mxu0 %v1775
        %1839 = vmatpush1.bf16.msra.mxu0 %v1774
        %1840 = vmatprep.subr.bf16.mxu0 %v1777
        %1841 = vmatpush1.bf16.msra.mxu0 %v1776
        %1842 = vmatprep.subr.bf16.mxu0 %v1779
        %1843 = vmatpush1.bf16.msra.mxu0 %v1778
        %1844 = vmatprep.subr.bf16.mxu0 %v1781
        %1845 = vmatpush1.bf16.msra.mxu0 %v1780
        %1846 = vmatprep.subr.bf16.mxu0 %v1783
        %1847 = vmatpush1.bf16.msra.mxu0 %v1782
        %1848 = vmatprep.mubr.bf16.mxu0 %v1655
        %1849 = vmatmul.mubr.bf16.gmra.mrb[0].mxu0 %v1654
        %v1850 = vpop.f32.mrb[0].mxu0
        %v1851 = vadd.f32 0.0, %v1850
        %v1852 = vpop.f32.mrb[0].mxu0
        %v1853 = vadd.f32 0.0, %v1852
        %v1854 = vpop.f32.mrb[0].mxu0
        %v1855 = vadd.f32 0.0, %v1854
        %v1856 = vpop.f32.mrb[0].mxu0
        %v1857 = vadd.f32 0.0, %v1856
        %1858 = vdwg.mxu0
        %v1859 = vadd.f32 %v643, %v1851
        %v1860 = vadd.f32 %v644, %v1853
        %v1861 = vadd.f32 %v645, %v1855
        %v1862 = vadd.f32 %v646, %v1857
        %v1863 = vld [vmem:[%s3] sm:$0x3]
        %v1864 = vmul.f32 %v1859, %v1859
        %v1865 = vmul.f32 %v1860, %v1860
        %v1866 = vmul.f32 %v1861, %v1861
        %v1867 = vmul.f32 %v1862, %v1862
        %v1868 = vadd.f32 %v1864, %v1865
        %1869 = vadd.xlane.f32.xlu0 %v1868
        %v1870 = vpop.xlane.xlu0 %1869
        %v1871 = vadd.f32 %v1866, %v1867
        %1872 = vadd.xlane.f32.xlu0 %v1871
        %v1873 = vpop.xlane.xlu0 %1872
        %v1874 = vmul.f32 %v1870, %v662
        %v1875 = vmul.f32 %v1873, %v662
        %v1876 = vadd.f32 %v1874, 1e-06
        %v1877 = vadd.f32 %v1875, 1e-06
        %v1878 = vrsqrt.pop %v1876
        %v1879 = vrsqrt.pop %v1877
        %v1880 = vmul.f32 %v1859, %v1878
        %v1881 = vmul.f32 %v1860, %v1878
        %v1882 = vmul.f32 %v1861, %v1879
        %v1883 = vmul.f32 %v1862, %v1879
        %v1885 = vlaneseq
        %v1886 = vshrl.u32 %v1885, 7
        %v1887 = vsub.s32 0, %v1886
        %v1888 = vrot.slane %v1863, %v1887
        %v1889 = vlaneseq
        %v1890 = vshrl.u32 %v1889, 7
        %v1891 = vsub.s32 1, %v1890
        %v1892 = vrot.slane %v1863, %v1891
        %v1895 = vmul.f32 %v1888, %v1880
        %v1896 = vmul.f32 %v1892, %v1881
        %v1897 = vmul.f32 %v1888, %v1882
        %v1898 = vmul.f32 %v1892, %v1883
        %v1899 = vpack.c.bf16 %v1897, %v1895
        %v1900 = vpack.c.bf16 %v1898, %v1896
        %v1901 = vpack.c.bf16 %v649, %v647
        %v1902 = vpack.c.bf16 %v650, %v648
        %v1903 = vld [vmem:[#allocation10] sm:$0xff]
        %v1904 = vld [vmem:[#allocation10 + $0x8] sm:$0xff]
        %v1905 = vld [vmem:[#allocation10 + $0x10] sm:$0xff]
        %v1906 = vld [vmem:[#allocation10 + $0x18] sm:$0xff]
        %v1907 = vld [vmem:[#allocation10 + $0x20] sm:$0xff]
        %v1908 = vld [vmem:[#allocation10 + $0x28] sm:$0xff]
        %v1909 = vld [vmem:[#allocation10 + $0x30] sm:$0xff]
        %v1910 = vld [vmem:[#allocation10 + $0x38] sm:$0xff]
        %v1911 = vld [vmem:[#allocation10 + $0x40] sm:$0xff]
        %v1912 = vld [vmem:[#allocation10 + $0x48] sm:$0xff]
        %v1913 = vld [vmem:[#allocation10 + $0x50] sm:$0xff]
        %v1914 = vld [vmem:[#allocation10 + $0x58] sm:$0xff]
        %v1915 = vld [vmem:[#allocation10 + $0x60] sm:$0xff]
        %v1916 = vld [vmem:[#allocation10 + $0x68] sm:$0xff]
        %v1917 = vld [vmem:[#allocation10 + $0x70] sm:$0xff]
        %v1918 = vld [vmem:[#allocation10 + $0x78] sm:$0xff]
        %v1919 = vld [vmem:[#allocation10 + $0x80] sm:$0xff]
        %v1920 = vld [vmem:[#allocation10 + $0x88] sm:$0xff]
        %v1921 = vld [vmem:[#allocation10 + $0x90] sm:$0xff]
        %v1922 = vld [vmem:[#allocation10 + $0x98] sm:$0xff]
        %v1923 = vld [vmem:[#allocation10 + $0xa0] sm:$0xff]
        %v1924 = vld [vmem:[#allocation10 + $0xa8] sm:$0xff]
        %v1925 = vld [vmem:[#allocation10 + $0xb0] sm:$0xff]
        %v1926 = vld [vmem:[#allocation10 + $0xb8] sm:$0xff]
        %v1927 = vld [vmem:[#allocation10 + $0xc0] sm:$0xff]
        %v1928 = vld [vmem:[#allocation10 + $0xc8] sm:$0xff]
        %v1929 = vld [vmem:[#allocation10 + $0xd0] sm:$0xff]
        %v1930 = vld [vmem:[#allocation10 + $0xd8] sm:$0xff]
        %v1931 = vld [vmem:[#allocation10 + $0xe0] sm:$0xff]
        %v1932 = vld [vmem:[#allocation10 + $0xe8] sm:$0xff]
        %v1933 = vld [vmem:[#allocation10 + $0xf0] sm:$0xff]
        %v1934 = vld [vmem:[#allocation10 + $0xf8] sm:$0xff]
        %v1967 = vunpack.c.l.b16 %v1903
        %v1968 = vunpack.c.h.b16 %v1903
        %v1969 = vunpack.c.l.b16 %v1904
        %v1970 = vunpack.c.h.b16 %v1904
        %v1971 = vunpack.c.l.b16 %v1905
        %v1972 = vunpack.c.h.b16 %v1905
        %v1973 = vunpack.c.l.b16 %v1906
        %v1974 = vunpack.c.h.b16 %v1906
        %v1975 = vunpack.c.l.b16 %v1907
        %v1976 = vunpack.c.h.b16 %v1907
        %v1977 = vunpack.c.l.b16 %v1908
        %v1978 = vunpack.c.h.b16 %v1908
        %v1979 = vunpack.c.l.b16 %v1909
        %v1980 = vunpack.c.h.b16 %v1909
        %v1981 = vunpack.c.l.b16 %v1910
        %v1982 = vunpack.c.h.b16 %v1910
        %v1983 = vunpack.c.l.b16 %v1911
        %v1984 = vunpack.c.h.b16 %v1911
        %v1985 = vunpack.c.l.b16 %v1912
        %v1986 = vunpack.c.h.b16 %v1912
        %v1987 = vunpack.c.l.b16 %v1913
        %v1988 = vunpack.c.h.b16 %v1913
        %v1989 = vunpack.c.l.b16 %v1914
        %v1990 = vunpack.c.h.b16 %v1914
        %v1991 = vunpack.c.l.b16 %v1915
        %v1992 = vunpack.c.h.b16 %v1915
        %v1993 = vunpack.c.l.b16 %v1916
        %v1994 = vunpack.c.h.b16 %v1916
        %v1995 = vunpack.c.l.b16 %v1917
        %v1996 = vunpack.c.h.b16 %v1917
        %v1997 = vunpack.c.l.b16 %v1918
        %v1998 = vunpack.c.h.b16 %v1918
        %v1999 = vunpack.c.l.b16 %v1919
        %v2000 = vunpack.c.h.b16 %v1919
        %v2001 = vunpack.c.l.b16 %v1920
        %v2002 = vunpack.c.h.b16 %v1920
        %v2003 = vunpack.c.l.b16 %v1921
        %v2004 = vunpack.c.h.b16 %v1921
        %v2005 = vunpack.c.l.b16 %v1922
        %v2006 = vunpack.c.h.b16 %v1922
        %v2007 = vunpack.c.l.b16 %v1923
        %v2008 = vunpack.c.h.b16 %v1923
        %v2009 = vunpack.c.l.b16 %v1924
        %v2010 = vunpack.c.h.b16 %v1924
        %v2011 = vunpack.c.l.b16 %v1925
        %v2012 = vunpack.c.h.b16 %v1925
        %v2013 = vunpack.c.l.b16 %v1926
        %v2014 = vunpack.c.h.b16 %v1926
        %v2015 = vunpack.c.l.b16 %v1927
        %v2016 = vunpack.c.h.b16 %v1927
        %v2017 = vunpack.c.l.b16 %v1928
        %v2018 = vunpack.c.h.b16 %v1928
        %v2019 = vunpack.c.l.b16 %v1929
        %v2020 = vunpack.c.h.b16 %v1929
        %v2021 = vunpack.c.l.b16 %v1930
        %v2022 = vunpack.c.h.b16 %v1930
        %v2023 = vunpack.c.l.b16 %v1931
        %v2024 = vunpack.c.h.b16 %v1931
        %v2025 = vunpack.c.l.b16 %v1932
        %v2026 = vunpack.c.h.b16 %v1932
        %v2027 = vunpack.c.l.b16 %v1933
        %v2028 = vunpack.c.h.b16 %v1933
        %v2029 = vunpack.c.l.b16 %v1934
        %v2030 = vunpack.c.h.b16 %v1934
        %v2031 = vpack.c.b16 %v1969, %v1967
        %v2032 = vpack.c.b16 %v1970, %v1968
        %v2033 = vpack.c.b16 %v1973, %v1971
        %v2034 = vpack.c.b16 %v1974, %v1972
        %v2035 = vpack.c.b16 %v1977, %v1975
        %v2036 = vpack.c.b16 %v1978, %v1976
        %v2037 = vpack.c.b16 %v1981, %v1979
        %v2038 = vpack.c.b16 %v1982, %v1980
        %v2039 = vpack.c.b16 %v1985, %v1983
        %v2040 = vpack.c.b16 %v1986, %v1984
        %v2041 = vpack.c.b16 %v1989, %v1987
        %v2042 = vpack.c.b16 %v1990, %v1988
        %v2043 = vpack.c.b16 %v1993, %v1991
        %v2044 = vpack.c.b16 %v1994, %v1992
        %v2045 = vpack.c.b16 %v1997, %v1995
        %v2046 = vpack.c.b16 %v1998, %v1996
        %v2047 = vpack.c.b16 %v2001, %v1999
        %v2048 = vpack.c.b16 %v2002, %v2000
        %v2049 = vpack.c.b16 %v2005, %v2003
        %v2050 = vpack.c.b16 %v2006, %v2004
        %v2051 = vpack.c.b16 %v2009, %v2007
        %v2052 = vpack.c.b16 %v2010, %v2008
        %v2053 = vpack.c.b16 %v2013, %v2011
        %v2054 = vpack.c.b16 %v2014, %v2012
        %v2055 = vpack.c.b16 %v2017, %v2015
        %v2056 = vpack.c.b16 %v2018, %v2016
        %v2057 = vpack.c.b16 %v2021, %v2019
        %v2058 = vpack.c.b16 %v2022, %v2020
        %v2059 = vpack.c.b16 %v2025, %v2023
        %v2060 = vpack.c.b16 %v2026, %v2024
        %v2061 = vpack.c.b16 %v2029, %v2027
        %v2062 = vpack.c.b16 %v2030, %v2028
        %2095 = vmatprep.subr.bf16.mxu0 %v2032
        %2096 = vmatpush1.bf16.msra.mxu0 %v2031
        %2097 = vmatprep.subr.bf16.mxu0 %v2034
        %2098 = vmatpush1.bf16.msra.mxu0 %v2033
        %2099 = vmatprep.subr.bf16.mxu0 %v2036
        %2100 = vmatpush1.bf16.msra.mxu0 %v2035
        %2101 = vmatprep.subr.bf16.mxu0 %v2038
        %2102 = vmatpush1.bf16.msra.mxu0 %v2037
        %2103 = vmatprep.subr.bf16.mxu0 %v2040
        %2104 = vmatpush1.bf16.msra.mxu0 %v2039
        %2105 = vmatprep.subr.bf16.mxu0 %v2042
        %2106 = vmatpush1.bf16.msra.mxu0 %v2041
        %2107 = vmatprep.subr.bf16.mxu0 %v2044
        %2108 = vmatpush1.bf16.msra.mxu0 %v2043
        %2109 = vmatprep.subr.bf16.mxu0 %v2046
        %2110 = vmatpush1.bf16.msra.mxu0 %v2045
        %2111 = vmatprep.subr.bf16.mxu0 %v2048
        %2112 = vmatpush1.bf16.msra.mxu0 %v2047
        %2113 = vmatprep.subr.bf16.mxu0 %v2050
        %2114 = vmatpush1.bf16.msra.mxu0 %v2049
        %2115 = vmatprep.subr.bf16.mxu0 %v2052
        %2116 = vmatpush1.bf16.msra.mxu0 %v2051
        %2117 = vmatprep.subr.bf16.mxu0 %v2054
        %2118 = vmatpush1.bf16.msra.mxu0 %v2053
        %2119 = vmatprep.subr.bf16.mxu0 %v2056
        %2120 = vmatpush1.bf16.msra.mxu0 %v2055
        %2121 = vmatprep.subr.bf16.mxu0 %v2058
        %2122 = vmatpush1.bf16.msra.mxu0 %v2057
        %2123 = vmatprep.subr.bf16.mxu0 %v2060
        %2124 = vmatpush1.bf16.msra.mxu0 %v2059
        %2125 = vmatprep.subr.bf16.mxu0 %v2062
        %2126 = vmatpush1.bf16.msra.mxu0 %v2061
        %2127 = vmatprep.mubr.bf16.mxu0 %v1900
        %2128 = vmatmul.mubr.bf16.gmra.mrb[0].mxu0 %v1899
        %v2129 = vpop.f32.mrb[0].mxu0
        %v2130 = vadd.f32 0.0, %v2129
        %v2131 = vpop.f32.mrb[0].mxu0
        %v2132 = vadd.f32 0.0, %v2131
        %v2133 = vpop.f32.mrb[0].mxu0
        %v2134 = vadd.f32 0.0, %v2133
        %v2135 = vpop.f32.mrb[0].mxu0
        %v2136 = vadd.f32 0.0, %v2135
        %2137 = vdwg.mxu0
        %v2138 = vld [vmem:[#allocation11] sm:$0xff]
        %v2139 = vld [vmem:[#allocation11 + $0x8] sm:$0xff]
        %v2140 = vld [vmem:[#allocation11 + $0x10] sm:$0xff]
        %v2141 = vld [vmem:[#allocation11 + $0x18] sm:$0xff]
        %v2142 = vld [vmem:[#allocation11 + $0x20] sm:$0xff]
        %v2143 = vld [vmem:[#allocation11 + $0x28] sm:$0xff]
        %v2144 = vld [vmem:[#allocation11 + $0x30] sm:$0xff]
        %v2145 = vld [vmem:[#allocation11 + $0x38] sm:$0xff]
        %v2146 = vld [vmem:[#allocation11 + $0x40] sm:$0xff]
        %v2147 = vld [vmem:[#allocation11 + $0x48] sm:$0xff]
        %v2148 = vld [vmem:[#allocation11 + $0x50] sm:$0xff]
        %v2149 = vld [vmem:[#allocation11 + $0x58] sm:$0xff]
        %v2150 = vld [vmem:[#allocation11 + $0x60] sm:$0xff]
        %v2151 = vld [vmem:[#allocation11 + $0x68] sm:$0xff]
        %v2152 = vld [vmem:[#allocation11 + $0x70] sm:$0xff]
        %v2153 = vld [vmem:[#allocation11 + $0x78] sm:$0xff]
        %v2154 = vld [vmem:[#allocation11 + $0x80] sm:$0xff]
        %v2155 = vld [vmem:[#allocation11 + $0x88] sm:$0xff]
        %v2156 = vld [vmem:[#allocation11 + $0x90] sm:$0xff]
        %v2157 = vld [vmem:[#allocation11 + $0x98] sm:$0xff]
        %v2158 = vld [vmem:[#allocation11 + $0xa0] sm:$0xff]
        %v2159 = vld [vmem:[#allocation11 + $0xa8] sm:$0xff]
        %v2160 = vld [vmem:[#allocation11 + $0xb0] sm:$0xff]
        %v2161 = vld [vmem:[#allocation11 + $0xb8] sm:$0xff]
        %v2162 = vld [vmem:[#allocation11 + $0xc0] sm:$0xff]
        %v2163 = vld [vmem:[#allocation11 + $0xc8] sm:$0xff]
        %v2164 = vld [vmem:[#allocation11 + $0xd0] sm:$0xff]
        %v2165 = vld [vmem:[#allocation11 + $0xd8] sm:$0xff]
        %v2166 = vld [vmem:[#allocation11 + $0xe0] sm:$0xff]
        %v2167 = vld [vmem:[#allocation11 + $0xe8] sm:$0xff]
        %v2168 = vld [vmem:[#allocation11 + $0xf0] sm:$0xff]
        %v2169 = vld [vmem:[#allocation11 + $0xf8] sm:$0xff]
        %v2170 = vld [vmem:[#allocation11 + $0x100] sm:$0xff]
        %v2171 = vld [vmem:[#allocation11 + $0x108] sm:$0xff]
        %v2172 = vld [vmem:[#allocation11 + $0x110] sm:$0xff]
        %v2173 = vld [vmem:[#allocation11 + $0x118] sm:$0xff]
        %v2174 = vld [vmem:[#allocation11 + $0x120] sm:$0xff]
        %v2175 = vld [vmem:[#allocation11 + $0x128] sm:$0xff]
        %v2176 = vld [vmem:[#allocation11 + $0x130] sm:$0xff]
        %v2177 = vld [vmem:[#allocation11 + $0x138] sm:$0xff]
        %v2178 = vld [vmem:[#allocation11 + $0x140] sm:$0xff]
        %v2179 = vld [vmem:[#allocation11 + $0x148] sm:$0xff]
        %v2180 = vld [vmem:[#allocation11 + $0x150] sm:$0xff]
        %v2181 = vld [vmem:[#allocation11 + $0x158] sm:$0xff]
        %v2182 = vld [vmem:[#allocation11 + $0x160] sm:$0xff]
        %v2183 = vld [vmem:[#allocation11 + $0x168] sm:$0xff]
        %v2184 = vld [vmem:[#allocation11 + $0x170] sm:$0xff]
        %v2185 = vld [vmem:[#allocation11 + $0x178] sm:$0xff]
        %v2186 = vld [vmem:[#allocation11 + $0x180] sm:$0xff]
        %v2187 = vld [vmem:[#allocation11 + $0x188] sm:$0xff]
        %v2188 = vld [vmem:[#allocation11 + $0x190] sm:$0xff]
        %v2189 = vld [vmem:[#allocation11 + $0x198] sm:$0xff]
        %v2190 = vld [vmem:[#allocation11 + $0x1a0] sm:$0xff]
        %v2191 = vld [vmem:[#allocation11 + $0x1a8] sm:$0xff]
        %v2192 = vld [vmem:[#allocation11 + $0x1b0] sm:$0xff]
        %v2193 = vld [vmem:[#allocation11 + $0x1b8] sm:$0xff]
        %v2194 = vld [vmem:[#allocation11 + $0x1c0] sm:$0xff]
        %v2195 = vld [vmem:[#allocation11 + $0x1c8] sm:$0xff]
        %v2196 = vld [vmem:[#allocation11 + $0x1d0] sm:$0xff]
        %v2197 = vld [vmem:[#allocation11 + $0x1d8] sm:$0xff]
        %v2198 = vld [vmem:[#allocation11 + $0x1e0] sm:$0xff]
        %v2199 = vld [vmem:[#allocation11 + $0x1e8] sm:$0xff]
        %v2200 = vld [vmem:[#allocation11 + $0x1f0] sm:$0xff]
        %v2201 = vld [vmem:[#allocation11 + $0x1f8] sm:$0xff]
        %v2266 = vunpack.c.l.b16 %v2138
        %v2267 = vunpack.c.h.b16 %v2138
        %v2268 = vunpack.c.l.b16 %v2139
        %v2269 = vunpack.c.h.b16 %v2139
        %v2270 = vunpack.c.l.b16 %v2140
        %v2271 = vunpack.c.h.b16 %v2140
        %v2272 = vunpack.c.l.b16 %v2141
        %v2273 = vunpack.c.h.b16 %v2141
        %v2274 = vunpack.c.l.b16 %v2142
        %v2275 = vunpack.c.h.b16 %v2142
        %v2276 = vunpack.c.l.b16 %v2143
        %v2277 = vunpack.c.h.b16 %v2143
        %v2278 = vunpack.c.l.b16 %v2144
        %v2279 = vunpack.c.h.b16 %v2144
        %v2280 = vunpack.c.l.b16 %v2145
        %v2281 = vunpack.c.h.b16 %v2145
        %v2282 = vunpack.c.l.b16 %v2146
        %v2283 = vunpack.c.h.b16 %v2146
        %v2284 = vunpack.c.l.b16 %v2147
        %v2285 = vunpack.c.h.b16 %v2147
        %v2286 = vunpack.c.l.b16 %v2148
        %v2287 = vunpack.c.h.b16 %v2148
        %v2288 = vunpack.c.l.b16 %v2149
        %v2289 = vunpack.c.h.b16 %v2149
        %v2290 = vunpack.c.l.b16 %v2150
        %v2291 = vunpack.c.h.b16 %v2150
        %v2292 = vunpack.c.l.b16 %v2151
        %v2293 = vunpack.c.h.b16 %v2151
        %v2294 = vunpack.c.l.b16 %v2152
        %v2295 = vunpack.c.h.b16 %v2152
        %v2296 = vunpack.c.l.b16 %v2153
        %v2297 = vunpack.c.h.b16 %v2153
        %v2298 = vunpack.c.l.b16 %v2154
        %v2299 = vunpack.c.h.b16 %v2154
        %v2300 = vunpack.c.l.b16 %v2155
        %v2301 = vunpack.c.h.b16 %v2155
        %v2302 = vunpack.c.l.b16 %v2156
        %v2303 = vunpack.c.h.b16 %v2156
        %v2304 = vunpack.c.l.b16 %v2157
        %v2305 = vunpack.c.h.b16 %v2157
        %v2306 = vunpack.c.l.b16 %v2158
        %v2307 = vunpack.c.h.b16 %v2158
        %v2308 = vunpack.c.l.b16 %v2159
        %v2309 = vunpack.c.h.b16 %v2159
        %v2310 = vunpack.c.l.b16 %v2160
        %v2311 = vunpack.c.h.b16 %v2160
        %v2312 = vunpack.c.l.b16 %v2161
        %v2313 = vunpack.c.h.b16 %v2161
        %v2314 = vunpack.c.l.b16 %v2162
        %v2315 = vunpack.c.h.b16 %v2162
        %v2316 = vunpack.c.l.b16 %v2163
        %v2317 = vunpack.c.h.b16 %v2163
        %v2318 = vunpack.c.l.b16 %v2164
        %v2319 = vunpack.c.h.b16 %v2164
        %v2320 = vunpack.c.l.b16 %v2165
        %v2321 = vunpack.c.h.b16 %v2165
        %v2322 = vunpack.c.l.b16 %v2166
        %v2323 = vunpack.c.h.b16 %v2166
        %v2324 = vunpack.c.l.b16 %v2167
        %v2325 = vunpack.c.h.b16 %v2167
        %v2326 = vunpack.c.l.b16 %v2168
        %v2327 = vunpack.c.h.b16 %v2168
        %v2328 = vunpack.c.l.b16 %v2169
        %v2329 = vunpack.c.h.b16 %v2169
        %v2330 = vunpack.c.l.b16 %v2170
        %v2331 = vunpack.c.h.b16 %v2170
        %v2332 = vunpack.c.l.b16 %v2171
        %v2333 = vunpack.c.h.b16 %v2171
        %v2334 = vunpack.c.l.b16 %v2172
        %v2335 = vunpack.c.h.b16 %v2172
        %v2336 = vunpack.c.l.b16 %v2173
        %v2337 = vunpack.c.h.b16 %v2173
        %v2338 = vunpack.c.l.b16 %v2174
        %v2339 = vunpack.c.h.b16 %v2174
        %v2340 = vunpack.c.l.b16 %v2175
        %v2341 = vunpack.c.h.b16 %v2175
        %v2342 = vunpack.c.l.b16 %v2176
        %v2343 = vunpack.c.h.b16 %v2176
        %v2344 = vunpack.c.l.b16 %v2177
        %v2345 = vunpack.c.h.b16 %v2177
        %v2346 = vunpack.c.l.b16 %v2178
        %v2347 = vunpack.c.h.b16 %v2178
        %v2348 = vunpack.c.l.b16 %v2179
        %v2349 = vunpack.c.h.b16 %v2179
        %v2350 = vunpack.c.l.b16 %v2180
        %v2351 = vunpack.c.h.b16 %v2180
        %v2352 = vunpack.c.l.b16 %v2181
        %v2353 = vunpack.c.h.b16 %v2181
        %v2354 = vunpack.c.l.b16 %v2182
        %v2355 = vunpack.c.h.b16 %v2182
        %v2356 = vunpack.c.l.b16 %v2183
        %v2357 = vunpack.c.h.b16 %v2183
        %v2358 = vunpack.c.l.b16 %v2184
        %v2359 = vunpack.c.h.b16 %v2184
        %v2360 = vunpack.c.l.b16 %v2185
        %v2361 = vunpack.c.h.b16 %v2185
        %v2362 = vunpack.c.l.b16 %v2186
        %v2363 = vunpack.c.h.b16 %v2186
        %v2364 = vunpack.c.l.b16 %v2187
        %v2365 = vunpack.c.h.b16 %v2187
        %v2366 = vunpack.c.l.b16 %v2188
        %v2367 = vunpack.c.h.b16 %v2188
        %v2368 = vunpack.c.l.b16 %v2189
        %v2369 = vunpack.c.h.b16 %v2189
        %v2370 = vunpack.c.l.b16 %v2190
        %v2371 = vunpack.c.h.b16 %v2190
        %v2372 = vunpack.c.l.b16 %v2191
        %v2373 = vunpack.c.h.b16 %v2191
        %v2374 = vunpack.c.l.b16 %v2192
        %v2375 = vunpack.c.h.b16 %v2192
        %v2376 = vunpack.c.l.b16 %v2193
        %v2377 = vunpack.c.h.b16 %v2193
        %v2378 = vunpack.c.l.b16 %v2194
        %v2379 = vunpack.c.h.b16 %v2194
        %v2380 = vunpack.c.l.b16 %v2195
        %v2381 = vunpack.c.h.b16 %v2195
        %v2382 = vunpack.c.l.b16 %v2196
        %v2383 = vunpack.c.h.b16 %v2196
        %v2384 = vunpack.c.l.b16 %v2197
        %v2385 = vunpack.c.h.b16 %v2197
        %v2386 = vunpack.c.l.b16 %v2198
        %v2387 = vunpack.c.h.b16 %v2198
        %v2388 = vunpack.c.l.b16 %v2199
        %v2389 = vunpack.c.h.b16 %v2199
        %v2390 = vunpack.c.l.b16 %v2200
        %v2391 = vunpack.c.h.b16 %v2200
        %v2392 = vunpack.c.l.b16 %v2201
        %v2393 = vunpack.c.h.b16 %v2201
        %v2394 = vpack.c.b16 %v2270, %v2266
        %v2395 = vpack.c.b16 %v2271, %v2267
        %v2396 = vpack.c.b16 %v2272, %v2268
        %v2397 = vpack.c.b16 %v2273, %v2269
        %v2398 = vpack.c.b16 %v2278, %v2274
        %v2399 = vpack.c.b16 %v2279, %v2275
        %v2400 = vpack.c.b16 %v2280, %v2276
        %v2401 = vpack.c.b16 %v2281, %v2277
        %v2402 = vpack.c.b16 %v2286, %v2282
        %v2403 = vpack.c.b16 %v2287, %v2283
        %v2404 = vpack.c.b16 %v2288, %v2284
        %v2405 = vpack.c.b16 %v2289, %v2285
        %v2406 = vpack.c.b16 %v2294, %v2290
        %v2407 = vpack.c.b16 %v2295, %v2291
        %v2408 = vpack.c.b16 %v2296, %v2292
        %v2409 = vpack.c.b16 %v2297, %v2293
        %v2410 = vpack.c.b16 %v2302, %v2298
        %v2411 = vpack.c.b16 %v2303, %v2299
        %v2412 = vpack.c.b16 %v2304, %v2300
        %v2413 = vpack.c.b16 %v2305, %v2301
        %v2414 = vpack.c.b16 %v2310, %v2306
        %v2415 = vpack.c.b16 %v2311, %v2307
        %v2416 = vpack.c.b16 %v2312, %v2308
        %v2417 = vpack.c.b16 %v2313, %v2309
        %v2418 = vpack.c.b16 %v2318, %v2314
        %v2419 = vpack.c.b16 %v2319, %v2315
        %v2420 = vpack.c.b16 %v2320, %v2316
        %v2421 = vpack.c.b16 %v2321, %v2317
        %v2422 = vpack.c.b16 %v2326, %v2322
        %v2423 = vpack.c.b16 %v2327, %v2323
        %v2424 = vpack.c.b16 %v2328, %v2324
        %v2425 = vpack.c.b16 %v2329, %v2325
        %v2426 = vpack.c.b16 %v2334, %v2330
        %v2427 = vpack.c.b16 %v2335, %v2331
        %v2428 = vpack.c.b16 %v2336, %v2332
        %v2429 = vpack.c.b16 %v2337, %v2333
        %v2430 = vpack.c.b16 %v2342, %v2338
        %v2431 = vpack.c.b16 %v2343, %v2339
        %v2432 = vpack.c.b16 %v2344, %v2340
        %v2433 = vpack.c.b16 %v2345, %v2341
        %v2434 = vpack.c.b16 %v2350, %v2346
        %v2435 = vpack.c.b16 %v2351, %v2347
        %v2436 = vpack.c.b16 %v2352, %v2348
        %v2437 = vpack.c.b16 %v2353, %v2349
        %v2438 = vpack.c.b16 %v2358, %v2354
        %v2439 = vpack.c.b16 %v2359, %v2355
        %v2440 = vpack.c.b16 %v2360, %v2356
        %v2441 = vpack.c.b16 %v2361, %v2357
        %v2442 = vpack.c.b16 %v2366, %v2362
        %v2443 = vpack.c.b16 %v2367, %v2363
        %v2444 = vpack.c.b16 %v2368, %v2364
        %v2445 = vpack.c.b16 %v2369, %v2365
        %v2446 = vpack.c.b16 %v2374, %v2370
        %v2447 = vpack.c.b16 %v2375, %v2371
        %v2448 = vpack.c.b16 %v2376, %v2372
        %v2449 = vpack.c.b16 %v2377, %v2373
        %v2450 = vpack.c.b16 %v2382, %v2378
        %v2451 = vpack.c.b16 %v2383, %v2379
        %v2452 = vpack.c.b16 %v2384, %v2380
        %v2453 = vpack.c.b16 %v2385, %v2381
        %v2454 = vpack.c.b16 %v2390, %v2386
        %v2455 = vpack.c.b16 %v2391, %v2387
        %v2456 = vpack.c.b16 %v2392, %v2388
        %v2457 = vpack.c.b16 %v2393, %v2389
        %2522 = vmatprep.subr.bf16.mxu0 %v2395
        %2523 = vmatpush1.bf16.msra.mxu0 %v2394
        %2524 = vmatprep.subr.bf16.mxu0 %v2399
        %2525 = vmatpush1.bf16.msra.mxu0 %v2398
        %2526 = vmatprep.subr.bf16.mxu0 %v2403
        %2527 = vmatpush1.bf16.msra.mxu0 %v2402
        %2528 = vmatprep.subr.bf16.mxu0 %v2407
        %2529 = vmatpush1.bf16.msra.mxu0 %v2406
        %2530 = vmatprep.subr.bf16.mxu0 %v2411
        %2531 = vmatpush1.bf16.msra.mxu0 %v2410
        %2532 = vmatprep.subr.bf16.mxu0 %v2415
        %2533 = vmatpush1.bf16.msra.mxu0 %v2414
        %2534 = vmatprep.subr.bf16.mxu0 %v2419
        %2535 = vmatpush1.bf16.msra.mxu0 %v2418
        %2536 = vmatprep.subr.bf16.mxu0 %v2423
        %2537 = vmatpush1.bf16.msra.mxu0 %v2422
        %2538 = vmatprep.subr.bf16.mxu0 %v2427
        %2539 = vmatpush1.bf16.msra.mxu0 %v2426
        %2540 = vmatprep.subr.bf16.mxu0 %v2431
        %2541 = vmatpush1.bf16.msra.mxu0 %v2430
        %2542 = vmatprep.subr.bf16.mxu0 %v2435
        %2543 = vmatpush1.bf16.msra.mxu0 %v2434
        %2544 = vmatprep.subr.bf16.mxu0 %v2439
        %2545 = vmatpush1.bf16.msra.mxu0 %v2438
        %2546 = vmatprep.subr.bf16.mxu0 %v2443
        %2547 = vmatpush1.bf16.msra.mxu0 %v2442
        %2548 = vmatprep.subr.bf16.mxu0 %v2447
        %2549 = vmatpush1.bf16.msra.mxu0 %v2446
        %2550 = vmatprep.subr.bf16.mxu0 %v2451
        %2551 = vmatpush1.bf16.msra.mxu0 %v2450
        %2552 = vmatprep.subr.bf16.mxu0 %v2455
        %2553 = vmatpush1.bf16.msra.mxu0 %v2454
        %2554 = vmatprep.mubr.bf16.mxu0 %v1902
        %2555 = vmatmul.mubr.bf16.gmra.mrb[0].mxu0 %v1901
        %v2556 = vpop.f32.mrb[0].mxu0
        %v2557 = vadd.f32 0.0, %v2556
        %v2558 = vpop.f32.mrb[0].mxu0
        %v2559 = vadd.f32 0.0, %v2558
        %v2560 = vpop.f32.mrb[0].mxu0
        %v2561 = vadd.f32 0.0, %v2560
        %v2562 = vpop.f32.mrb[0].mxu0
        %v2563 = vadd.f32 0.0, %v2562
        %2564 = vdwg.mxu0
        %2565 = vmatprep.subr.bf16.mxu0 %v2397
        %2566 = vmatpush1.bf16.msra.mxu0 %v2396
        %2567 = vmatprep.subr.bf16.mxu0 %v2401
        %2568 = vmatpush1.bf16.msra.mxu0 %v2400
        %2569 = vmatprep.subr.bf16.mxu0 %v2405
        %2570 = vmatpush1.bf16.msra.mxu0 %v2404
        %2571 = vmatprep.subr.bf16.mxu0 %v2409
        %2572 = vmatpush1.bf16.msra.mxu0 %v2408
        %2573 = vmatprep.subr.bf16.mxu0 %v2413
        %2574 = vmatpush1.bf16.msra.mxu0 %v2412
        %2575 = vmatprep.subr.bf16.mxu0 %v2417
        %2576 = vmatpush1.bf16.msra.mxu0 %v2416
        %2577 = vmatprep.subr.bf16.mxu0 %v2421
        %2578 = vmatpush1.bf16.msra.mxu0 %v2420
        %2579 = vmatprep.subr.bf16.mxu0 %v2425
        %2580 = vmatpush1.bf16.msra.mxu0 %v2424
        %2581 = vmatprep.subr.bf16.mxu0 %v2429
        %2582 = vmatpush1.bf16.msra.mxu0 %v2428
        %2583 = vmatprep.subr.bf16.mxu0 %v2433
        %2584 = vmatpush1.bf16.msra.mxu0 %v2432
        %2585 = vmatprep.subr.bf16.mxu0 %v2437
        %2586 = vmatpush1.bf16.msra.mxu0 %v2436
        %2587 = vmatprep.subr.bf16.mxu0 %v2441
        %2588 = vmatpush1.bf16.msra.mxu0 %v2440
        %2589 = vmatprep.subr.bf16.mxu0 %v2445
        %2590 = vmatpush1.bf16.msra.mxu0 %v2444
        %2591 = vmatprep.subr.bf16.mxu0 %v2449
        %2592 = vmatpush1.bf16.msra.mxu0 %v2448
        %2593 = vmatprep.subr.bf16.mxu0 %v2453
        %2594 = vmatpush1.bf16.msra.mxu0 %v2452
        %2595 = vmatprep.subr.bf16.mxu0 %v2457
        %2596 = vmatpush1.bf16.msra.mxu0 %v2456
        %2597 = vmatprep.mubr.bf16.mxu0 %v1902
        %2598 = vmatmul.mubr.bf16.gmra.mrb[0].mxu0 %v1901
        %v2599 = vpop.f32.mrb[0].mxu0
        %v2600 = vadd.f32 0.0, %v2599
        %v2601 = vpop.f32.mrb[0].mxu0
        %v2602 = vadd.f32 0.0, %v2601
        %v2603 = vpop.f32.mrb[0].mxu0
        %v2604 = vadd.f32 0.0, %v2603
        %v2605 = vpop.f32.mrb[0].mxu0
        %v2606 = vadd.f32 0.0, %v2605
        %2607 = vdwg.mxu0
        %v2608 = vld [vmem:[#allocation13] sm:$0xff]
        %v2609 = vld [vmem:[#allocation13 + $0x8] sm:$0xff]
        %v2610 = vld [vmem:[#allocation13 + $0x10] sm:$0xff]
        %v2611 = vld [vmem:[#allocation13 + $0x18] sm:$0xff]
        %v2612 = vld [vmem:[#allocation13 + $0x20] sm:$0xff]
        %v2613 = vld [vmem:[#allocation13 + $0x28] sm:$0xff]
        %v2614 = vld [vmem:[#allocation13 + $0x30] sm:$0xff]
        %v2615 = vld [vmem:[#allocation13 + $0x38] sm:$0xff]
        %v2616 = vld [vmem:[#allocation13 + $0x40] sm:$0xff]
        %v2617 = vld [vmem:[#allocation13 + $0x48] sm:$0xff]
        %v2618 = vld [vmem:[#allocation13 + $0x50] sm:$0xff]
        %v2619 = vld [vmem:[#allocation13 + $0x58] sm:$0xff]
        %v2620 = vld [vmem:[#allocation13 + $0x60] sm:$0xff]
        %v2621 = vld [vmem:[#allocation13 + $0x68] sm:$0xff]
        %v2622 = vld [vmem:[#allocation13 + $0x70] sm:$0xff]
        %v2623 = vld [vmem:[#allocation13 + $0x78] sm:$0xff]
        %v2624 = vld [vmem:[#allocation13 + $0x80] sm:$0xff]
        %v2625 = vld [vmem:[#allocation13 + $0x88] sm:$0xff]
        %v2626 = vld [vmem:[#allocation13 + $0x90] sm:$0xff]
        %v2627 = vld [vmem:[#allocation13 + $0x98] sm:$0xff]
        %v2628 = vld [vmem:[#allocation13 + $0xa0] sm:$0xff]
        %v2629 = vld [vmem:[#allocation13 + $0xa8] sm:$0xff]
        %v2630 = vld [vmem:[#allocation13 + $0xb0] sm:$0xff]
        %v2631 = vld [vmem:[#allocation13 + $0xb8] sm:$0xff]
        %v2632 = vld [vmem:[#allocation13 + $0xc0] sm:$0xff]
        %v2633 = vld [vmem:[#allocation13 + $0xc8] sm:$0xff]
        %v2634 = vld [vmem:[#allocation13 + $0xd0] sm:$0xff]
        %v2635 = vld [vmem:[#allocation13 + $0xd8] sm:$0xff]
        %v2636 = vld [vmem:[#allocation13 + $0xe0] sm:$0xff]
        %v2637 = vld [vmem:[#allocation13 + $0xe8] sm:$0xff]
        %v2638 = vld [vmem:[#allocation13 + $0xf0] sm:$0xff]
        %v2639 = vld [vmem:[#allocation13 + $0xf8] sm:$0xff]
        %v2640 = vld [vmem:[#allocation17] sm:$0xff]
        %v2641 = vld [vmem:[#allocation17 + $0x8] sm:$0xff]
        %v2642 = vld [vmem:[#allocation17 + $0x10] sm:$0xff]
        %v2643 = vld [vmem:[#allocation17 + $0x18] sm:$0xff]
        %v2644 = vpack.c.bf16 %v2134, %v2130
        %v2645 = vpack.c.bf16 %v2136, %v2132
        %v2646 = vpack.c.bf16 %v2561, %v2557
        %v2647 = vpack.c.bf16 %v2563, %v2559
        %v2648 = vpack.c.bf16 %v2604, %v2600
        %v2649 = vpack.c.bf16 %v2606, %v2602
        %2650 = vmatprep.subr.bf16.mxu0 0
        %2651 = vmatpush1.bf16.xpose.msra.mxu0 %v2646
        %2652 = vmatprep.subr.bf16.mxu0 0
        %2653 = vmatpush1.bf16.xpose.msra.mxu0 0
        %2654 = vmatprep.subr.bf16.mxu0 0
        %2655 = vmatpush1.bf16.xpose.msra.mxu0 0
        %2656 = vmatprep.subr.bf16.mxu0 0
        %2657 = vmatpush1.bf16.xpose.msra.mxu0 0
        %2658 = vmatprep.subr.bf16.mxu0 0
        %2659 = vmatpush1.bf16.xpose.msra.mxu0 0
        %2660 = vmatprep.subr.bf16.mxu0 0
        %2661 = vmatpush1.bf16.xpose.msra.mxu0 0
        %2662 = vmatprep.subr.bf16.mxu0 0
        %2663 = vmatpush1.bf16.xpose.msra.mxu0 0
        %2664 = vmatprep.subr.bf16.mxu0 0
        %2665 = vmatpush1.bf16.xpose.msra.mxu0 0
        %2666 = vmatprep.subr.bf16.mxu0 0
        %2667 = vmatpush1.bf16.xpose.msra.mxu0 0
        %2668 = vmatprep.subr.bf16.mxu0 0
        %2669 = vmatpush1.bf16.xpose.msra.mxu0 0
        %2670 = vmatprep.subr.bf16.mxu0 0
        %2671 = vmatpush1.bf16.xpose.msra.mxu0 0
        %2672 = vmatprep.subr.bf16.mxu0 0
        %2673 = vmatpush1.bf16.xpose.msra.mxu0 0
        %2674 = vmatprep.subr.bf16.mxu0 0
        %2675 = vmatpush1.bf16.xpose.msra.mxu0 0
        %2676 = vmatprep.subr.bf16.mxu0 0
        %2677 = vmatpush1.bf16.xpose.msra.mxu0 0
        %2678 = vmatprep.subr.bf16.mxu0 0
        %2679 = vmatpush1.bf16.xpose.msra.mxu0 0
        %2680 = vmatprep.subr.bf16.mxu0 0
        %2681 = vmatpush1.bf16.xpose.msra.mxu0 0
        %2682 = vmatprep.mubr.bf16.mxu0 0
        %2683 = vmatmul.mubr.bf16.gmra.mrb[0].mxu0 %v2644
        %v2684 = vpop.f32.mrb[0].mxu0
        %v2685 = vadd.f32 %v2640, %v2684
        %v2686 = vpop.f32.mrb[0].mxu0
        %v2687 = vpop.f32.mrb[0].mxu0
        %v2688 = vadd.f32 %v2641, %v2687
        %v2689 = vpop.f32.mrb[0].mxu0
        %2690 = vdwg.mxu0
        %2691 = vmatprep.subr.bf16.mxu0 0
        %2692 = vmatpush1.bf16.xpose.msra.mxu0 %v2647
        %2693 = vmatprep.subr.bf16.mxu0 0
        %2694 = vmatpush1.bf16.xpose.msra.mxu0 0
        %2695 = vmatprep.subr.bf16.mxu0 0
        %2696 = vmatpush1.bf16.xpose.msra.mxu0 0
        %2697 = vmatprep.subr.bf16.mxu0 0
        %2698 = vmatpush1.bf16.xpose.msra.mxu0 0
        %2699 = vmatprep.subr.bf16.mxu0 0
        %2700 = vmatpush1.bf16.xpose.msra.mxu0 0
        %2701 = vmatprep.subr.bf16.mxu0 0
        %2702 = vmatpush1.bf16.xpose.msra.mxu0 0
        %2703 = vmatprep.subr.bf16.mxu0 0
        %2704 = vmatpush1.bf16.xpose.msra.mxu0 0
        %2705 = vmatprep.subr.bf16.mxu0 0
        %2706 = vmatpush1.bf16.xpose.msra.mxu0 0
        %2707 = vmatprep.subr.bf16.mxu0 0
        %2708 = vmatpush1.bf16.xpose.msra.mxu0 0
        %2709 = vmatprep.subr.bf16.mxu0 0
        %2710 = vmatpush1.bf16.xpose.msra.mxu0 0
        %2711 = vmatprep.subr.bf16.mxu0 0
        %2712 = vmatpush1.bf16.xpose.msra.mxu0 0
        %2713 = vmatprep.subr.bf16.mxu0 0
        %2714 = vmatpush1.bf16.xpose.msra.mxu0 0
        %2715 = vmatprep.subr.bf16.mxu0 0
        %2716 = vmatpush1.bf16.xpose.msra.mxu0 0
        %2717 = vmatprep.subr.bf16.mxu0 0
        %2718 = vmatpush1.bf16.xpose.msra.mxu0 0
        %2719 = vmatprep.subr.bf16.mxu0 0
        %2720 = vmatpush1.bf16.xpose.msra.mxu0 0
        %2721 = vmatprep.subr.bf16.mxu0 0
        %2722 = vmatpush1.bf16.xpose.msra.mxu0 0
        %2723 = vmatprep.mubr.bf16.mxu0 0
        %2724 = vmatmul.mubr.bf16.gmra.mrb[0].mxu0 %v2645
        %v2725 = vpop.f32.mrb[0].mxu0
        %v2726 = vadd.f32 %v2642, %v2725
        %v2727 = vpop.f32.mrb[0].mxu0
        %v2728 = vpop.f32.mrb[0].mxu0
        %v2729 = vadd.f32 %v2643, %v2728
        %v2730 = vpop.f32.mrb[0].mxu0
        %2731 = vdwg.mxu0
        %v2732 = vsel %vm1519, %v2685, -inf
        %2733 = vmax.xlane.f32.xlu0 %v2732
        %v2734 = vpop.xlane.xlu0 %2733
        %v2735 = vsel %vm1519, %v2688, -inf
        %2736 = vmax.xlane.f32.xlu0 %v2735
        %v2737 = vpop.xlane.xlu0 %2736
        %v2738 = vsel %vm1519, %v2726, -inf
        %2739 = vmax.xlane.f32.xlu0 %v2738
        %v2740 = vpop.xlane.xlu0 %2739
        %v2741 = vsel %vm1519, %v2729, -inf
        %2742 = vmax.xlane.f32.xlu0 %v2741
        %v2743 = vpop.xlane.xlu0 %2742
        %v2744 = vsub.f32 %v2685, %v2734
        %v2745 = vsub.f32 %v2688, %v2737
        %v2746 = vsub.f32 %v2726, %v2740
        %v2747 = vsub.f32 %v2729, %v2743
        %v2748 = vmul.f32 %v2744, 1.442695
        %v2749 = vpow.pop %v2748
        %v2750 = vmul.f32 %v2745, 1.442695
        %v2751 = vpow.pop %v2750
        %v2752 = vmul.f32 %v2746, 1.442695
        %v2753 = vpow.pop %v2752
        %v2754 = vmul.f32 %v2747, 1.442695
        %v2755 = vpow.pop %v2754
        %v2756 = vsel %vm1519, %v2749, 0.0
        %2757 = vadd.xlane.f32.xlu0 %v2756
        %v2758 = vpop.xlane.xlu0 %2757
        %v2759 = vsel %vm1519, %v2751, 0.0
        %2760 = vadd.xlane.f32.xlu0 %v2759
        %v2761 = vpop.xlane.xlu0 %2760
        %v2762 = vsel %vm1519, %v2753, 0.0
        %2763 = vadd.xlane.f32.xlu0 %v2762
        %v2764 = vpop.xlane.xlu0 %2763
        %v2765 = vsel %vm1519, %v2755, 0.0
        %2766 = vadd.xlane.f32.xlu0 %v2765
        %v2767 = vpop.xlane.xlu0 %2766
        %v2768 = vrcp.pop %v2758
        %v2769 = vrcp.pop %v2761
        %v2770 = vrcp.pop %v2764
        %v2771 = vrcp.pop %v2767
        %v2772 = vmul.f32 %v2749, %v2768
        %v2773 = vmul.f32 %v2751, %v2769
        %v2774 = vmul.f32 %v2753, %v2770
        %v2775 = vmul.f32 %v2755, %v2771
        %v2776 = vpack.c.bf16 %v2773, %v2772
        %v2777 = vpack.c.bf16 %v2775, %v2774
        %v2779 = vsel %vm1519, %v2776, 0
        %2781 = vmatprep.subr.bf16.mxu0 0
        %2782 = vmatpush1.bf16.msra.mxu0 %v2648
        %2783 = vmatprep.subr.bf16.mxu0 0
        %2784 = vmatpush1.bf16.msra.mxu0 0
        %2785 = vmatprep.subr.bf16.mxu0 0
        %2786 = vmatpush1.bf16.msra.mxu0 0
        %2787 = vmatprep.subr.bf16.mxu0 0
        %2788 = vmatpush1.bf16.msra.mxu0 0
        %2789 = vmatprep.subr.bf16.mxu0 0
        %2790 = vmatpush1.bf16.msra.mxu0 0
        %2791 = vmatprep.subr.bf16.mxu0 0
        %2792 = vmatpush1.bf16.msra.mxu0 0
        %2793 = vmatprep.subr.bf16.mxu0 0
        %2794 = vmatpush1.bf16.msra.mxu0 0
        %2795 = vmatprep.subr.bf16.mxu0 0
        %2796 = vmatpush1.bf16.msra.mxu0 0
        %2797 = vmatprep.subr.bf16.mxu0 0
        %2798 = vmatpush1.bf16.msra.mxu0 0
        %2799 = vmatprep.subr.bf16.mxu0 0
        %2800 = vmatpush1.bf16.msra.mxu0 0
        %2801 = vmatprep.subr.bf16.mxu0 0
        %2802 = vmatpush1.bf16.msra.mxu0 0
        %2803 = vmatprep.subr.bf16.mxu0 0
        %2804 = vmatpush1.bf16.msra.mxu0 0
        %2805 = vmatprep.subr.bf16.mxu0 0
        %2806 = vmatpush1.bf16.msra.mxu0 0
        %2807 = vmatprep.subr.bf16.mxu0 0
        %2808 = vmatpush1.bf16.msra.mxu0 0
        %2809 = vmatprep.subr.bf16.mxu0 0
        %2810 = vmatpush1.bf16.msra.mxu0 0
        %2811 = vmatprep.subr.bf16.mxu0 0
        %2812 = vmatpush1.bf16.msra.mxu0 0
        %2813 = vmatprep.mubr.bf16.mxu0 0
        %2814 = vmatmul.mubr.bf16.gmra.mrb[0].mxu0 %v2779
        %v2815 = vpop.f32.mrb[0].mxu0
        %v2816 = vadd.f32 0.0, %v2815
        %v2817 = vpop.f32.mrb[0].mxu0
        %v2818 = vpop.f32.mrb[0].mxu0
        %v2819 = vadd.f32 0.0, %v2818
        %v2820 = vpop.f32.mrb[0].mxu0
        %2821 = vdwg.mxu0
        %v2823 = vsel %vm1519, %v2777, 0
        %2825 = vmatprep.subr.bf16.mxu0 0
        %2826 = vmatpush1.bf16.msra.mxu0 %v2649
        %2827 = vmatprep.subr.bf16.mxu0 0
        %2828 = vmatpush1.bf16.msra.mxu0 0
        %2829 = vmatprep.subr.bf16.mxu0 0
        %2830 = vmatpush1.bf16.msra.mxu0 0
        %2831 = vmatprep.subr.bf16.mxu0 0
        %2832 = vmatpush1.bf16.msra.mxu0 0
        %2833 = vmatprep.subr.bf16.mxu0 0
        %2834 = vmatpush1.bf16.msra.mxu0 0
        %2835 = vmatprep.subr.bf16.mxu0 0
        %2836 = vmatpush1.bf16.msra.mxu0 0
        %2837 = vmatprep.subr.bf16.mxu0 0
        %2838 = vmatpush1.bf16.msra.mxu0 0
        %2839 = vmatprep.subr.bf16.mxu0 0
        %2840 = vmatpush1.bf16.msra.mxu0 0
        %2841 = vmatprep.subr.bf16.mxu0 0
        %2842 = vmatpush1.bf16.msra.mxu0 0
        %2843 = vmatprep.subr.bf16.mxu0 0
        %2844 = vmatpush1.bf16.msra.mxu0 0
        %2845 = vmatprep.subr.bf16.mxu0 0
        %2846 = vmatpush1.bf16.msra.mxu0 0
        %2847 = vmatprep.subr.bf16.mxu0 0
        %2848 = vmatpush1.bf16.msra.mxu0 0
        %2849 = vmatprep.subr.bf16.mxu0 0
        %2850 = vmatpush1.bf16.msra.mxu0 0
        %2851 = vmatprep.subr.bf16.mxu0 0
        %2852 = vmatpush1.bf16.msra.mxu0 0
        %2853 = vmatprep.subr.bf16.mxu0 0
        %2854 = vmatpush1.bf16.msra.mxu0 0
        %2855 = vmatprep.subr.bf16.mxu0 0
        %2856 = vmatpush1.bf16.msra.mxu0 0
        %2857 = vmatprep.mubr.bf16.mxu0 0
        %2858 = vmatmul.mubr.bf16.gmra.mrb[0].mxu0 %v2823
        %v2859 = vpop.f32.mrb[0].mxu0
        %v2860 = vadd.f32 0.0, %v2859
        %v2861 = vpop.f32.mrb[0].mxu0
        %v2862 = vpop.f32.mrb[0].mxu0
        %v2863 = vadd.f32 0.0, %v2862
        %v2864 = vpop.f32.mrb[0].mxu0
        %2865 = vdwg.mxu0
        %v2866 = vpack.c.bf16 %v2819, %v2816
        %v2867 = vpack.c.bf16 %v2863, %v2860
        %v2900 = vunpack.c.l.b16 %v2608
        %v2901 = vunpack.c.h.b16 %v2608
        %v2902 = vunpack.c.l.b16 %v2609
        %v2903 = vunpack.c.h.b16 %v2609
        %v2904 = vunpack.c.l.b16 %v2610
        %v2905 = vunpack.c.h.b16 %v2610
        %v2906 = vunpack.c.l.b16 %v2611
        %v2907 = vunpack.c.h.b16 %v2611
        %v2908 = vunpack.c.l.b16 %v2612
        %v2909 = vunpack.c.h.b16 %v2612
        %v2910 = vunpack.c.l.b16 %v2613
        %v2911 = vunpack.c.h.b16 %v2613
        %v2912 = vunpack.c.l.b16 %v2614
        %v2913 = vunpack.c.h.b16 %v2614
        %v2914 = vunpack.c.l.b16 %v2615
        %v2915 = vunpack.c.h.b16 %v2615
        %v2916 = vunpack.c.l.b16 %v2616
        %v2917 = vunpack.c.h.b16 %v2616
        %v2918 = vunpack.c.l.b16 %v2617
        %v2919 = vunpack.c.h.b16 %v2617
        %v2920 = vunpack.c.l.b16 %v2618
        %v2921 = vunpack.c.h.b16 %v2618
        %v2922 = vunpack.c.l.b16 %v2619
        %v2923 = vunpack.c.h.b16 %v2619
        %v2924 = vunpack.c.l.b16 %v2620
        %v2925 = vunpack.c.h.b16 %v2620
        %v2926 = vunpack.c.l.b16 %v2621
        %v2927 = vunpack.c.h.b16 %v2621
        %v2928 = vunpack.c.l.b16 %v2622
        %v2929 = vunpack.c.h.b16 %v2622
        %v2930 = vunpack.c.l.b16 %v2623
        %v2931 = vunpack.c.h.b16 %v2623
        %v2932 = vunpack.c.l.b16 %v2624
        %v2933 = vunpack.c.h.b16 %v2624
        %v2934 = vunpack.c.l.b16 %v2625
        %v2935 = vunpack.c.h.b16 %v2625
        %v2936 = vunpack.c.l.b16 %v2626
        %v2937 = vunpack.c.h.b16 %v2626
        %v2938 = vunpack.c.l.b16 %v2627
        %v2939 = vunpack.c.h.b16 %v2627
        %v2940 = vunpack.c.l.b16 %v2628
        %v2941 = vunpack.c.h.b16 %v2628
        %v2942 = vunpack.c.l.b16 %v2629
        %v2943 = vunpack.c.h.b16 %v2629
        %v2944 = vunpack.c.l.b16 %v2630
        %v2945 = vunpack.c.h.b16 %v2630
        %v2946 = vunpack.c.l.b16 %v2631
        %v2947 = vunpack.c.h.b16 %v2631
        %v2948 = vunpack.c.l.b16 %v2632
        %v2949 = vunpack.c.h.b16 %v2632
        %v2950 = vunpack.c.l.b16 %v2633
        %v2951 = vunpack.c.h.b16 %v2633
        %v2952 = vunpack.c.l.b16 %v2634
        %v2953 = vunpack.c.h.b16 %v2634
        %v2954 = vunpack.c.l.b16 %v2635
        %v2955 = vunpack.c.h.b16 %v2635
        %v2956 = vunpack.c.l.b16 %v2636
        %v2957 = vunpack.c.h.b16 %v2636
        %v2958 = vunpack.c.l.b16 %v2637
        %v2959 = vunpack.c.h.b16 %v2637
        %v2960 = vunpack.c.l.b16 %v2638
        %v2961 = vunpack.c.h.b16 %v2638
        %v2962 = vunpack.c.l.b16 %v2639
        %v2963 = vunpack.c.h.b16 %v2639
        %v2964 = vpack.c.b16 %v2902, %v2900
        %v2965 = vpack.c.b16 %v2903, %v2901
        %v2966 = vpack.c.b16 %v2906, %v2904
        %v2967 = vpack.c.b16 %v2907, %v2905
        %v2968 = vpack.c.b16 %v2910, %v2908
        %v2969 = vpack.c.b16 %v2911, %v2909
        %v2970 = vpack.c.b16 %v2914, %v2912
        %v2971 = vpack.c.b16 %v2915, %v2913
        %v2972 = vpack.c.b16 %v2918, %v2916
        %v2973 = vpack.c.b16 %v2919, %v2917
        %v2974 = vpack.c.b16 %v2922, %v2920
        %v2975 = vpack.c.b16 %v2923, %v2921
        %v2976 = vpack.c.b16 %v2926, %v2924
        %v2977 = vpack.c.b16 %v2927, %v2925
        %v2978 = vpack.c.b16 %v2930, %v2928
        %v2979 = vpack.c.b16 %v2931, %v2929
        %v2980 = vpack.c.b16 %v2934, %v2932
        %v2981 = vpack.c.b16 %v2935, %v2933
        %v2982 = vpack.c.b16 %v2938, %v2936
        %v2983 = vpack.c.b16 %v2939, %v2937
        %v2984 = vpack.c.b16 %v2942, %v2940
        %v2985 = vpack.c.b16 %v2943, %v2941
        %v2986 = vpack.c.b16 %v2946, %v2944
        %v2987 = vpack.c.b16 %v2947, %v2945
        %v2988 = vpack.c.b16 %v2950, %v2948
        %v2989 = vpack.c.b16 %v2951, %v2949
        %v2990 = vpack.c.b16 %v2954, %v2952
        %v2991 = vpack.c.b16 %v2955, %v2953
        %v2992 = vpack.c.b16 %v2958, %v2956
        %v2993 = vpack.c.b16 %v2959, %v2957
        %v2994 = vpack.c.b16 %v2962, %v2960
        %v2995 = vpack.c.b16 %v2963, %v2961
        %3028 = vmatprep.subr.bf16.mxu0 %v2965
        %3029 = vmatpush1.bf16.msra.mxu0 %v2964
        %3030 = vmatprep.subr.bf16.mxu0 %v2967
        %3031 = vmatpush1.bf16.msra.mxu0 %v2966
        %3032 = vmatprep.subr.bf16.mxu0 %v2969
        %3033 = vmatpush1.bf16.msra.mxu0 %v2968
        %3034 = vmatprep.subr.bf16.mxu0 %v2971
        %3035 = vmatpush1.bf16.msra.mxu0 %v2970
        %3036 = vmatprep.subr.bf16.mxu0 %v2973
        %3037 = vmatpush1.bf16.msra.mxu0 %v2972
        %3038 = vmatprep.subr.bf16.mxu0 %v2975
        %3039 = vmatpush1.bf16.msra.mxu0 %v2974
        %3040 = vmatprep.subr.bf16.mxu0 %v2977
        %3041 = vmatpush1.bf16.msra.mxu0 %v2976
        %3042 = vmatprep.subr.bf16.mxu0 %v2979
        %3043 = vmatpush1.bf16.msra.mxu0 %v2978
        %3044 = vmatprep.subr.bf16.mxu0 %v2981
        %3045 = vmatpush1.bf16.msra.mxu0 %v2980
        %3046 = vmatprep.subr.bf16.mxu0 %v2983
        %3047 = vmatpush1.bf16.msra.mxu0 %v2982
        %3048 = vmatprep.subr.bf16.mxu0 %v2985
        %3049 = vmatpush1.bf16.msra.mxu0 %v2984
        %3050 = vmatprep.subr.bf16.mxu0 %v2987
        %3051 = vmatpush1.bf16.msra.mxu0 %v2986
        %3052 = vmatprep.subr.bf16.mxu0 %v2989
        %3053 = vmatpush1.bf16.msra.mxu0 %v2988
        %3054 = vmatprep.subr.bf16.mxu0 %v2991
        %3055 = vmatpush1.bf16.msra.mxu0 %v2990
        %3056 = vmatprep.subr.bf16.mxu0 %v2993
        %3057 = vmatpush1.bf16.msra.mxu0 %v2992
        %3058 = vmatprep.subr.bf16.mxu0 %v2995
        %3059 = vmatpush1.bf16.msra.mxu0 %v2994
        %3060 = vmatprep.mubr.bf16.mxu0 %v2867
        %3061 = vmatmul.mubr.bf16.gmra.mrb[0].mxu0 %v2866
        %v3062 = vpop.f32.mrb[0].mxu0
        %v3063 = vadd.f32 0.0, %v3062
        %v3064 = vpop.f32.mrb[0].mxu0
        %v3065 = vadd.f32 0.0, %v3064
        %v3066 = vpop.f32.mrb[0].mxu0
        %v3067 = vadd.f32 0.0, %v3066
        %v3068 = vpop.f32.mrb[0].mxu0
        %v3069 = vadd.f32 0.0, %v3068
        %3070 = vdwg.mxu0
        %v3071 = vadd.f32 %v1859, %v3063
        %v3072 = vadd.f32 %v1860, %v3065
        %v3073 = vadd.f32 %v1861, %v3067
        %v3074 = vadd.f32 %v1862, %v3069
        %v3075 = vld [vmem:[%s4] sm:$0x3]
        %v3076 = vmul.f32 %v3071, %v3071
        %v3077 = vmul.f32 %v3072, %v3072
        %v3078 = vmul.f32 %v3073, %v3073
        %v3079 = vmul.f32 %v3074, %v3074
        %v3080 = vadd.f32 %v3076, %v3077
        %3081 = vadd.xlane.f32.xlu0 %v3080
        %v3082 = vpop.xlane.xlu0 %3081
        %v3083 = vadd.f32 %v3078, %v3079
        %3084 = vadd.xlane.f32.xlu0 %v3083
        %v3085 = vpop.xlane.xlu0 %3084
        %v3086 = vmul.f32 %v3082, %v662
        %v3087 = vmul.f32 %v3085, %v662
        %v3088 = vadd.f32 %v3086, 1e-06
        %v3089 = vadd.f32 %v3087, 1e-06
        %v3090 = vrsqrt.pop %v3088
        %v3091 = vrsqrt.pop %v3089
        %v3092 = vmul.f32 %v3071, %v3090
        %v3093 = vmul.f32 %v3072, %v3090
        %v3094 = vmul.f32 %v3073, %v3091
        %v3095 = vmul.f32 %v3074, %v3091
        %v3097 = vlaneseq
        %v3098 = vshrl.u32 %v3097, 7
        %v3099 = vsub.s32 0, %v3098
        %v3100 = vrot.slane %v3075, %v3099
        %v3101 = vlaneseq
        %v3102 = vshrl.u32 %v3101, 7
        %v3103 = vsub.s32 1, %v3102
        %v3104 = vrot.slane %v3075, %v3103
        %v3107 = vmul.f32 %v3100, %v3092
        %v3108 = vmul.f32 %v3104, %v3093
        %v3109 = vmul.f32 %v3100, %v3094
        %v3110 = vmul.f32 %v3104, %v3095
        %v3111 = vpack.c.bf16 %v3109, %v3107
        %v3112 = vpack.c.bf16 %v3110, %v3108
        %v3113 = vld [vmem:[#allocation14] sm:$0xff]
        %v3114 = vld [vmem:[#allocation14 + $0x8] sm:$0xff]
        %v3115 = vld [vmem:[#allocation14 + $0x10] sm:$0xff]
        %v3116 = vld [vmem:[#allocation14 + $0x18] sm:$0xff]
        %v3117 = vld [vmem:[#allocation14 + $0x20] sm:$0xff]
        %v3118 = vld [vmem:[#allocation14 + $0x28] sm:$0xff]
        %v3119 = vld [vmem:[#allocation14 + $0x30] sm:$0xff]
        %v3120 = vld [vmem:[#allocation14 + $0x38] sm:$0xff]
        %v3121 = vld [vmem:[#allocation14 + $0x40] sm:$0xff]
        %v3122 = vld [vmem:[#allocation14 + $0x48] sm:$0xff]
        %v3123 = vld [vmem:[#allocation14 + $0x50] sm:$0xff]
        %v3124 = vld [vmem:[#allocation14 + $0x58] sm:$0xff]
        %v3125 = vld [vmem:[#allocation14 + $0x60] sm:$0xff]
        %v3126 = vld [vmem:[#allocation14 + $0x68] sm:$0xff]
        %v3127 = vld [vmem:[#allocation14 + $0x70] sm:$0xff]
        %v3128 = vld [vmem:[#allocation14 + $0x78] sm:$0xff]
        %v3129 = vld [vmem:[#allocation14 + $0x80] sm:$0xff]
        %v3130 = vld [vmem:[#allocation14 + $0x88] sm:$0xff]
        %v3131 = vld [vmem:[#allocation14 + $0x90] sm:$0xff]
        %v3132 = vld [vmem:[#allocation14 + $0x98] sm:$0xff]
        %v3133 = vld [vmem:[#allocation14 + $0xa0] sm:$0xff]
        %v3134 = vld [vmem:[#allocation14 + $0xa8] sm:$0xff]
        %v3135 = vld [vmem:[#allocation14 + $0xb0] sm:$0xff]
        %v3136 = vld [vmem:[#allocation14 + $0xb8] sm:$0xff]
        %v3137 = vld [vmem:[#allocation14 + $0xc0] sm:$0xff]
        %v3138 = vld [vmem:[#allocation14 + $0xc8] sm:$0xff]
        %v3139 = vld [vmem:[#allocation14 + $0xd0] sm:$0xff]
        %v3140 = vld [vmem:[#allocation14 + $0xd8] sm:$0xff]
        %v3141 = vld [vmem:[#allocation14 + $0xe0] sm:$0xff]
        %v3142 = vld [vmem:[#allocation14 + $0xe8] sm:$0xff]
        %v3143 = vld [vmem:[#allocation14 + $0xf0] sm:$0xff]
        %v3144 = vld [vmem:[#allocation14 + $0xf8] sm:$0xff]
        %v3145 = vld [vmem:[#allocation14 + $0x100] sm:$0xff]
        %v3146 = vld [vmem:[#allocation14 + $0x108] sm:$0xff]
        %v3147 = vld [vmem:[#allocation14 + $0x110] sm:$0xff]
        %v3148 = vld [vmem:[#allocation14 + $0x118] sm:$0xff]
        %v3149 = vld [vmem:[#allocation14 + $0x120] sm:$0xff]
        %v3150 = vld [vmem:[#allocation14 + $0x128] sm:$0xff]
        %v3151 = vld [vmem:[#allocation14 + $0x130] sm:$0xff]
        %v3152 = vld [vmem:[#allocation14 + $0x138] sm:$0xff]
        %v3153 = vld [vmem:[#allocation14 + $0x140] sm:$0xff]
        %v3154 = vld [vmem:[#allocation14 + $0x148] sm:$0xff]
        %v3155 = vld [vmem:[#allocation14 + $0x150] sm:$0xff]
        %v3156 = vld [vmem:[#allocation14 + $0x158] sm:$0xff]
        %v3157 = vld [vmem:[#allocation14 + $0x160] sm:$0xff]
        %v3158 = vld [vmem:[#allocation14 + $0x168] sm:$0xff]
        %v3159 = vld [vmem:[#allocation14 + $0x170] sm:$0xff]
        %v3160 = vld [vmem:[#allocation14 + $0x178] sm:$0xff]
        %v3161 = vld [vmem:[#allocation14 + $0x180] sm:$0xff]
        %v3162 = vld [vmem:[#allocation14 + $0x188] sm:$0xff]
        %v3163 = vld [vmem:[#allocation14 + $0x190] sm:$0xff]
        %v3164 = vld [vmem:[#allocation14 + $0x198] sm:$0xff]
        %v3165 = vld [vmem:[#allocation14 + $0x1a0] sm:$0xff]
        %v3166 = vld [vmem:[#allocation14 + $0x1a8] sm:$0xff]
        %v3167 = vld [vmem:[#allocation14 + $0x1b0] sm:$0xff]
        %v3168 = vld [vmem:[#allocation14 + $0x1b8] sm:$0xff]
        %v3169 = vld [vmem:[#allocation14 + $0x1c0] sm:$0xff]
        %v3170 = vld [vmem:[#allocation14 + $0x1c8] sm:$0xff]
        %v3171 = vld [vmem:[#allocation14 + $0x1d0] sm:$0xff]
        %v3172 = vld [vmem:[#allocation14 + $0x1d8] sm:$0xff]
        %v3173 = vld [vmem:[#allocation14 + $0x1e0] sm:$0xff]
        %v3174 = vld [vmem:[#allocation14 + $0x1e8] sm:$0xff]
        %v3175 = vld [vmem:[#allocation14 + $0x1f0] sm:$0xff]
        %v3176 = vld [vmem:[#allocation14 + $0x1f8] sm:$0xff]
        %v3177 = vld [vmem:[#allocation14 + $0x200] sm:$0xff]
        %v3178 = vld [vmem:[#allocation14 + $0x208] sm:$0xff]
        %v3179 = vld [vmem:[#allocation14 + $0x210] sm:$0xff]
        %v3180 = vld [vmem:[#allocation14 + $0x218] sm:$0xff]
        %v3181 = vld [vmem:[#allocation14 + $0x220] sm:$0xff]
        %v3182 = vld [vmem:[#allocation14 + $0x228] sm:$0xff]
        %v3183 = vld [vmem:[#allocation14 + $0x230] sm:$0xff]
        %v3184 = vld [vmem:[#allocation14 + $0x238] sm:$0xff]
        %v3185 = vld [vmem:[#allocation14 + $0x240] sm:$0xff]
        %v3186 = vld [vmem:[#allocation14 + $0x248] sm:$0xff]
        %v3187 = vld [vmem:[#allocation14 + $0x250] sm:$0xff]
        %v3188 = vld [vmem:[#allocation14 + $0x258] sm:$0xff]
        %v3189 = vld [vmem:[#allocation14 + $0x260] sm:$0xff]
        %v3190 = vld [vmem:[#allocation14 + $0x268] sm:$0xff]
        %v3191 = vld [vmem:[#allocation14 + $0x270] sm:$0xff]
        %v3192 = vld [vmem:[#allocation14 + $0x278] sm:$0xff]
        %v3193 = vld [vmem:[#allocation14 + $0x280] sm:$0xff]
        %v3194 = vld [vmem:[#allocation14 + $0x288] sm:$0xff]
        %v3195 = vld [vmem:[#allocation14 + $0x290] sm:$0xff]
        %v3196 = vld [vmem:[#allocation14 + $0x298] sm:$0xff]
        %v3197 = vld [vmem:[#allocation14 + $0x2a0] sm:$0xff]
        %v3198 = vld [vmem:[#allocation14 + $0x2a8] sm:$0xff]
        %v3199 = vld [vmem:[#allocation14 + $0x2b0] sm:$0xff]
        %v3200 = vld [vmem:[#allocation14 + $0x2b8] sm:$0xff]
        %v3201 = vld [vmem:[#allocation14 + $0x2c0] sm:$0xff]
        %v3202 = vld [vmem:[#allocation14 + $0x2c8] sm:$0xff]
        %v3203 = vld [vmem:[#allocation14 + $0x2d0] sm:$0xff]
        %v3204 = vld [vmem:[#allocation14 + $0x2d8] sm:$0xff]
        %v3205 = vld [vmem:[#allocation14 + $0x2e0] sm:$0xff]
        %v3206 = vld [vmem:[#allocation14 + $0x2e8] sm:$0xff]
        %v3207 = vld [vmem:[#allocation14 + $0x2f0] sm:$0xff]
        %v3208 = vld [vmem:[#allocation14 + $0x2f8] sm:$0xff]
        %v3209 = vld [vmem:[#allocation14 + $0x300] sm:$0xff]
        %v3210 = vld [vmem:[#allocation14 + $0x308] sm:$0xff]
        %v3211 = vld [vmem:[#allocation14 + $0x310] sm:$0xff]
        %v3212 = vld [vmem:[#allocation14 + $0x318] sm:$0xff]
        %v3213 = vld [vmem:[#allocation14 + $0x320] sm:$0xff]
        %v3214 = vld [vmem:[#allocation14 + $0x328] sm:$0xff]
        %v3215 = vld [vmem:[#allocation14 + $0x330] sm:$0xff]
        %v3216 = vld [vmem:[#allocation14 + $0x338] sm:$0xff]
        %v3217 = vld [vmem:[#allocation14 + $0x340] sm:$0xff]
        %v3218 = vld [vmem:[#allocation14 + $0x348] sm:$0xff]
        %v3219 = vld [vmem:[#allocation14 + $0x350] sm:$0xff]
        %v3220 = vld [vmem:[#allocation14 + $0x358] sm:$0xff]
        %v3221 = vld [vmem:[#allocation14 + $0x360] sm:$0xff]
        %v3222 = vld [vmem:[#allocation14 + $0x368] sm:$0xff]
        %v3223 = vld [vmem:[#allocation14 + $0x370] sm:$0xff]
        %v3224 = vld [vmem:[#allocation14 + $0x378] sm:$0xff]
        %v3225 = vld [vmem:[#allocation14 + $0x380] sm:$0xff]
        %v3226 = vld [vmem:[#allocation14 + $0x388] sm:$0xff]
        %v3227 = vld [vmem:[#allocation14 + $0x390] sm:$0xff]
        %v3228 = vld [vmem:[#allocation14 + $0x398] sm:$0xff]
        %v3229 = vld [vmem:[#allocation14 + $0x3a0] sm:$0xff]
        %v3230 = vld [vmem:[#allocation14 + $0x3a8] sm:$0xff]
        %v3231 = vld [vmem:[#allocation14 + $0x3b0] sm:$0xff]
        %v3232 = vld [vmem:[#allocation14 + $0x3b8] sm:$0xff]
        %v3233 = vld [vmem:[#allocation14 + $0x3c0] sm:$0xff]
        %v3234 = vld [vmem:[#allocation14 + $0x3c8] sm:$0xff]
        %v3235 = vld [vmem:[#allocation14 + $0x3d0] sm:$0xff]
        %v3236 = vld [vmem:[#allocation14 + $0x3d8] sm:$0xff]
        %v3237 = vld [vmem:[#allocation14 + $0x3e0] sm:$0xff]
        %v3238 = vld [vmem:[#allocation14 + $0x3e8] sm:$0xff]
        %v3239 = vld [vmem:[#allocation14 + $0x3f0] sm:$0xff]
        %v3240 = vld [vmem:[#allocation14 + $0x3f8] sm:$0xff]
        %v3369 = vunpack.c.l.b16 %v3113
        %v3370 = vunpack.c.h.b16 %v3113
        %v3371 = vunpack.c.l.b16 %v3114
        %v3372 = vunpack.c.h.b16 %v3114
        %v3373 = vunpack.c.l.b16 %v3115
        %v3374 = vunpack.c.h.b16 %v3115
        %v3375 = vunpack.c.l.b16 %v3116
        %v3376 = vunpack.c.h.b16 %v3116
        %v3377 = vunpack.c.l.b16 %v3117
        %v3378 = vunpack.c.h.b16 %v3117
        %v3379 = vunpack.c.l.b16 %v3118
        %v3380 = vunpack.c.h.b16 %v3118
        %v3381 = vunpack.c.l.b16 %v3119
        %v3382 = vunpack.c.h.b16 %v3119
        %v3383 = vunpack.c.l.b16 %v3120
        %v3384 = vunpack.c.h.b16 %v3120
        %v3385 = vunpack.c.l.b16 %v3121
        %v3386 = vunpack.c.h.b16 %v3121
        %v3387 = vunpack.c.l.b16 %v3122
        %v3388 = vunpack.c.h.b16 %v3122
        %v3389 = vunpack.c.l.b16 %v3123
        %v3390 = vunpack.c.h.b16 %v3123
        %v3391 = vunpack.c.l.b16 %v3124
        %v3392 = vunpack.c.h.b16 %v3124
        %v3393 = vunpack.c.l.b16 %v3125
        %v3394 = vunpack.c.h.b16 %v3125
        %v3395 = vunpack.c.l.b16 %v3126
        %v3396 = vunpack.c.h.b16 %v3126
        %v3397 = vunpack.c.l.b16 %v3127
        %v3398 = vunpack.c.h.b16 %v3127
        %v3399 = vunpack.c.l.b16 %v3128
        %v3400 = vunpack.c.h.b16 %v3128
        %v3401 = vunpack.c.l.b16 %v3129
        %v3402 = vunpack.c.h.b16 %v3129
        %v3403 = vunpack.c.l.b16 %v3130
        %v3404 = vunpack.c.h.b16 %v3130
        %v3405 = vunpack.c.l.b16 %v3131
        %v3406 = vunpack.c.h.b16 %v3131
        %v3407 = vunpack.c.l.b16 %v3132
        %v3408 = vunpack.c.h.b16 %v3132
        %v3409 = vunpack.c.l.b16 %v3133
        %v3410 = vunpack.c.h.b16 %v3133
        %v3411 = vunpack.c.l.b16 %v3134
        %v3412 = vunpack.c.h.b16 %v3134
        %v3413 = vunpack.c.l.b16 %v3135
        %v3414 = vunpack.c.h.b16 %v3135
        %v3415 = vunpack.c.l.b16 %v3136
        %v3416 = vunpack.c.h.b16 %v3136
        %v3417 = vunpack.c.l.b16 %v3137
        %v3418 = vunpack.c.h.b16 %v3137
        %v3419 = vunpack.c.l.b16 %v3138
        %v3420 = vunpack.c.h.b16 %v3138
        %v3421 = vunpack.c.l.b16 %v3139
        %v3422 = vunpack.c.h.b16 %v3139
        %v3423 = vunpack.c.l.b16 %v3140
        %v3424 = vunpack.c.h.b16 %v3140
        %v3425 = vunpack.c.l.b16 %v3141
        %v3426 = vunpack.c.h.b16 %v3141
        %v3427 = vunpack.c.l.b16 %v3142
        %v3428 = vunpack.c.h.b16 %v3142
        %v3429 = vunpack.c.l.b16 %v3143
        %v3430 = vunpack.c.h.b16 %v3143
        %v3431 = vunpack.c.l.b16 %v3144
        %v3432 = vunpack.c.h.b16 %v3144
        %v3433 = vunpack.c.l.b16 %v3145
        %v3434 = vunpack.c.h.b16 %v3145
        %v3435 = vunpack.c.l.b16 %v3146
        %v3436 = vunpack.c.h.b16 %v3146
        %v3437 = vunpack.c.l.b16 %v3147
        %v3438 = vunpack.c.h.b16 %v3147
        %v3439 = vunpack.c.l.b16 %v3148
        %v3440 = vunpack.c.h.b16 %v3148
        %v3441 = vunpack.c.l.b16 %v3149
        %v3442 = vunpack.c.h.b16 %v3149
        %v3443 = vunpack.c.l.b16 %v3150
        %v3444 = vunpack.c.h.b16 %v3150
        %v3445 = vunpack.c.l.b16 %v3151
        %v3446 = vunpack.c.h.b16 %v3151
        %v3447 = vunpack.c.l.b16 %v3152
        %v3448 = vunpack.c.h.b16 %v3152
        %v3449 = vunpack.c.l.b16 %v3153
        %v3450 = vunpack.c.h.b16 %v3153
        %v3451 = vunpack.c.l.b16 %v3154
        %v3452 = vunpack.c.h.b16 %v3154
        %v3453 = vunpack.c.l.b16 %v3155
        %v3454 = vunpack.c.h.b16 %v3155
        %v3455 = vunpack.c.l.b16 %v3156
        %v3456 = vunpack.c.h.b16 %v3156
        %v3457 = vunpack.c.l.b16 %v3157
        %v3458 = vunpack.c.h.b16 %v3157
        %v3459 = vunpack.c.l.b16 %v3158
        %v3460 = vunpack.c.h.b16 %v3158
        %v3461 = vunpack.c.l.b16 %v3159
        %v3462 = vunpack.c.h.b16 %v3159
        %v3463 = vunpack.c.l.b16 %v3160
        %v3464 = vunpack.c.h.b16 %v3160
        %v3465 = vunpack.c.l.b16 %v3161
        %v3466 = vunpack.c.h.b16 %v3161
        %v3467 = vunpack.c.l.b16 %v3162
        %v3468 = vunpack.c.h.b16 %v3162
        %v3469 = vunpack.c.l.b16 %v3163
        %v3470 = vunpack.c.h.b16 %v3163
        %v3471 = vunpack.c.l.b16 %v3164
        %v3472 = vunpack.c.h.b16 %v3164
        %v3473 = vunpack.c.l.b16 %v3165
        %v3474 = vunpack.c.h.b16 %v3165
        %v3475 = vunpack.c.l.b16 %v3166
        %v3476 = vunpack.c.h.b16 %v3166
        %v3477 = vunpack.c.l.b16 %v3167
        %v3478 = vunpack.c.h.b16 %v3167
        %v3479 = vunpack.c.l.b16 %v3168
        %v3480 = vunpack.c.h.b16 %v3168
        %v3481 = vunpack.c.l.b16 %v3169
        %v3482 = vunpack.c.h.b16 %v3169
        %v3483 = vunpack.c.l.b16 %v3170
        %v3484 = vunpack.c.h.b16 %v3170
        %v3485 = vunpack.c.l.b16 %v3171
        %v3486 = vunpack.c.h.b16 %v3171
        %v3487 = vunpack.c.l.b16 %v3172
        %v3488 = vunpack.c.h.b16 %v3172
        %v3489 = vunpack.c.l.b16 %v3173
        %v3490 = vunpack.c.h.b16 %v3173
        %v3491 = vunpack.c.l.b16 %v3174
        %v3492 = vunpack.c.h.b16 %v3174
        %v3493 = vunpack.c.l.b16 %v3175
        %v3494 = vunpack.c.h.b16 %v3175
        %v3495 = vunpack.c.l.b16 %v3176
        %v3496 = vunpack.c.h.b16 %v3176
        %v3497 = vunpack.c.l.b16 %v3177
        %v3498 = vunpack.c.h.b16 %v3177
        %v3499 = vunpack.c.l.b16 %v3178
        %v3500 = vunpack.c.h.b16 %v3178
        %v3501 = vunpack.c.l.b16 %v3179
        %v3502 = vunpack.c.h.b16 %v3179
        %v3503 = vunpack.c.l.b16 %v3180
        %v3504 = vunpack.c.h.b16 %v3180
        %v3505 = vunpack.c.l.b16 %v3181
        %v3506 = vunpack.c.h.b16 %v3181
        %v3507 = vunpack.c.l.b16 %v3182
        %v3508 = vunpack.c.h.b16 %v3182
        %v3509 = vunpack.c.l.b16 %v3183
        %v3510 = vunpack.c.h.b16 %v3183
        %v3511 = vunpack.c.l.b16 %v3184
        %v3512 = vunpack.c.h.b16 %v3184
        %v3513 = vunpack.c.l.b16 %v3185
        %v3514 = vunpack.c.h.b16 %v3185
        %v3515 = vunpack.c.l.b16 %v3186
        %v3516 = vunpack.c.h.b16 %v3186
        %v3517 = vunpack.c.l.b16 %v3187
        %v3518 = vunpack.c.h.b16 %v3187
        %v3519 = vunpack.c.l.b16 %v3188
        %v3520 = vunpack.c.h.b16 %v3188
        %v3521 = vunpack.c.l.b16 %v3189
        %v3522 = vunpack.c.h.b16 %v3189
        %v3523 = vunpack.c.l.b16 %v3190
        %v3524 = vunpack.c.h.b16 %v3190
        %v3525 = vunpack.c.l.b16 %v3191
        %v3526 = vunpack.c.h.b16 %v3191
        %v3527 = vunpack.c.l.b16 %v3192
        %v3528 = vunpack.c.h.b16 %v3192
        %v3529 = vunpack.c.l.b16 %v3193
        %v3530 = vunpack.c.h.b16 %v3193
        %v3531 = vunpack.c.l.b16 %v3194
        %v3532 = vunpack.c.h.b16 %v3194
        %v3533 = vunpack.c.l.b16 %v3195
        %v3534 = vunpack.c.h.b16 %v3195
        %v3535 = vunpack.c.l.b16 %v3196
        %v3536 = vunpack.c.h.b16 %v3196
        %v3537 = vunpack.c.l.b16 %v3197
        %v3538 = vunpack.c.h.b16 %v3197
        %v3539 = vunpack.c.l.b16 %v3198
        %v3540 = vunpack.c.h.b16 %v3198
        %v3541 = vunpack.c.l.b16 %v3199
        %v3542 = vunpack.c.h.b16 %v3199
        %v3543 = vunpack.c.l.b16 %v3200
        %v3544 = vunpack.c.h.b16 %v3200
        %v3545 = vunpack.c.l.b16 %v3201
        %v3546 = vunpack.c.h.b16 %v3201
        %v3547 = vunpack.c.l.b16 %v3202
        %v3548 = vunpack.c.h.b16 %v3202
        %v3549 = vunpack.c.l.b16 %v3203
        %v3550 = vunpack.c.h.b16 %v3203
        %v3551 = vunpack.c.l.b16 %v3204
        %v3552 = vunpack.c.h.b16 %v3204
        %v3553 = vunpack.c.l.b16 %v3205
        %v3554 = vunpack.c.h.b16 %v3205
        %v3555 = vunpack.c.l.b16 %v3206
        %v3556 = vunpack.c.h.b16 %v3206
        %v3557 = vunpack.c.l.b16 %v3207
        %v3558 = vunpack.c.h.b16 %v3207
        %v3559 = vunpack.c.l.b16 %v3208
        %v3560 = vunpack.c.h.b16 %v3208
        %v3561 = vunpack.c.l.b16 %v3209
        %v3562 = vunpack.c.h.b16 %v3209
        %v3563 = vunpack.c.l.b16 %v3210
        %v3564 = vunpack.c.h.b16 %v3210
        %v3565 = vunpack.c.l.b16 %v3211
        %v3566 = vunpack.c.h.b16 %v3211
        %v3567 = vunpack.c.l.b16 %v3212
        %v3568 = vunpack.c.h.b16 %v3212
        %v3569 = vunpack.c.l.b16 %v3213
        %v3570 = vunpack.c.h.b16 %v3213
        %v3571 = vunpack.c.l.b16 %v3214
        %v3572 = vunpack.c.h.b16 %v3214
        %v3573 = vunpack.c.l.b16 %v3215
        %v3574 = vunpack.c.h.b16 %v3215
        %v3575 = vunpack.c.l.b16 %v3216
        %v3576 = vunpack.c.h.b16 %v3216
        %v3577 = vunpack.c.l.b16 %v3217
        %v3578 = vunpack.c.h.b16 %v3217
        %v3579 = vunpack.c.l.b16 %v3218
        %v3580 = vunpack.c.h.b16 %v3218
        %v3581 = vunpack.c.l.b16 %v3219
        %v3582 = vunpack.c.h.b16 %v3219
        %v3583 = vunpack.c.l.b16 %v3220
        %v3584 = vunpack.c.h.b16 %v3220
        %v3585 = vunpack.c.l.b16 %v3221
        %v3586 = vunpack.c.h.b16 %v3221
        %v3587 = vunpack.c.l.b16 %v3222
        %v3588 = vunpack.c.h.b16 %v3222
        %v3589 = vunpack.c.l.b16 %v3223
        %v3590 = vunpack.c.h.b16 %v3223
        %v3591 = vunpack.c.l.b16 %v3224
        %v3592 = vunpack.c.h.b16 %v3224
        %v3593 = vunpack.c.l.b16 %v3225
        %v3594 = vunpack.c.h.b16 %v3225
        %v3595 = vunpack.c.l.b16 %v3226
        %v3596 = vunpack.c.h.b16 %v3226
        %v3597 = vunpack.c.l.b16 %v3227
        %v3598 = vunpack.c.h.b16 %v3227
        %v3599 = vunpack.c.l.b16 %v3228
        %v3600 = vunpack.c.h.b16 %v3228
        %v3601 = vunpack.c.l.b16 %v3229
        %v3602 = vunpack.c.h.b16 %v3229
        %v3603 = vunpack.c.l.b16 %v3230
        %v3604 = vunpack.c.h.b16 %v3230
        %v3605 = vunpack.c.l.b16 %v3231
        %v3606 = vunpack.c.h.b16 %v3231
        %v3607 = vunpack.c.l.b16 %v3232
        %v3608 = vunpack.c.h.b16 %v3232
        %v3609 = vunpack.c.l.b16 %v3233
        %v3610 = vunpack.c.h.b16 %v3233
        %v3611 = vunpack.c.l.b16 %v3234
        %v3612 = vunpack.c.h.b16 %v3234
        %v3613 = vunpack.c.l.b16 %v3235
        %v3614 = vunpack.c.h.b16 %v3235
        %v3615 = vunpack.c.l.b16 %v3236
        %v3616 = vunpack.c.h.b16 %v3236
        %v3617 = vunpack.c.l.b16 %v3237
        %v3618 = vunpack.c.h.b16 %v3237
        %v3619 = vunpack.c.l.b16 %v3238
        %v3620 = vunpack.c.h.b16 %v3238
        %v3621 = vunpack.c.l.b16 %v3239
        %v3622 = vunpack.c.h.b16 %v3239
        %v3623 = vunpack.c.l.b16 %v3240
        %v3624 = vunpack.c.h.b16 %v3240
        %v3625 = vpack.c.b16 %v3377, %v3369
        %v3626 = vpack.c.b16 %v3378, %v3370
        %v3627 = vpack.c.b16 %v3379, %v3371
        %v3628 = vpack.c.b16 %v3380, %v3372
        %v3629 = vpack.c.b16 %v3381, %v3373
        %v3630 = vpack.c.b16 %v3382, %v3374
        %v3631 = vpack.c.b16 %v3383, %v3375
        %v3632 = vpack.c.b16 %v3384, %v3376
        %v3633 = vpack.c.b16 %v3393, %v3385
        %v3634 = vpack.c.b16 %v3394, %v3386
        %v3635 = vpack.c.b16 %v3395, %v3387
        %v3636 = vpack.c.b16 %v3396, %v3388
        %v3637 = vpack.c.b16 %v3397, %v3389
        %v3638 = vpack.c.b16 %v3398, %v3390
        %v3639 = vpack.c.b16 %v3399, %v3391
        %v3640 = vpack.c.b16 %v3400, %v3392
        %v3641 = vpack.c.b16 %v3409, %v3401
        %v3642 = vpack.c.b16 %v3410, %v3402
        %v3643 = vpack.c.b16 %v3411, %v3403
        %v3644 = vpack.c.b16 %v3412, %v3404
        %v3645 = vpack.c.b16 %v3413, %v3405
        %v3646 = vpack.c.b16 %v3414, %v3406
        %v3647 = vpack.c.b16 %v3415, %v3407
        %v3648 = vpack.c.b16 %v3416, %v3408
        %v3649 = vpack.c.b16 %v3425, %v3417
        %v3650 = vpack.c.b16 %v3426, %v3418
        %v3651 = vpack.c.b16 %v3427, %v3419
        %v3652 = vpack.c.b16 %v3428, %v3420
        %v3653 = vpack.c.b16 %v3429, %v3421
        %v3654 = vpack.c.b16 %v3430, %v3422
        %v3655 = vpack.c.b16 %v3431, %v3423
        %v3656 = vpack.c.b16 %v3432, %v3424
        %v3657 = vpack.c.b16 %v3441, %v3433
        %v3658 = vpack.c.b16 %v3442, %v3434
        %v3659 = vpack.c.b16 %v3443, %v3435
        %v3660 = vpack.c.b16 %v3444, %v3436
        %v3661 = vpack.c.b16 %v3445, %v3437
        %v3662 = vpack.c.b16 %v3446, %v3438
        %v3663 = vpack.c.b16 %v3447, %v3439
        %v3664 = vpack.c.b16 %v3448, %v3440
        %v3665 = vpack.c.b16 %v3457, %v3449
        %v3666 = vpack.c.b16 %v3458, %v3450
        %v3667 = vpack.c.b16 %v3459, %v3451
        %v3668 = vpack.c.b16 %v3460, %v3452
        %v3669 = vpack.c.b16 %v3461, %v3453
        %v3670 = vpack.c.b16 %v3462, %v3454
        %v3671 = vpack.c.b16 %v3463, %v3455
        %v3672 = vpack.c.b16 %v3464, %v3456
        %v3673 = vpack.c.b16 %v3473, %v3465
        %v3674 = vpack.c.b16 %v3474, %v3466
        %v3675 = vpack.c.b16 %v3475, %v3467
        %v3676 = vpack.c.b16 %v3476, %v3468
        %v3677 = vpack.c.b16 %v3477, %v3469
        %v3678 = vpack.c.b16 %v3478, %v3470
        %v3679 = vpack.c.b16 %v3479, %v3471
        %v3680 = vpack.c.b16 %v3480, %v3472
        %v3681 = vpack.c.b16 %v3489, %v3481
        %v3682 = vpack.c.b16 %v3490, %v3482
        %v3683 = vpack.c.b16 %v3491, %v3483
        %v3684 = vpack.c.b16 %v3492, %v3484
        %v3685 = vpack.c.b16 %v3493, %v3485
        %v3686 = vpack.c.b16 %v3494, %v3486
        %v3687 = vpack.c.b16 %v3495, %v3487
        %v3688 = vpack.c.b16 %v3496, %v3488
        %v3689 = vpack.c.b16 %v3505, %v3497
        %v3690 = vpack.c.b16 %v3506, %v3498
        %v3691 = vpack.c.b16 %v3507, %v3499
        %v3692 = vpack.c.b16 %v3508, %v3500
        %v3693 = vpack.c.b16 %v3509, %v3501
        %v3694 = vpack.c.b16 %v3510, %v3502
        %v3695 = vpack.c.b16 %v3511, %v3503
        %v3696 = vpack.c.b16 %v3512, %v3504
        %v3697 = vpack.c.b16 %v3521, %v3513
        %v3698 = vpack.c.b16 %v3522, %v3514
        %v3699 = vpack.c.b16 %v3523, %v3515
        %v3700 = vpack.c.b16 %v3524, %v3516
        %v3701 = vpack.c.b16 %v3525, %v3517
        %v3702 = vpack.c.b16 %v3526, %v3518
        %v3703 = vpack.c.b16 %v3527, %v3519
        %v3704 = vpack.c.b16 %v3528, %v3520
        %v3705 = vpack.c.b16 %v3537, %v3529
        %v3706 = vpack.c.b16 %v3538, %v3530
        %v3707 = vpack.c.b16 %v3539, %v3531
        %v3708 = vpack.c.b16 %v3540, %v3532
        %v3709 = vpack.c.b16 %v3541, %v3533
        %v3710 = vpack.c.b16 %v3542, %v3534
        %v3711 = vpack.c.b16 %v3543, %v3535
        %v3712 = vpack.c.b16 %v3544, %v3536
        %v3713 = vpack.c.b16 %v3553, %v3545
        %v3714 = vpack.c.b16 %v3554, %v3546
        %v3715 = vpack.c.b16 %v3555, %v3547
        %v3716 = vpack.c.b16 %v3556, %v3548
        %v3717 = vpack.c.b16 %v3557, %v3549
        %v3718 = vpack.c.b16 %v3558, %v3550
        %v3719 = vpack.c.b16 %v3559, %v3551
        %v3720 = vpack.c.b16 %v3560, %v3552
        %v3721 = vpack.c.b16 %v3569, %v3561
        %v3722 = vpack.c.b16 %v3570, %v3562
        %v3723 = vpack.c.b16 %v3571, %v3563
        %v3724 = vpack.c.b16 %v3572, %v3564
        %v3725 = vpack.c.b16 %v3573, %v3565
        %v3726 = vpack.c.b16 %v3574, %v3566
        %v3727 = vpack.c.b16 %v3575, %v3567
        %v3728 = vpack.c.b16 %v3576, %v3568
        %v3729 = vpack.c.b16 %v3585, %v3577
        %v3730 = vpack.c.b16 %v3586, %v3578
        %v3731 = vpack.c.b16 %v3587, %v3579
        %v3732 = vpack.c.b16 %v3588, %v3580
        %v3733 = vpack.c.b16 %v3589, %v3581
        %v3734 = vpack.c.b16 %v3590, %v3582
        %v3735 = vpack.c.b16 %v3591, %v3583
        %v3736 = vpack.c.b16 %v3592, %v3584
        %v3737 = vpack.c.b16 %v3601, %v3593
        %v3738 = vpack.c.b16 %v3602, %v3594
        %v3739 = vpack.c.b16 %v3603, %v3595
        %v3740 = vpack.c.b16 %v3604, %v3596
        %v3741 = vpack.c.b16 %v3605, %v3597
        %v3742 = vpack.c.b16 %v3606, %v3598
        %v3743 = vpack.c.b16 %v3607, %v3599
        %v3744 = vpack.c.b16 %v3608, %v3600
        %v3745 = vpack.c.b16 %v3617, %v3609
        %v3746 = vpack.c.b16 %v3618, %v3610
        %v3747 = vpack.c.b16 %v3619, %v3611
        %v3748 = vpack.c.b16 %v3620, %v3612
        %v3749 = vpack.c.b16 %v3621, %v3613
        %v3750 = vpack.c.b16 %v3622, %v3614
        %v3751 = vpack.c.b16 %v3623, %v3615
        %v3752 = vpack.c.b16 %v3624, %v3616
        %3881 = vmatprep.subr.bf16.mxu0 %v3626
        %3882 = vmatpush1.bf16.msra.mxu0 %v3625
        %3883 = vmatprep.subr.bf16.mxu0 %v3634
        %3884 = vmatpush1.bf16.msra.mxu0 %v3633
        %3885 = vmatprep.subr.bf16.mxu0 %v3642
        %3886 = vmatpush1.bf16.msra.mxu0 %v3641
        %3887 = vmatprep.subr.bf16.mxu0 %v3650
        %3888 = vmatpush1.bf16.msra.mxu0 %v3649
        %3889 = vmatprep.subr.bf16.mxu0 %v3658
        %3890 = vmatpush1.bf16.msra.mxu0 %v3657
        %3891 = vmatprep.subr.bf16.mxu0 %v3666
        %3892 = vmatpush1.bf16.msra.mxu0 %v3665
        %3893 = vmatprep.subr.bf16.mxu0 %v3674
        %3894 = vmatpush1.bf16.msra.mxu0 %v3673
        %3895 = vmatprep.subr.bf16.mxu0 %v3682
        %3896 = vmatpush1.bf16.msra.mxu0 %v3681
        %3897 = vmatprep.subr.bf16.mxu0 %v3690
        %3898 = vmatpush1.bf16.msra.mxu0 %v3689
        %3899 = vmatprep.subr.bf16.mxu0 %v3698
        %3900 = vmatpush1.bf16.msra.mxu0 %v3697
        %3901 = vmatprep.subr.bf16.mxu0 %v3706
        %3902 = vmatpush1.bf16.msra.mxu0 %v3705
        %3903 = vmatprep.subr.bf16.mxu0 %v3714
        %3904 = vmatpush1.bf16.msra.mxu0 %v3713
        %3905 = vmatprep.subr.bf16.mxu0 %v3722
        %3906 = vmatpush1.bf16.msra.mxu0 %v3721
        %3907 = vmatprep.subr.bf16.mxu0 %v3730
        %3908 = vmatpush1.bf16.msra.mxu0 %v3729
        %3909 = vmatprep.subr.bf16.mxu0 %v3738
        %3910 = vmatpush1.bf16.msra.mxu0 %v3737
        %3911 = vmatprep.subr.bf16.mxu0 %v3746
        %3912 = vmatpush1.bf16.msra.mxu0 %v3745
        %3913 = vmatprep.mubr.bf16.mxu0 %v3112
        %3914 = vmatmul.mubr.bf16.gmra.mrb[0].mxu0 %v3111
        %v3915 = vpop.f32.mrb[0].mxu0
        %v3916 = vadd.f32 0.0, %v3915
        %v3917 = vpop.f32.mrb[0].mxu0
        %v3918 = vadd.f32 0.0, %v3917
        %v3919 = vpop.f32.mrb[0].mxu0
        %v3920 = vadd.f32 0.0, %v3919
        %v3921 = vpop.f32.mrb[0].mxu0
        %v3922 = vadd.f32 0.0, %v3921
        %3923 = vdwg.mxu0
        %3924 = vmatprep.subr.bf16.mxu0 %v3628
        %3925 = vmatpush1.bf16.msra.mxu0 %v3627
        %3926 = vmatprep.subr.bf16.mxu0 %v3636
        %3927 = vmatpush1.bf16.msra.mxu0 %v3635
        %3928 = vmatprep.subr.bf16.mxu0 %v3644
        %3929 = vmatpush1.bf16.msra.mxu0 %v3643
        %3930 = vmatprep.subr.bf16.mxu0 %v3652
        %3931 = vmatpush1.bf16.msra.mxu0 %v3651
        %3932 = vmatprep.subr.bf16.mxu0 %v3660
        %3933 = vmatpush1.bf16.msra.mxu0 %v3659
        %3934 = vmatprep.subr.bf16.mxu0 %v3668
        %3935 = vmatpush1.bf16.msra.mxu0 %v3667
        %3936 = vmatprep.subr.bf16.mxu0 %v3676
        %3937 = vmatpush1.bf16.msra.mxu0 %v3675
        %3938 = vmatprep.subr.bf16.mxu0 %v3684
        %3939 = vmatpush1.bf16.msra.mxu0 %v3683
        %3940 = vmatprep.subr.bf16.mxu0 %v3692
        %3941 = vmatpush1.bf16.msra.mxu0 %v3691
        %3942 = vmatprep.subr.bf16.mxu0 %v3700
        %3943 = vmatpush1.bf16.msra.mxu0 %v3699
        %3944 = vmatprep.subr.bf16.mxu0 %v3708
        %3945 = vmatpush1.bf16.msra.mxu0 %v3707
        %3946 = vmatprep.subr.bf16.mxu0 %v3716
        %3947 = vmatpush1.bf16.msra.mxu0 %v3715
        %3948 = vmatprep.subr.bf16.mxu0 %v3724
        %3949 = vmatpush1.bf16.msra.mxu0 %v3723
        %3950 = vmatprep.subr.bf16.mxu0 %v3732
        %3951 = vmatpush1.bf16.msra.mxu0 %v3731
        %3952 = vmatprep.subr.bf16.mxu0 %v3740
        %3953 = vmatpush1.bf16.msra.mxu0 %v3739
        %3954 = vmatprep.subr.bf16.mxu0 %v3748
        %3955 = vmatpush1.bf16.msra.mxu0 %v3747
        %3956 = vmatprep.mubr.bf16.mxu0 %v3112
        %3957 = vmatmul.mubr.bf16.gmra.mrb[0].mxu0 %v3111
        %v3958 = vpop.f32.mrb[0].mxu0
        %v3959 = vadd.f32 0.0, %v3958
        %v3960 = vpop.f32.mrb[0].mxu0
        %v3961 = vadd.f32 0.0, %v3960
        %v3962 = vpop.f32.mrb[0].mxu0
        %v3963 = vadd.f32 0.0, %v3962
        %v3964 = vpop.f32.mrb[0].mxu0
        %v3965 = vadd.f32 0.0, %v3964
        %3966 = vdwg.mxu0
        %3967 = vmatprep.subr.bf16.mxu0 %v3630
        %3968 = vmatpush1.bf16.msra.mxu0 %v3629
        %3969 = vmatprep.subr.bf16.mxu0 %v3638
        %3970 = vmatpush1.bf16.msra.mxu0 %v3637
        %3971 = vmatprep.subr.bf16.mxu0 %v3646
        %3972 = vmatpush1.bf16.msra.mxu0 %v3645
        %3973 = vmatprep.subr.bf16.mxu0 %v3654
        %3974 = vmatpush1.bf16.msra.mxu0 %v3653
        %3975 = vmatprep.subr.bf16.mxu0 %v3662
        %3976 = vmatpush1.bf16.msra.mxu0 %v3661
        %3977 = vmatprep.subr.bf16.mxu0 %v3670
        %3978 = vmatpush1.bf16.msra.mxu0 %v3669
        %3979 = vmatprep.subr.bf16.mxu0 %v3678
        %3980 = vmatpush1.bf16.msra.mxu0 %v3677
        %3981 = vmatprep.subr.bf16.mxu0 %v3686
        %3982 = vmatpush1.bf16.msra.mxu0 %v3685
        %3983 = vmatprep.subr.bf16.mxu0 %v3694
        %3984 = vmatpush1.bf16.msra.mxu0 %v3693
        %3985 = vmatprep.subr.bf16.mxu0 %v3702
        %3986 = vmatpush1.bf16.msra.mxu0 %v3701
        %3987 = vmatprep.subr.bf16.mxu0 %v3710
        %3988 = vmatpush1.bf16.msra.mxu0 %v3709
        %3989 = vmatprep.subr.bf16.mxu0 %v3718
        %3990 = vmatpush1.bf16.msra.mxu0 %v3717
        %3991 = vmatprep.subr.bf16.mxu0 %v3726
        %3992 = vmatpush1.bf16.msra.mxu0 %v3725
        %3993 = vmatprep.subr.bf16.mxu0 %v3734
        %3994 = vmatpush1.bf16.msra.mxu0 %v3733
        %3995 = vmatprep.subr.bf16.mxu0 %v3742
        %3996 = vmatpush1.bf16.msra.mxu0 %v3741
        %3997 = vmatprep.subr.bf16.mxu0 %v3750
        %3998 = vmatpush1.bf16.msra.mxu0 %v3749
        %3999 = vmatprep.mubr.bf16.mxu0 %v3112
        %4000 = vmatmul.mubr.bf16.gmra.mrb[0].mxu0 %v3111
        %v4001 = vpop.f32.mrb[0].mxu0
        %v4002 = vadd.f32 0.0, %v4001
        %v4003 = vpop.f32.mrb[0].mxu0
        %v4004 = vadd.f32 0.0, %v4003
        %v4005 = vpop.f32.mrb[0].mxu0
        %v4006 = vadd.f32 0.0, %v4005
        %v4007 = vpop.f32.mrb[0].mxu0
        %v4008 = vadd.f32 0.0, %v4007
        %4009 = vdwg.mxu0
        %4010 = vmatprep.subr.bf16.mxu0 %v3632
        %4011 = vmatpush1.bf16.msra.mxu0 %v3631
        %4012 = vmatprep.subr.bf16.mxu0 %v3640
        %4013 = vmatpush1.bf16.msra.mxu0 %v3639
        %4014 = vmatprep.subr.bf16.mxu0 %v3648
        %4015 = vmatpush1.bf16.msra.mxu0 %v3647
        %4016 = vmatprep.subr.bf16.mxu0 %v3656
        %4017 = vmatpush1.bf16.msra.mxu0 %v3655
        %4018 = vmatprep.subr.bf16.mxu0 %v3664
        %4019 = vmatpush1.bf16.msra.mxu0 %v3663
        %4020 = vmatprep.subr.bf16.mxu0 %v3672
        %4021 = vmatpush1.bf16.msra.mxu0 %v3671
        %4022 = vmatprep.subr.bf16.mxu0 %v3680
        %4023 = vmatpush1.bf16.msra.mxu0 %v3679
        %4024 = vmatprep.subr.bf16.mxu0 %v3688
        %4025 = vmatpush1.bf16.msra.mxu0 %v3687
        %4026 = vmatprep.subr.bf16.mxu0 %v3696
        %4027 = vmatpush1.bf16.msra.mxu0 %v3695
        %4028 = vmatprep.subr.bf16.mxu0 %v3704
        %4029 = vmatpush1.bf16.msra.mxu0 %v3703
        %4030 = vmatprep.subr.bf16.mxu0 %v3712
        %4031 = vmatpush1.bf16.msra.mxu0 %v3711
        %4032 = vmatprep.subr.bf16.mxu0 %v3720
        %4033 = vmatpush1.bf16.msra.mxu0 %v3719
        %4034 = vmatprep.subr.bf16.mxu0 %v3728
        %4035 = vmatpush1.bf16.msra.mxu0 %v3727
        %4036 = vmatprep.subr.bf16.mxu0 %v3736
        %4037 = vmatpush1.bf16.msra.mxu0 %v3735
        %4038 = vmatprep.subr.bf16.mxu0 %v3744
        %4039 = vmatpush1.bf16.msra.mxu0 %v3743
        %4040 = vmatprep.subr.bf16.mxu0 %v3752
        %4041 = vmatpush1.bf16.msra.mxu0 %v3751
        %4042 = vmatprep.mubr.bf16.mxu0 %v3112
        %4043 = vmatmul.mubr.bf16.gmra.mrb[0].mxu0 %v3111
        %v4044 = vpop.f32.mrb[0].mxu0
        %v4045 = vadd.f32 0.0, %v4044
        %v4046 = vpop.f32.mrb[0].mxu0
        %v4047 = vadd.f32 0.0, %v4046
        %v4048 = vpop.f32.mrb[0].mxu0
        %v4049 = vadd.f32 0.0, %v4048
        %v4050 = vpop.f32.mrb[0].mxu0
        %v4051 = vadd.f32 0.0, %v4050
        %4052 = vdwg.mxu0
        %v4053 = vmax.f32 %v3916, 0.0
        %v4054 = vmax.f32 %v3918, 0.0
        %v4055 = vmax.f32 %v3959, 0.0
        %v4056 = vmax.f32 %v3961, 0.0
        %v4057 = vmax.f32 %v4002, 0.0
        %v4058 = vmax.f32 %v4004, 0.0
        %v4059 = vmax.f32 %v4045, 0.0
        %v4060 = vmax.f32 %v4047, 0.0
        %v4061 = vmax.f32 %v3920, 0.0
        %v4062 = vmax.f32 %v3922, 0.0
        %v4063 = vmax.f32 %v3963, 0.0
        %v4064 = vmax.f32 %v3965, 0.0
        %v4065 = vmax.f32 %v4006, 0.0
        %v4066 = vmax.f32 %v4008, 0.0
        %v4067 = vmax.f32 %v4049, 0.0
        %v4068 = vmax.f32 %v4051, 0.0
        %v4069 = vpack.c.bf16 %v4061, %v4053
        %v4070 = vpack.c.bf16 %v4062, %v4054
        %v4071 = vpack.c.bf16 %v4063, %v4055
        %v4072 = vpack.c.bf16 %v4064, %v4056
        %v4073 = vpack.c.bf16 %v4065, %v4057
        %v4074 = vpack.c.bf16 %v4066, %v4058
        %v4075 = vpack.c.bf16 %v4067, %v4059
        %v4076 = vpack.c.bf16 %v4068, %v4060
        %v4077 = vld [vmem:[#allocation16] sm:$0xff]
        %v4078 = vld [vmem:[#allocation16 + $0x8] sm:$0xff]
        %v4079 = vld [vmem:[#allocation16 + $0x10] sm:$0xff]
        %v4080 = vld [vmem:[#allocation16 + $0x18] sm:$0xff]
        %v4081 = vld [vmem:[#allocation16 + $0x20] sm:$0xff]
        %v4082 = vld [vmem:[#allocation16 + $0x28] sm:$0xff]
        %v4083 = vld [vmem:[#allocation16 + $0x30] sm:$0xff]
        %v4084 = vld [vmem:[#allocation16 + $0x38] sm:$0xff]
        %v4085 = vld [vmem:[#allocation16 + $0x40] sm:$0xff]
        %v4086 = vld [vmem:[#allocation16 + $0x48] sm:$0xff]
        %v4087 = vld [vmem:[#allocation16 + $0x50] sm:$0xff]
        %v4088 = vld [vmem:[#allocation16 + $0x58] sm:$0xff]
        %v4089 = vld [vmem:[#allocation16 + $0x60] sm:$0xff]
        %v4090 = vld [vmem:[#allocation16 + $0x68] sm:$0xff]
        %v4091 = vld [vmem:[#allocation16 + $0x70] sm:$0xff]
        %v4092 = vld [vmem:[#allocation16 + $0x78] sm:$0xff]
        %v4093 = vld [vmem:[#allocation16 + $0x80] sm:$0xff]
        %v4094 = vld [vmem:[#allocation16 + $0x88] sm:$0xff]
        %v4095 = vld [vmem:[#allocation16 + $0x90] sm:$0xff]
        %v4096 = vld [vmem:[#allocation16 + $0x98] sm:$0xff]
        %v4097 = vld [vmem:[#allocation16 + $0xa0] sm:$0xff]
        %v4098 = vld [vmem:[#allocation16 + $0xa8] sm:$0xff]
        %v4099 = vld [vmem:[#allocation16 + $0xb0] sm:$0xff]
        %v4100 = vld [vmem:[#allocation16 + $0xb8] sm:$0xff]
        %v4101 = vld [vmem:[#allocation16 + $0xc0] sm:$0xff]
        %v4102 = vld [vmem:[#allocation16 + $0xc8] sm:$0xff]
        %v4103 = vld [vmem:[#allocation16 + $0xd0] sm:$0xff]
        %v4104 = vld [vmem:[#allocation16 + $0xd8] sm:$0xff]
        %v4105 = vld [vmem:[#allocation16 + $0xe0] sm:$0xff]
        %v4106 = vld [vmem:[#allocation16 + $0xe8] sm:$0xff]
        %v4107 = vld [vmem:[#allocation16 + $0xf0] sm:$0xff]
        %v4108 = vld [vmem:[#allocation16 + $0xf8] sm:$0xff]
        %v4109 = vld [vmem:[#allocation16 + $0x100] sm:$0xff]
        %v4110 = vld [vmem:[#allocation16 + $0x108] sm:$0xff]
        %v4111 = vld [vmem:[#allocation16 + $0x110] sm:$0xff]
        %v4112 = vld [vmem:[#allocation16 + $0x118] sm:$0xff]
        %v4113 = vld [vmem:[#allocation16 + $0x120] sm:$0xff]
        %v4114 = vld [vmem:[#allocation16 + $0x128] sm:$0xff]
        %v4115 = vld [vmem:[#allocation16 + $0x130] sm:$0xff]
        %v4116 = vld [vmem:[#allocation16 + $0x138] sm:$0xff]
        %v4117 = vld [vmem:[#allocation16 + $0x140] sm:$0xff]
        %v4118 = vld [vmem:[#allocation16 + $0x148] sm:$0xff]
        %v4119 = vld [vmem:[#allocation16 + $0x150] sm:$0xff]
        %v4120 = vld [vmem:[#allocation16 + $0x158] sm:$0xff]
        %v4121 = vld [vmem:[#allocation16 + $0x160] sm:$0xff]
        %v4122 = vld [vmem:[#allocation16 + $0x168] sm:$0xff]
        %v4123 = vld [vmem:[#allocation16 + $0x170] sm:$0xff]
        %v4124 = vld [vmem:[#allocation16 + $0x178] sm:$0xff]
        %v4125 = vld [vmem:[#allocation16 + $0x180] sm:$0xff]
        %v4126 = vld [vmem:[#allocation16 + $0x188] sm:$0xff]
        %v4127 = vld [vmem:[#allocation16 + $0x190] sm:$0xff]
        %v4128 = vld [vmem:[#allocation16 + $0x198] sm:$0xff]
        %v4129 = vld [vmem:[#allocation16 + $0x1a0] sm:$0xff]
        %v4130 = vld [vmem:[#allocation16 + $0x1a8] sm:$0xff]
        %v4131 = vld [vmem:[#allocation16 + $0x1b0] sm:$0xff]
        %v4132 = vld [vmem:[#allocation16 + $0x1b8] sm:$0xff]
        %v4133 = vld [vmem:[#allocation16 + $0x1c0] sm:$0xff]
        %v4134 = vld [vmem:[#allocation16 + $0x1c8] sm:$0xff]
        %v4135 = vld [vmem:[#allocation16 + $0x1d0] sm:$0xff]
        %v4136 = vld [vmem:[#allocation16 + $0x1d8] sm:$0xff]
        %v4137 = vld [vmem:[#allocation16 + $0x1e0] sm:$0xff]
        %v4138 = vld [vmem:[#allocation16 + $0x1e8] sm:$0xff]
        %v4139 = vld [vmem:[#allocation16 + $0x1f0] sm:$0xff]
        %v4140 = vld [vmem:[#allocation16 + $0x1f8] sm:$0xff]
        %v4141 = vld [vmem:[#allocation16 + $0x200] sm:$0xff]
        %v4142 = vld [vmem:[#allocation16 + $0x208] sm:$0xff]
        %v4143 = vld [vmem:[#allocation16 + $0x210] sm:$0xff]
        %v4144 = vld [vmem:[#allocation16 + $0x218] sm:$0xff]
        %v4145 = vld [vmem:[#allocation16 + $0x220] sm:$0xff]
        %v4146 = vld [vmem:[#allocation16 + $0x228] sm:$0xff]
        %v4147 = vld [vmem:[#allocation16 + $0x230] sm:$0xff]
        %v4148 = vld [vmem:[#allocation16 + $0x238] sm:$0xff]
        %v4149 = vld [vmem:[#allocation16 + $0x240] sm:$0xff]
        %v4150 = vld [vmem:[#allocation16 + $0x248] sm:$0xff]
        %v4151 = vld [vmem:[#allocation16 + $0x250] sm:$0xff]
        %v4152 = vld [vmem:[#allocation16 + $0x258] sm:$0xff]
        %v4153 = vld [vmem:[#allocation16 + $0x260] sm:$0xff]
        %v4154 = vld [vmem:[#allocation16 + $0x268] sm:$0xff]
        %v4155 = vld [vmem:[#allocation16 + $0x270] sm:$0xff]
        %v4156 = vld [vmem:[#allocation16 + $0x278] sm:$0xff]
        %v4157 = vld [vmem:[#allocation16 + $0x280] sm:$0xff]
        %v4158 = vld [vmem:[#allocation16 + $0x288] sm:$0xff]
        %v4159 = vld [vmem:[#allocation16 + $0x290] sm:$0xff]
        %v4160 = vld [vmem:[#allocation16 + $0x298] sm:$0xff]
        %v4161 = vld [vmem:[#allocation16 + $0x2a0] sm:$0xff]
        %v4162 = vld [vmem:[#allocation16 + $0x2a8] sm:$0xff]
        %v4163 = vld [vmem:[#allocation16 + $0x2b0] sm:$0xff]
        %v4164 = vld [vmem:[#allocation16 + $0x2b8] sm:$0xff]
        %v4165 = vld [vmem:[#allocation16 + $0x2c0] sm:$0xff]
        %v4166 = vld [vmem:[#allocation16 + $0x2c8] sm:$0xff]
        %v4167 = vld [vmem:[#allocation16 + $0x2d0] sm:$0xff]
        %v4168 = vld [vmem:[#allocation16 + $0x2d8] sm:$0xff]
        %v4169 = vld [vmem:[#allocation16 + $0x2e0] sm:$0xff]
        %v4170 = vld [vmem:[#allocation16 + $0x2e8] sm:$0xff]
        %v4171 = vld [vmem:[#allocation16 + $0x2f0] sm:$0xff]
        %v4172 = vld [vmem:[#allocation16 + $0x2f8] sm:$0xff]
        %v4173 = vld [vmem:[#allocation16 + $0x300] sm:$0xff]
        %v4174 = vld [vmem:[#allocation16 + $0x308] sm:$0xff]
        %v4175 = vld [vmem:[#allocation16 + $0x310] sm:$0xff]
        %v4176 = vld [vmem:[#allocation16 + $0x318] sm:$0xff]
        %v4177 = vld [vmem:[#allocation16 + $0x320] sm:$0xff]
        %v4178 = vld [vmem:[#allocation16 + $0x328] sm:$0xff]
        %v4179 = vld [vmem:[#allocation16 + $0x330] sm:$0xff]
        %v4180 = vld [vmem:[#allocation16 + $0x338] sm:$0xff]
        %v4181 = vld [vmem:[#allocation16 + $0x340] sm:$0xff]
        %v4182 = vld [vmem:[#allocation16 + $0x348] sm:$0xff]
        %v4183 = vld [vmem:[#allocation16 + $0x350] sm:$0xff]
        %v4184 = vld [vmem:[#allocation16 + $0x358] sm:$0xff]
        %v4185 = vld [vmem:[#allocation16 + $0x360] sm:$0xff]
        %v4186 = vld [vmem:[#allocation16 + $0x368] sm:$0xff]
        %v4187 = vld [vmem:[#allocation16 + $0x370] sm:$0xff]
        %v4188 = vld [vmem:[#allocation16 + $0x378] sm:$0xff]
        %v4189 = vld [vmem:[#allocation16 + $0x380] sm:$0xff]
        %v4190 = vld [vmem:[#allocation16 + $0x388] sm:$0xff]
        %v4191 = vld [vmem:[#allocation16 + $0x390] sm:$0xff]
        %v4192 = vld [vmem:[#allocation16 + $0x398] sm:$0xff]
        %v4193 = vld [vmem:[#allocation16 + $0x3a0] sm:$0xff]
        %v4194 = vld [vmem:[#allocation16 + $0x3a8] sm:$0xff]
        %v4195 = vld [vmem:[#allocation16 + $0x3b0] sm:$0xff]
        %v4196 = vld [vmem:[#allocation16 + $0x3b8] sm:$0xff]
        %v4197 = vld [vmem:[#allocation16 + $0x3c0] sm:$0xff]
        %v4198 = vld [vmem:[#allocation16 + $0x3c8] sm:$0xff]
        %v4199 = vld [vmem:[#allocation16 + $0x3d0] sm:$0xff]
        %v4200 = vld [vmem:[#allocation16 + $0x3d8] sm:$0xff]
        %v4201 = vld [vmem:[#allocation16 + $0x3e0] sm:$0xff]
        %v4202 = vld [vmem:[#allocation16 + $0x3e8] sm:$0xff]
        %v4203 = vld [vmem:[#allocation16 + $0x3f0] sm:$0xff]
        %v4204 = vld [vmem:[#allocation16 + $0x3f8] sm:$0xff]
        %v4333 = vunpack.c.l.b16 %v4077
        %v4334 = vunpack.c.h.b16 %v4077
        %v4335 = vunpack.c.l.b16 %v4078
        %v4336 = vunpack.c.h.b16 %v4078
        %v4337 = vunpack.c.l.b16 %v4079
        %v4338 = vunpack.c.h.b16 %v4079
        %v4339 = vunpack.c.l.b16 %v4080
        %v4340 = vunpack.c.h.b16 %v4080
        %v4341 = vunpack.c.l.b16 %v4081
        %v4342 = vunpack.c.h.b16 %v4081
        %v4343 = vunpack.c.l.b16 %v4082
        %v4344 = vunpack.c.h.b16 %v4082
        %v4345 = vunpack.c.l.b16 %v4083
        %v4346 = vunpack.c.h.b16 %v4083
        %v4347 = vunpack.c.l.b16 %v4084
        %v4348 = vunpack.c.h.b16 %v4084
        %v4349 = vunpack.c.l.b16 %v4085
        %v4350 = vunpack.c.h.b16 %v4085
        %v4351 = vunpack.c.l.b16 %v4086
        %v4352 = vunpack.c.h.b16 %v4086
        %v4353 = vunpack.c.l.b16 %v4087
        %v4354 = vunpack.c.h.b16 %v4087
        %v4355 = vunpack.c.l.b16 %v4088
        %v4356 = vunpack.c.h.b16 %v4088
        %v4357 = vunpack.c.l.b16 %v4089
        %v4358 = vunpack.c.h.b16 %v4089
        %v4359 = vunpack.c.l.b16 %v4090
        %v4360 = vunpack.c.h.b16 %v4090
        %v4361 = vunpack.c.l.b16 %v4091
        %v4362 = vunpack.c.h.b16 %v4091
        %v4363 = vunpack.c.l.b16 %v4092
        %v4364 = vunpack.c.h.b16 %v4092
        %v4365 = vunpack.c.l.b16 %v4093
        %v4366 = vunpack.c.h.b16 %v4093
        %v4367 = vunpack.c.l.b16 %v4094
        %v4368 = vunpack.c.h.b16 %v4094
        %v4369 = vunpack.c.l.b16 %v4095
        %v4370 = vunpack.c.h.b16 %v4095
        %v4371 = vunpack.c.l.b16 %v4096
        %v4372 = vunpack.c.h.b16 %v4096
        %v4373 = vunpack.c.l.b16 %v4097
        %v4374 = vunpack.c.h.b16 %v4097
        %v4375 = vunpack.c.l.b16 %v4098
        %v4376 = vunpack.c.h.b16 %v4098
        %v4377 = vunpack.c.l.b16 %v4099
        %v4378 = vunpack.c.h.b16 %v4099
        %v4379 = vunpack.c.l.b16 %v4100
        %v4380 = vunpack.c.h.b16 %v4100
        %v4381 = vunpack.c.l.b16 %v4101
        %v4382 = vunpack.c.h.b16 %v4101
        %v4383 = vunpack.c.l.b16 %v4102
        %v4384 = vunpack.c.h.b16 %v4102
        %v4385 = vunpack.c.l.b16 %v4103
        %v4386 = vunpack.c.h.b16 %v4103
        %v4387 = vunpack.c.l.b16 %v4104
        %v4388 = vunpack.c.h.b16 %v4104
        %v4389 = vunpack.c.l.b16 %v4105
        %v4390 = vunpack.c.h.b16 %v4105
        %v4391 = vunpack.c.l.b16 %v4106
        %v4392 = vunpack.c.h.b16 %v4106
        %v4393 = vunpack.c.l.b16 %v4107
        %v4394 = vunpack.c.h.b16 %v4107
        %v4395 = vunpack.c.l.b16 %v4108
        %v4396 = vunpack.c.h.b16 %v4108
        %v4397 = vunpack.c.l.b16 %v4109
        %v4398 = vunpack.c.h.b16 %v4109
        %v4399 = vunpack.c.l.b16 %v4110
        %v4400 = vunpack.c.h.b16 %v4110
        %v4401 = vunpack.c.l.b16 %v4111
        %v4402 = vunpack.c.h.b16 %v4111
        %v4403 = vunpack.c.l.b16 %v4112
        %v4404 = vunpack.c.h.b16 %v4112
        %v4405 = vunpack.c.l.b16 %v4113
        %v4406 = vunpack.c.h.b16 %v4113
        %v4407 = vunpack.c.l.b16 %v4114
        %v4408 = vunpack.c.h.b16 %v4114
        %v4409 = vunpack.c.l.b16 %v4115
        %v4410 = vunpack.c.h.b16 %v4115
        %v4411 = vunpack.c.l.b16 %v4116
        %v4412 = vunpack.c.h.b16 %v4116
        %v4413 = vunpack.c.l.b16 %v4117
        %v4414 = vunpack.c.h.b16 %v4117
        %v4415 = vunpack.c.l.b16 %v4118
        %v4416 = vunpack.c.h.b16 %v4118
        %v4417 = vunpack.c.l.b16 %v4119
        %v4418 = vunpack.c.h.b16 %v4119
        %v4419 = vunpack.c.l.b16 %v4120
        %v4420 = vunpack.c.h.b16 %v4120
        %v4421 = vunpack.c.l.b16 %v4121
        %v4422 = vunpack.c.h.b16 %v4121
        %v4423 = vunpack.c.l.b16 %v4122
        %v4424 = vunpack.c.h.b16 %v4122
        %v4425 = vunpack.c.l.b16 %v4123
        %v4426 = vunpack.c.h.b16 %v4123
        %v4427 = vunpack.c.l.b16 %v4124
        %v4428 = vunpack.c.h.b16 %v4124
        %v4429 = vunpack.c.l.b16 %v4125
        %v4430 = vunpack.c.h.b16 %v4125
        %v4431 = vunpack.c.l.b16 %v4126
        %v4432 = vunpack.c.h.b16 %v4126
        %v4433 = vunpack.c.l.b16 %v4127
        %v4434 = vunpack.c.h.b16 %v4127
        %v4435 = vunpack.c.l.b16 %v4128
        %v4436 = vunpack.c.h.b16 %v4128
        %v4437 = vunpack.c.l.b16 %v4129
        %v4438 = vunpack.c.h.b16 %v4129
        %v4439 = vunpack.c.l.b16 %v4130
        %v4440 = vunpack.c.h.b16 %v4130
        %v4441 = vunpack.c.l.b16 %v4131
        %v4442 = vunpack.c.h.b16 %v4131
        %v4443 = vunpack.c.l.b16 %v4132
        %v4444 = vunpack.c.h.b16 %v4132
        %v4445 = vunpack.c.l.b16 %v4133
        %v4446 = vunpack.c.h.b16 %v4133
        %v4447 = vunpack.c.l.b16 %v4134
        %v4448 = vunpack.c.h.b16 %v4134
        %v4449 = vunpack.c.l.b16 %v4135
        %v4450 = vunpack.c.h.b16 %v4135
        %v4451 = vunpack.c.l.b16 %v4136
        %v4452 = vunpack.c.h.b16 %v4136
        %v4453 = vunpack.c.l.b16 %v4137
        %v4454 = vunpack.c.h.b16 %v4137
        %v4455 = vunpack.c.l.b16 %v4138
        %v4456 = vunpack.c.h.b16 %v4138
        %v4457 = vunpack.c.l.b16 %v4139
        %v4458 = vunpack.c.h.b16 %v4139
        %v4459 = vunpack.c.l.b16 %v4140
        %v4460 = vunpack.c.h.b16 %v4140
        %v4461 = vunpack.c.l.b16 %v4141
        %v4462 = vunpack.c.h.b16 %v4141
        %v4463 = vunpack.c.l.b16 %v4142
        %v4464 = vunpack.c.h.b16 %v4142
        %v4465 = vunpack.c.l.b16 %v4143
        %v4466 = vunpack.c.h.b16 %v4143
        %v4467 = vunpack.c.l.b16 %v4144
        %v4468 = vunpack.c.h.b16 %v4144
        %v4469 = vunpack.c.l.b16 %v4145
        %v4470 = vunpack.c.h.b16 %v4145
        %v4471 = vunpack.c.l.b16 %v4146
        %v4472 = vunpack.c.h.b16 %v4146
        %v4473 = vunpack.c.l.b16 %v4147
        %v4474 = vunpack.c.h.b16 %v4147
        %v4475 = vunpack.c.l.b16 %v4148
        %v4476 = vunpack.c.h.b16 %v4148
        %v4477 = vunpack.c.l.b16 %v4149
        %v4478 = vunpack.c.h.b16 %v4149
        %v4479 = vunpack.c.l.b16 %v4150
        %v4480 = vunpack.c.h.b16 %v4150
        %v4481 = vunpack.c.l.b16 %v4151
        %v4482 = vunpack.c.h.b16 %v4151
        %v4483 = vunpack.c.l.b16 %v4152
        %v4484 = vunpack.c.h.b16 %v4152
        %v4485 = vunpack.c.l.b16 %v4153
        %v4486 = vunpack.c.h.b16 %v4153
        %v4487 = vunpack.c.l.b16 %v4154
        %v4488 = vunpack.c.h.b16 %v4154
        %v4489 = vunpack.c.l.b16 %v4155
        %v4490 = vunpack.c.h.b16 %v4155
        %v4491 = vunpack.c.l.b16 %v4156
        %v4492 = vunpack.c.h.b16 %v4156
        %v4493 = vunpack.c.l.b16 %v4157
        %v4494 = vunpack.c.h.b16 %v4157
        %v4495 = vunpack.c.l.b16 %v4158
        %v4496 = vunpack.c.h.b16 %v4158
        %v4497 = vunpack.c.l.b16 %v4159
        %v4498 = vunpack.c.h.b16 %v4159
        %v4499 = vunpack.c.l.b16 %v4160
        %v4500 = vunpack.c.h.b16 %v4160
        %v4501 = vunpack.c.l.b16 %v4161
        %v4502 = vunpack.c.h.b16 %v4161
        %v4503 = vunpack.c.l.b16 %v4162
        %v4504 = vunpack.c.h.b16 %v4162
        %v4505 = vunpack.c.l.b16 %v4163
        %v4506 = vunpack.c.h.b16 %v4163
        %v4507 = vunpack.c.l.b16 %v4164
        %v4508 = vunpack.c.h.b16 %v4164
        %v4509 = vunpack.c.l.b16 %v4165
        %v4510 = vunpack.c.h.b16 %v4165
        %v4511 = vunpack.c.l.b16 %v4166
        %v4512 = vunpack.c.h.b16 %v4166
        %v4513 = vunpack.c.l.b16 %v4167
        %v4514 = vunpack.c.h.b16 %v4167
        %v4515 = vunpack.c.l.b16 %v4168
        %v4516 = vunpack.c.h.b16 %v4168
        %v4517 = vunpack.c.l.b16 %v4169
        %v4518 = vunpack.c.h.b16 %v4169
        %v4519 = vunpack.c.l.b16 %v4170
        %v4520 = vunpack.c.h.b16 %v4170
        %v4521 = vunpack.c.l.b16 %v4171
        %v4522 = vunpack.c.h.b16 %v4171
        %v4523 = vunpack.c.l.b16 %v4172
        %v4524 = vunpack.c.h.b16 %v4172
        %v4525 = vunpack.c.l.b16 %v4173
        %v4526 = vunpack.c.h.b16 %v4173
        %v4527 = vunpack.c.l.b16 %v4174
        %v4528 = vunpack.c.h.b16 %v4174
        %v4529 = vunpack.c.l.b16 %v4175
        %v4530 = vunpack.c.h.b16 %v4175
        %v4531 = vunpack.c.l.b16 %v4176
        %v4532 = vunpack.c.h.b16 %v4176
        %v4533 = vunpack.c.l.b16 %v4177
        %v4534 = vunpack.c.h.b16 %v4177
        %v4535 = vunpack.c.l.b16 %v4178
        %v4536 = vunpack.c.h.b16 %v4178
        %v4537 = vunpack.c.l.b16 %v4179
        %v4538 = vunpack.c.h.b16 %v4179
        %v4539 = vunpack.c.l.b16 %v4180
        %v4540 = vunpack.c.h.b16 %v4180
        %v4541 = vunpack.c.l.b16 %v4181
        %v4542 = vunpack.c.h.b16 %v4181
        %v4543 = vunpack.c.l.b16 %v4182
        %v4544 = vunpack.c.h.b16 %v4182
        %v4545 = vunpack.c.l.b16 %v4183
        %v4546 = vunpack.c.h.b16 %v4183
        %v4547 = vunpack.c.l.b16 %v4184
        %v4548 = vunpack.c.h.b16 %v4184
        %v4549 = vunpack.c.l.b16 %v4185
        %v4550 = vunpack.c.h.b16 %v4185
        %v4551 = vunpack.c.l.b16 %v4186
        %v4552 = vunpack.c.h.b16 %v4186
        %v4553 = vunpack.c.l.b16 %v4187
        %v4554 = vunpack.c.h.b16 %v4187
        %v4555 = vunpack.c.l.b16 %v4188
        %v4556 = vunpack.c.h.b16 %v4188
        %v4557 = vunpack.c.l.b16 %v4189
        %v4558 = vunpack.c.h.b16 %v4189
        %v4559 = vunpack.c.l.b16 %v4190
        %v4560 = vunpack.c.h.b16 %v4190
        %v4561 = vunpack.c.l.b16 %v4191
        %v4562 = vunpack.c.h.b16 %v4191
        %v4563 = vunpack.c.l.b16 %v4192
        %v4564 = vunpack.c.h.b16 %v4192
        %v4565 = vunpack.c.l.b16 %v4193
        %v4566 = vunpack.c.h.b16 %v4193
        %v4567 = vunpack.c.l.b16 %v4194
        %v4568 = vunpack.c.h.b16 %v4194
        %v4569 = vunpack.c.l.b16 %v4195
        %v4570 = vunpack.c.h.b16 %v4195
        %v4571 = vunpack.c.l.b16 %v4196
        %v4572 = vunpack.c.h.b16 %v4196
        %v4573 = vunpack.c.l.b16 %v4197
        %v4574 = vunpack.c.h.b16 %v4197
        %v4575 = vunpack.c.l.b16 %v4198
        %v4576 = vunpack.c.h.b16 %v4198
        %v4577 = vunpack.c.l.b16 %v4199
        %v4578 = vunpack.c.h.b16 %v4199
        %v4579 = vunpack.c.l.b16 %v4200
        %v4580 = vunpack.c.h.b16 %v4200
        %v4581 = vunpack.c.l.b16 %v4201
        %v4582 = vunpack.c.h.b16 %v4201
        %v4583 = vunpack.c.l.b16 %v4202
        %v4584 = vunpack.c.h.b16 %v4202
        %v4585 = vunpack.c.l.b16 %v4203
        %v4586 = vunpack.c.h.b16 %v4203
        %v4587 = vunpack.c.l.b16 %v4204
        %v4588 = vunpack.c.h.b16 %v4204
        %v4589 = vpack.c.b16 %v4335, %v4333
        %v4590 = vpack.c.b16 %v4336, %v4334
        %v4591 = vpack.c.b16 %v4339, %v4337
        %v4592 = vpack.c.b16 %v4340, %v4338
        %v4593 = vpack.c.b16 %v4343, %v4341
        %v4594 = vpack.c.b16 %v4344, %v4342
        %v4595 = vpack.c.b16 %v4347, %v4345
        %v4596 = vpack.c.b16 %v4348, %v4346
        %v4597 = vpack.c.b16 %v4351, %v4349
        %v4598 = vpack.c.b16 %v4352, %v4350
        %v4599 = vpack.c.b16 %v4355, %v4353
        %v4600 = vpack.c.b16 %v4356, %v4354
        %v4601 = vpack.c.b16 %v4359, %v4357
        %v4602 = vpack.c.b16 %v4360, %v4358
        %v4603 = vpack.c.b16 %v4363, %v4361
        %v4604 = vpack.c.b16 %v4364, %v4362
        %v4605 = vpack.c.b16 %v4367, %v4365
        %v4606 = vpack.c.b16 %v4368, %v4366
        %v4607 = vpack.c.b16 %v4371, %v4369
        %v4608 = vpack.c.b16 %v4372, %v4370
        %v4609 = vpack.c.b16 %v4375, %v4373
        %v4610 = vpack.c.b16 %v4376, %v4374
        %v4611 = vpack.c.b16 %v4379, %v4377
        %v4612 = vpack.c.b16 %v4380, %v4378
        %v4613 = vpack.c.b16 %v4383, %v4381
        %v4614 = vpack.c.b16 %v4384, %v4382
        %v4615 = vpack.c.b16 %v4387, %v4385
        %v4616 = vpack.c.b16 %v4388, %v4386
        %v4617 = vpack.c.b16 %v4391, %v4389
        %v4618 = vpack.c.b16 %v4392, %v4390
        %v4619 = vpack.c.b16 %v4395, %v4393
        %v4620 = vpack.c.b16 %v4396, %v4394
        %v4621 = vpack.c.b16 %v4399, %v4397
        %v4622 = vpack.c.b16 %v4400, %v4398
        %v4623 = vpack.c.b16 %v4403, %v4401
        %v4624 = vpack.c.b16 %v4404, %v4402
        %v4625 = vpack.c.b16 %v4407, %v4405
        %v4626 = vpack.c.b16 %v4408, %v4406
        %v4627 = vpack.c.b16 %v4411, %v4409
        %v4628 = vpack.c.b16 %v4412, %v4410
        %v4629 = vpack.c.b16 %v4415, %v4413
        %v4630 = vpack.c.b16 %v4416, %v4414
        %v4631 = vpack.c.b16 %v4419, %v4417
        %v4632 = vpack.c.b16 %v4420, %v4418
        %v4633 = vpack.c.b16 %v4423, %v4421
        %v4634 = vpack.c.b16 %v4424, %v4422
        %v4635 = vpack.c.b16 %v4427, %v4425
        %v4636 = vpack.c.b16 %v4428, %v4426
        %v4637 = vpack.c.b16 %v4431, %v4429
        %v4638 = vpack.c.b16 %v4432, %v4430
        %v4639 = vpack.c.b16 %v4435, %v4433
        %v4640 = vpack.c.b16 %v4436, %v4434
        %v4641 = vpack.c.b16 %v4439, %v4437
        %v4642 = vpack.c.b16 %v4440, %v4438
        %v4643 = vpack.c.b16 %v4443, %v4441
        %v4644 = vpack.c.b16 %v4444, %v4442
        %v4645 = vpack.c.b16 %v4447, %v4445
        %v4646 = vpack.c.b16 %v4448, %v4446
        %v4647 = vpack.c.b16 %v4451, %v4449
        %v4648 = vpack.c.b16 %v4452, %v4450
        %v4649 = vpack.c.b16 %v4455, %v4453
        %v4650 = vpack.c.b16 %v4456, %v4454
        %v4651 = vpack.c.b16 %v4459, %v4457
        %v4652 = vpack.c.b16 %v4460, %v4458
        %v4653 = vpack.c.b16 %v4463, %v4461
        %v4654 = vpack.c.b16 %v4464, %v4462
        %v4655 = vpack.c.b16 %v4467, %v4465
        %v4656 = vpack.c.b16 %v4468, %v4466
        %v4657 = vpack.c.b16 %v4471, %v4469
        %v4658 = vpack.c.b16 %v4472, %v4470
        %v4659 = vpack.c.b16 %v4475, %v4473
        %v4660 = vpack.c.b16 %v4476, %v4474
        %v4661 = vpack.c.b16 %v4479, %v4477
        %v4662 = vpack.c.b16 %v4480, %v4478
        %v4663 = vpack.c.b16 %v4483, %v4481
        %v4664 = vpack.c.b16 %v4484, %v4482
        %v4665 = vpack.c.b16 %v4487, %v4485
        %v4666 = vpack.c.b16 %v4488, %v4486
        %v4667 = vpack.c.b16 %v4491, %v4489
        %v4668 = vpack.c.b16 %v4492, %v4490
        %v4669 = vpack.c.b16 %v4495, %v4493
        %v4670 = vpack.c.b16 %v4496, %v4494
        %v4671 = vpack.c.b16 %v4499, %v4497
        %v4672 = vpack.c.b16 %v4500, %v4498
        %v4673 = vpack.c.b16 %v4503, %v4501
        %v4674 = vpack.c.b16 %v4504, %v4502
        %v4675 = vpack.c.b16 %v4507, %v4505
        %v4676 = vpack.c.b16 %v4508, %v4506
        %v4677 = vpack.c.b16 %v4511, %v4509
        %v4678 = vpack.c.b16 %v4512, %v4510
        %v4679 = vpack.c.b16 %v4515, %v4513
        %v4680 = vpack.c.b16 %v4516, %v4514
        %v4681 = vpack.c.b16 %v4519, %v4517
        %v4682 = vpack.c.b16 %v4520, %v4518
        %v4683 = vpack.c.b16 %v4523, %v4521
        %v4684 = vpack.c.b16 %v4524, %v4522
        %v4685 = vpack.c.b16 %v4527, %v4525
        %v4686 = vpack.c.b16 %v4528, %v4526
        %v4687 = vpack.c.b16 %v4531, %v4529
        %v4688 = vpack.c.b16 %v4532, %v4530
        %v4689 = vpack.c.b16 %v4535, %v4533
        %v4690 = vpack.c.b16 %v4536, %v4534
        %v4691 = vpack.c.b16 %v4539, %v4537
        %v4692 = vpack.c.b16 %v4540, %v4538
        %v4693 = vpack.c.b16 %v4543, %v4541
        %v4694 = vpack.c.b16 %v4544, %v4542
        %v4695 = vpack.c.b16 %v4547, %v4545
        %v4696 = vpack.c.b16 %v4548, %v4546
        %v4697 = vpack.c.b16 %v4551, %v4549
        %v4698 = vpack.c.b16 %v4552, %v4550
        %v4699 = vpack.c.b16 %v4555, %v4553
        %v4700 = vpack.c.b16 %v4556, %v4554
        %v4701 = vpack.c.b16 %v4559, %v4557
        %v4702 = vpack.c.b16 %v4560, %v4558
        %v4703 = vpack.c.b16 %v4563, %v4561
        %v4704 = vpack.c.b16 %v4564, %v4562
        %v4705 = vpack.c.b16 %v4567, %v4565
        %v4706 = vpack.c.b16 %v4568, %v4566
        %v4707 = vpack.c.b16 %v4571, %v4569
        %v4708 = vpack.c.b16 %v4572, %v4570
        %v4709 = vpack.c.b16 %v4575, %v4573
        %v4710 = vpack.c.b16 %v4576, %v4574
        %v4711 = vpack.c.b16 %v4579, %v4577
        %v4712 = vpack.c.b16 %v4580, %v4578
        %v4713 = vpack.c.b16 %v4583, %v4581
        %v4714 = vpack.c.b16 %v4584, %v4582
        %v4715 = vpack.c.b16 %v4587, %v4585
        %v4716 = vpack.c.b16 %v4588, %v4586
        %4845 = vmatprep.subr.bf16.mxu0 %v4590
        %4846 = vmatpush1.bf16.msra.mxu0 %v4589
        %4847 = vmatprep.subr.bf16.mxu0 %v4592
        %4848 = vmatpush1.bf16.msra.mxu0 %v4591
        %4849 = vmatprep.subr.bf16.mxu0 %v4594
        %4850 = vmatpush1.bf16.msra.mxu0 %v4593
        %4851 = vmatprep.subr.bf16.mxu0 %v4596
        %4852 = vmatpush1.bf16.msra.mxu0 %v4595
        %4853 = vmatprep.subr.bf16.mxu0 %v4598
        %4854 = vmatpush1.bf16.msra.mxu0 %v4597
        %4855 = vmatprep.subr.bf16.mxu0 %v4600
        %4856 = vmatpush1.bf16.msra.mxu0 %v4599
        %4857 = vmatprep.subr.bf16.mxu0 %v4602
        %4858 = vmatpush1.bf16.msra.mxu0 %v4601
        %4859 = vmatprep.subr.bf16.mxu0 %v4604
        %4860 = vmatpush1.bf16.msra.mxu0 %v4603
        %4861 = vmatprep.subr.bf16.mxu0 %v4606
        %4862 = vmatpush1.bf16.msra.mxu0 %v4605
        %4863 = vmatprep.subr.bf16.mxu0 %v4608
        %4864 = vmatpush1.bf16.msra.mxu0 %v4607
        %4865 = vmatprep.subr.bf16.mxu0 %v4610
        %4866 = vmatpush1.bf16.msra.mxu0 %v4609
        %4867 = vmatprep.subr.bf16.mxu0 %v4612
        %4868 = vmatpush1.bf16.msra.mxu0 %v4611
        %4869 = vmatprep.subr.bf16.mxu0 %v4614
        %4870 = vmatpush1.bf16.msra.mxu0 %v4613
        %4871 = vmatprep.subr.bf16.mxu0 %v4616
        %4872 = vmatpush1.bf16.msra.mxu0 %v4615
        %4873 = vmatprep.subr.bf16.mxu0 %v4618
        %4874 = vmatpush1.bf16.msra.mxu0 %v4617
        %4875 = vmatprep.subr.bf16.mxu0 %v4620
        %4876 = vmatpush1.bf16.msra.mxu0 %v4619
        %4877 = vmatprep.mubr.bf16.mxu0 %v4070
        %4878 = vmatmul.mubr.bf16.gmra.mrb[0].mxu0 %v4069
        %v4879 = vpop.f32.mrb[0].mxu0
        %v4880 = vadd.f32 0.0, %v4879
        %v4881 = vpop.f32.mrb[0].mxu0
        %v4882 = vadd.f32 0.0, %v4881
        %v4883 = vpop.f32.mrb[0].mxu0
        %v4884 = vadd.f32 0.0, %v4883
        %v4885 = vpop.f32.mrb[0].mxu0
        %v4886 = vadd.f32 0.0, %v4885
        %4887 = vdwg.mxu0
        %4888 = vmatprep.subr.bf16.mxu0 %v4622
        %4889 = vmatpush1.bf16.msra.mxu0 %v4621
        %4890 = vmatprep.subr.bf16.mxu0 %v4624
        %4891 = vmatpush1.bf16.msra.mxu0 %v4623
        %4892 = vmatprep.subr.bf16.mxu0 %v4626
        %4893 = vmatpush1.bf16.msra.mxu0 %v4625
        %4894 = vmatprep.subr.bf16.mxu0 %v4628
        %4895 = vmatpush1.bf16.msra.mxu0 %v4627
        %4896 = vmatprep.subr.bf16.mxu0 %v4630
        %4897 = vmatpush1.bf16.msra.mxu0 %v4629
        %4898 = vmatprep.subr.bf16.mxu0 %v4632
        %4899 = vmatpush1.bf16.msra.mxu0 %v4631
        %4900 = vmatprep.subr.bf16.mxu0 %v4634
        %4901 = vmatpush1.bf16.msra.mxu0 %v4633
        %4902 = vmatprep.subr.bf16.mxu0 %v4636
        %4903 = vmatpush1.bf16.msra.mxu0 %v4635
        %4904 = vmatprep.subr.bf16.mxu0 %v4638
        %4905 = vmatpush1.bf16.msra.mxu0 %v4637
        %4906 = vmatprep.subr.bf16.mxu0 %v4640
        %4907 = vmatpush1.bf16.msra.mxu0 %v4639
        %4908 = vmatprep.subr.bf16.mxu0 %v4642
        %4909 = vmatpush1.bf16.msra.mxu0 %v4641
        %4910 = vmatprep.subr.bf16.mxu0 %v4644
        %4911 = vmatpush1.bf16.msra.mxu0 %v4643
        %4912 = vmatprep.subr.bf16.mxu0 %v4646
        %4913 = vmatpush1.bf16.msra.mxu0 %v4645
        %4914 = vmatprep.subr.bf16.mxu0 %v4648
        %4915 = vmatpush1.bf16.msra.mxu0 %v4647
        %4916 = vmatprep.subr.bf16.mxu0 %v4650
        %4917 = vmatpush1.bf16.msra.mxu0 %v4649
        %4918 = vmatprep.subr.bf16.mxu0 %v4652
        %4919 = vmatpush1.bf16.msra.mxu0 %v4651
        %4920 = vmatprep.mubr.bf16.mxu0 %v4072
        %4921 = vmatmul.mubr.bf16.gmra.mrb[0].mxu0 %v4071
        %v4922 = vpop.f32.mrb[0].mxu0
        %v4923 = vadd.f32 %v4880, %v4922
        %v4924 = vpop.f32.mrb[0].mxu0
        %v4925 = vadd.f32 %v4882, %v4924
        %v4926 = vpop.f32.mrb[0].mxu0
        %v4927 = vadd.f32 %v4884, %v4926
        %v4928 = vpop.f32.mrb[0].mxu0
        %v4929 = vadd.f32 %v4886, %v4928
        %4930 = vdwg.mxu0
        %4931 = vmatprep.subr.bf16.mxu0 %v4654
        %4932 = vmatpush1.bf16.msra.mxu0 %v4653
        %4933 = vmatprep.subr.bf16.mxu0 %v4656
        %4934 = vmatpush1.bf16.msra.mxu0 %v4655
        %4935 = vmatprep.subr.bf16.mxu0 %v4658
        %4936 = vmatpush1.bf16.msra.mxu0 %v4657
        %4937 = vmatprep.subr.bf16.mxu0 %v4660
        %4938 = vmatpush1.bf16.msra.mxu0 %v4659
        %4939 = vmatprep.subr.bf16.mxu0 %v4662
        %4940 = vmatpush1.bf16.msra.mxu0 %v4661
        %4941 = vmatprep.subr.bf16.mxu0 %v4664
        %4942 = vmatpush1.bf16.msra.mxu0 %v4663
        %4943 = vmatprep.subr.bf16.mxu0 %v4666
        %4944 = vmatpush1.bf16.msra.mxu0 %v4665
        %4945 = vmatprep.subr.bf16.mxu0 %v4668
        %4946 = vmatpush1.bf16.msra.mxu0 %v4667
        %4947 = vmatprep.subr.bf16.mxu0 %v4670
        %4948 = vmatpush1.bf16.msra.mxu0 %v4669
        %4949 = vmatprep.subr.bf16.mxu0 %v4672
        %4950 = vmatpush1.bf16.msra.mxu0 %v4671
        %4951 = vmatprep.subr.bf16.mxu0 %v4674
        %4952 = vmatpush1.bf16.msra.mxu0 %v4673
        %4953 = vmatprep.subr.bf16.mxu0 %v4676
        %4954 = vmatpush1.bf16.msra.mxu0 %v4675
        %4955 = vmatprep.subr.bf16.mxu0 %v4678
        %4956 = vmatpush1.bf16.msra.mxu0 %v4677
        %4957 = vmatprep.subr.bf16.mxu0 %v4680
        %4958 = vmatpush1.bf16.msra.mxu0 %v4679
        %4959 = vmatprep.subr.bf16.mxu0 %v4682
        %4960 = vmatpush1.bf16.msra.mxu0 %v4681
        %4961 = vmatprep.subr.bf16.mxu0 %v4684
        %4962 = vmatpush1.bf16.msra.mxu0 %v4683
        %4963 = vmatprep.mubr.bf16.mxu0 %v4074
        %4964 = vmatmul.mubr.bf16.gmra.mrb[0].mxu0 %v4073
        %v4965 = vpop.f32.mrb[0].mxu0
        %v4966 = vadd.f32 %v4923, %v4965
        %v4967 = vpop.f32.mrb[0].mxu0
        %v4968 = vadd.f32 %v4925, %v4967
        %v4969 = vpop.f32.mrb[0].mxu0
        %v4970 = vadd.f32 %v4927, %v4969
        %v4971 = vpop.f32.mrb[0].mxu0
        %v4972 = vadd.f32 %v4929, %v4971
        %4973 = vdwg.mxu0
        %4974 = vmatprep.subr.bf16.mxu0 %v4686
        %4975 = vmatpush1.bf16.msra.mxu0 %v4685
        %4976 = vmatprep.subr.bf16.mxu0 %v4688
        %4977 = vmatpush1.bf16.msra.mxu0 %v4687
        %4978 = vmatprep.subr.bf16.mxu0 %v4690
        %4979 = vmatpush1.bf16.msra.mxu0 %v4689
        %4980 = vmatprep.subr.bf16.mxu0 %v4692
        %4981 = vmatpush1.bf16.msra.mxu0 %v4691
        %4982 = vmatprep.subr.bf16.mxu0 %v4694
        %4983 = vmatpush1.bf16.msra.mxu0 %v4693
        %4984 = vmatprep.subr.bf16.mxu0 %v4696
        %4985 = vmatpush1.bf16.msra.mxu0 %v4695
        %4986 = vmatprep.subr.bf16.mxu0 %v4698
        %4987 = vmatpush1.bf16.msra.mxu0 %v4697
        %4988 = vmatprep.subr.bf16.mxu0 %v4700
        %4989 = vmatpush1.bf16.msra.mxu0 %v4699
        %4990 = vmatprep.subr.bf16.mxu0 %v4702
        %4991 = vmatpush1.bf16.msra.mxu0 %v4701
        %4992 = vmatprep.subr.bf16.mxu0 %v4704
        %4993 = vmatpush1.bf16.msra.mxu0 %v4703
        %4994 = vmatprep.subr.bf16.mxu0 %v4706
        %4995 = vmatpush1.bf16.msra.mxu0 %v4705
        %4996 = vmatprep.subr.bf16.mxu0 %v4708
        %4997 = vmatpush1.bf16.msra.mxu0 %v4707
        %4998 = vmatprep.subr.bf16.mxu0 %v4710
        %4999 = vmatpush1.bf16.msra.mxu0 %v4709
        %5000 = vmatprep.subr.bf16.mxu0 %v4712
        %5001 = vmatpush1.bf16.msra.mxu0 %v4711
        %5002 = vmatprep.subr.bf16.mxu0 %v4714
        %5003 = vmatpush1.bf16.msra.mxu0 %v4713
        %5004 = vmatprep.subr.bf16.mxu0 %v4716
        %5005 = vmatpush1.bf16.msra.mxu0 %v4715
        %5006 = vmatprep.mubr.bf16.mxu0 %v4076
        %5007 = vmatmul.mubr.bf16.gmra.mrb[0].mxu0 %v4075
        %v5008 = vpop.f32.mrb[0].mxu0
        %v5009 = vadd.f32 %v4966, %v5008
        %v5010 = vpop.f32.mrb[0].mxu0
        %v5011 = vadd.f32 %v4968, %v5010
        %v5012 = vpop.f32.mrb[0].mxu0
        %v5013 = vadd.f32 %v4970, %v5012
        %v5014 = vpop.f32.mrb[0].mxu0
        %v5015 = vadd.f32 %v4972, %v5014
        %5016 = vdwg.mxu0
        %v5017 = vadd.f32 %v3071, %v5009
        %v5018 = vadd.f32 %v3072, %v5011
        %v5019 = vadd.f32 %v3073, %v5013
        %v5020 = vadd.f32 %v3074, %v5015
        %5021 = vst [vmem:[%s641] sm:$0xff] %v5017
        %5022 = vst [vmem:[%s641 + $0x8] sm:$0xff] %v5018
        %5023 = vst [vmem:[%s641 + $0x10] sm:$0xff] %v5019
        %5024 = vst [vmem:[%s641 + $0x18] sm:$0xff] %v5020
        %s5025 = sand.u32 %s350, 1
        %s5026 = scalar_lea.sflag [#allocation4], %s5025
        %s5027 = sand.u32 %s350, 1
        %s5028 = smul.addr %s5027, 32
        %s5029 = scalar_lea.vmem [#allocation19], %s5028
        // Predicated region
        $region117: #{tpu_custom_call.1} parent=75 // pred_check
          %p5030 = pneg %p360
        $region118: #{tpu_custom_call.1} parent=75 // pred_check_branch
          %5032 = sbr.rel (%p5030) target = $region120
        $region119: #{tpu_custom_call.1} parent=75 // pred_region
          %s5034 = ssub.s32 512, 512
          %5035 = vsyncadd %s5026, %s5034
          %s5036 = smul.addr %s38, 4
          %s5037 = smul.addr %s5036, 128
          %s5038 = scalar_lea.hbm %s14, %s5037
          %s5039 = sshll.u32 %s5029, 4
          %s5040 = int_to_ptr.vmem [resolvable:$true] %s5039
          %5045 = dma.vmem_to_hbm [thread:$0]  %s5040, 512, %s5038, %s5026, 256, 256, 16
        $region120: #{tpu_custom_call.1} parent=75 // pred_fallthru
          _
      $region76: #{tpu_custom_call.1} parent=5 // pred_fallthru
        _
      %p5046 = scmp.le.s32.totalorder 2, %s33
      // Predicated region
      $region121: #{tpu_custom_call.1} parent=5 // pred_check
        %p5047 = pneg %p5046
      $region122: #{tpu_custom_call.1} parent=5 // pred_check_branch
        %5049 = sbr.rel (%p5047) target = $region124
      $region123: #{tpu_custom_call.1} parent=5 // pred_region
        %s5050 = ssub.s32 %s33, 2
        // Predicated region
        $region125: #{tpu_custom_call.1} parent=123 // pred_check
          %p5051 = pneg %p366
        $region126: #{tpu_custom_call.1} parent=123 // pred_check_branch
          %5053 = sbr.rel (%p5051) target = $region128
        $region127: #{tpu_custom_call.1} parent=123 // pred_region
          %s5054 = sand.u32 %s351, 1
          %s5055 = scalar_lea.sflag [#allocation4], %s5054
          %s5056 = sand.u32 %s351, 1
          %s5057 = smul.addr %s5056, 32
          %s5058 = scalar_lea.vmem [#allocation19], %s5057
          %5059 = dma.done %s5055, 512
        $region128: #{tpu_custom_call.1} parent=123 // pred_fallthru
          _
      $region124: #{tpu_custom_call.1} parent=5 // pred_fallthru
        _
    $region6: #{tpu_custom_call.1} parent=1 // loop_footer
      %s37 = sadd.s32 1, %s33
    $region7: #{tpu_custom_call.1} parent=1 // loop_footer_branch
      %32 = sbr.rel target = $region3
    $region8: #{tpu_custom_call.1} parent=1 // loop_exit
      _
    %5060 = vsyncpa [#allocation3], 1
    %s5061 = scalar_lea.sflag [#allocation3], 1
    %5062 = vsyncpa %s5061, 1
    %5063 = vsyncpa [#allocation6], 1
    %s5064 = scalar_lea.sflag [#allocation6], 1
    %5065 = vsyncpa %s5064, 1
    %5066 = vsyncpa [#allocation9], 1
    %5067 = vsyncpa [#allocation12], 1
    %5068 = vsyncpa [#allocation15], 1
    %5069 = vsyncpa [#allocation18], 1
    %5070 = vsyncpa [#allocation4], 1
    %s5071 = scalar_lea.sflag [#allocation4], 1
    %5072 = vsyncpa %s5071, 1

</llo_original>
